<compile_context>
chip_gen: v5e
topology: v5e:2x2
jax: 0.10.0
libtpu: 0.0.40
codegen_flags: <defaults>
</compile_context>

<pallas_src>
import jax
import jax.numpy as jnp
import numpy as np
from jax.experimental import pallas as pl
from jax.experimental.pallas import tpu as pltpu


def _silu(v):
    return v * jax.nn.sigmoid(v)


def c3_block_kernel(x_ref, xh_ref,
                    w1_ref, b1_ref, w2_ref, b2_ref, w3_ref, b3_ref,
                    w4_ref, b4_ref, w5a_ref, w5b_ref, b5_ref,
                    o_ref, zpad_ref):
    _, TH, W, Cin = x_ref.shape
    hid = w1_ref.shape[1]
    Cout = w5a_ref.shape[1]
    flat = TH * W
    cdt = x_ref.dtype                       # compute / MXU-input dtype

    h = pl.program_id(1)
    nh = pl.num_programs(1)

    # (1, TH, W, Cin) tile -> (TH*W, Cin) matrix of pixels (input dtype, no upcast).
    x = x_ref[0].reshape(flat, Cin)

    # C3Block.block1 / block2: 1x1 conv (+ folded BN) + SiLU == per-pixel matmul.
    y1 = _silu(jnp.dot(x, w1_ref[...], preferred_element_type=jnp.float32) + b1_ref[...])
    y2 = _silu(jnp.dot(x, w2_ref[...], preferred_element_type=jnp.float32) + b2_ref[...])

    # BottleNeck.block1: 1x1 conv + SiLU.
    z1 = _silu(jnp.dot(y1.astype(cdt), w3_ref[...],
                       preferred_element_type=jnp.float32) + b3_ref[...])

    # Recompute z1 for the two halo rows (row above / below this H tile) from
    # the prefetched halo x rows.  2 rows per tile -> negligible recompute.
    xh = xh_ref[0].reshape(2 * W, Cin)
    y1h = _silu(jnp.dot(xh, w1_ref[...], preferred_element_type=jnp.float32) + b1_ref[...])
    z1h = _silu(jnp.dot(y1h.astype(cdt), w3_ref[...],
                        preferred_element_type=jnp.float32) + b3_ref[...]).astype(cdt)

    # Zero-padded z1 scratch: zero the border strips, write the interior, then
    # conditionally write the valid halo rows (invalid ones stay zero, which is
    # exactly the 3x3 conv's zero padding).
    zero_row = jnp.zeros((1, W + 2, hid), cdt)
    zero_col = jnp.zeros((TH + 2, 1, hid), cdt)
    zpad_ref[0:1, :, :] = zero_row
    zpad_ref[TH + 1:TH + 2, :, :] = zero_row
    zpad_ref[:, 0:1, :] = zero_col
    zpad_ref[:, W + 1:W + 2, :] = zero_col
    zpad_ref[1:TH + 1, 1:W + 1, :] = z1.astype(cdt).reshape(TH, W, hid)

    @pl.when(h > 0)
    def _():
        zpad_ref[0:1, 1:W + 1, :] = z1h[:W].reshape(1, W, hid)

    @pl.when(h < nh - 1)
    def _():
        zpad_ref[TH + 1:TH + 2, 1:W + 1, :] = z1h[W:].reshape(1, W, hid)

    # BottleNeck.block2: 3x3 conv, stride 1, pad 1 (+ folded BN) + SiLU.
    # 9 static slices of the padded scratch -> 9 MXU matmuls, no roll/mask.
    acc = jnp.zeros((flat, hid), jnp.float32)
    for di in range(3):
        for dj in range(3):
            patch = zpad_ref[di:di + TH, dj:dj + W, :].reshape(flat, hid)
            acc = acc + jnp.dot(patch, w4_ref[di, dj],
                                preferred_element_type=jnp.float32)
    z2 = _silu(acc + b4_ref[...])

    # C3Block.block3 on concat(z2, y2): split-w5 form avoids the lane concat.
    out = _silu(jnp.dot(z2.astype(cdt), w5a_ref[...], preferred_element_type=jnp.float32)
                + jnp.dot(y2.astype(cdt), w5b_ref[...], preferred_element_type=jnp.float32)
                + b5_ref[...])

    o_ref[0] = out.reshape(TH, W, Cout).astype(o_ref.dtype)


def _pick_tile_h(H, W, cin, hid, cout, itemsize, budget_bytes=8 << 20):
    """Largest divisor of H whose per-step working set fits a conservative budget."""
    per_row = W * (2 * cin + 6 * hid + 2 * cout) * max(itemsize, 4) \
        + (W + 2) * hid * itemsize
    best = 1
    for t in range(1, H + 1):
        if H % t == 0 and t * per_row <= budget_bytes:
            best = t
    return best


def c3_block_pallas(x_nhwc, params, *, tile_h=None):
    N, H, W, Cin = x_nhwc.shape
    (w1, b1), (w2, b2), (w3, b3), (w4, b4), (w5, b5) = params
    hid = w1.shape[1]
    Cout = w5.shape[1]
    cdt = x_nhwc.dtype
    itemsize = jnp.dtype(cdt).itemsize

    if tile_h is None:
        tile_h = _pick_tile_h(H, W, Cin, hid, Cout, itemsize)
    assert H % tile_h == 0, "tile_h must divide H"
    num_h = H // tile_h

    # Halo rows for each H tile (zero rows beyond the image edges).
    # Shape (N, num_h * 2, W, Cin): rows [2h, 2h+1] = (row above, row below) tile h.
    x_zpad = jnp.pad(x_nhwc, ((0, 0), (1, 1), (0, 0), (0, 0)))
    tops = x_zpad[:, 0:H:tile_h]                     # (N, num_h, W, Cin)
    bots = x_zpad[:, tile_h + 1:H + 2:tile_h]        # (N, num_h, W, Cin)
    x_halo = jnp.stack([tops, bots], axis=2).reshape(N, num_h * 2, W, Cin)

    # Split w5 so concat(z2, y2) @ w5 becomes z2 @ w5a + y2 @ w5b.
    w5a, w5b = w5[:hid], w5[hid:]

    cast_w = lambda a: a.astype(cdt)          # MXU inputs in the compute dtype
    cast_b = lambda a: a.astype(jnp.float32)  # biases stay f32 (added to f32 acc)

    def full_spec(shape):
        nd = len(shape)
        return pl.BlockSpec(shape, lambda n, h, _nd=nd: (0,) * _nd)

    # Advisory cost estimate for XLA's scheduler.
    flat_total = N * H * W
    flops = 2 * flat_total * (2 * Cin * hid + 10 * hid * hid + 2 * hid * Cout)
    transcendentals = flat_total * (4 * hid + Cout)
    param_bytes = sum(int(np.prod(a.shape)) * jnp.dtype(a.dtype).itemsize
                      for pair in params for a in pair)
    bytes_accessed = int((x_nhwc.size + x_halo.size + N * H * W * Cout) * itemsize
                         + param_bytes)

    return pl.pallas_call(
        c3_block_kernel,
        out_shape=jax.ShapeDtypeStruct((N, H, W, Cout), cdt),
        grid_spec=pltpu.PrefetchScalarGridSpec(
            num_scalar_prefetch=0,
            grid=(N, num_h),
            in_specs=[
                pl.BlockSpec((1, tile_h, W, Cin), lambda n, h: (n, h, 0, 0)),
                pl.BlockSpec((1, 2, W, Cin), lambda n, h: (n, h, 0, 0)),
                full_spec(w1.shape), full_spec(b1.shape),
                full_spec(w2.shape), full_spec(b2.shape),
                full_spec(w3.shape), full_spec(b3.shape),
                full_spec(w4.shape), full_spec(b4.shape),
                full_spec(w5a.shape), full_spec(w5b.shape), full_spec(b5.shape),
            ],
            out_specs=pl.BlockSpec((1, tile_h, W, Cout), lambda n, h: (n, h, 0, 0)),
            scratch_shapes=[pltpu.VMEM((tile_h + 2, W + 2, hid), cdt)],
        ),
        compiler_params=pltpu.CompilerParams(
            dimension_semantics=("parallel", "parallel"),
            vmem_limit_bytes=32 * 1024 * 1024),
        cost_estimate=pl.CostEstimate(
            flops=int(flops),
            transcendentals=int(transcendentals),
            bytes_accessed=bytes_accessed),
    )(x_nhwc, x_halo,
      cast_w(w1), cast_b(b1), cast_w(w2), cast_b(b2),
      cast_w(w3), cast_b(b3), cast_w(w4), cast_b(b4),
      cast_w(w5a), cast_w(w5b), cast_b(b5))


def make_conv_bn_params(key, cin, cout, ksize):
    """Conv2d(bias=False) + BatchNorm2d params, BN folded into (w, b)."""
    kw, kg, kb, km, kv = jax.random.split(key, 5)
    if ksize == 1:
        w = jax.random.normal(kw, (cin, cout), jnp.float32) / np.sqrt(cin)
    else:
        w = jax.random.normal(kw, (ksize, ksize, cin, cout), jnp.float32) \
            / np.sqrt(cin * ksize * ksize)
    gamma = 1.0 + 0.1 * jax.random.normal(kg, (cout,), jnp.float32)
    beta = 0.1 * jax.random.normal(kb, (cout,), jnp.float32)
    mean = 0.1 * jax.random.normal(km, (cout,), jnp.float32)
    var = jnp.abs(1.0 + 0.1 * jax.random.normal(kv, (cout,), jnp.float32))
    eps = 1e-5
    scale = gamma / jnp.sqrt(var + eps)          # per output channel
    w_f = w * scale                              # out-channel is the last axis
    b_f = (beta - mean * scale).reshape(1, cout)
    return w_f, b_f


def c3_block_ref(x_nhwc, params):
    """Pure-JAX reference (same folded-BN inference semantics)."""
    (w1, b1), (w2, b2), (w3, b3), (w4, b4), (w5, b5) = params

    def conv1x1(x, w, b):
        return _silu(jnp.einsum('nhwc,co->nhwo', x, w) + b.reshape(1, 1, 1, -1))

    y1 = conv1x1(x_nhwc, w1, b1)
    y2 = conv1x1(x_nhwc, w2, b2)
    z1 = conv1x1(y1, w3, b3)
    z2 = jax.lax.conv_general_dilated(
        z1, w4, window_strides=(1, 1), padding='SAME',
        dimension_numbers=('NHWC', 'HWIO', 'NHWC'))
    z2 = _silu(z2 + b4.reshape(1, 1, 1, -1))
    cat = jnp.concatenate([z2, y2], axis=-1)
    return conv1x1(cat, w5, b5)


if __name__ == "__main__":
    key = jax.random.PRNGKey(0)
    N, Cin, H, W = 2, 8, 16, 16
    Cout = 16
    hid = Cin // 2  # int(feature_input * 0.5)

    k_x, k1, k2, k3, k4, k5 = jax.random.split(key, 6)
    x_nchw = jax.random.normal(k_x, (N, Cin, H, W), jnp.float32)  # PyTorch layout
    x_nhwc = jnp.transpose(x_nchw, (0, 2, 3, 1))                  # kernel layout

    params = [
        make_conv_bn_params(k1, Cin, hid, 1),        # C3Block.block1
        make_conv_bn_params(k2, Cin, hid, 1),        # C3Block.block2
        make_conv_bn_params(k3, hid, hid, 1),        # BottleNeck.block1
        make_conv_bn_params(k4, hid, hid, 3),        # BottleNeck.block2 (3x3, pad 1)
        make_conv_bn_params(k5, 2 * hid, Cout, 1),   # C3Block.block3
    ]

    ref = jax.block_until_ready(c3_block_ref(x_nhwc, params))
    # tile_h=8 exercises the H-tiled path with both halo branches;
    # tile_h=16 exercises the single-tile (whole image) path.
    for th in (8, 16):
        out = jax.block_until_ready(c3_block_pallas(x_nhwc, params, tile_h=th))
        np.testing.assert_allclose(np.asarray(out), np.asarray(ref),
                                   rtol=1e-4, atol=1e-5)
    print("KERNEL_OK")
</pallas_src>

<mosaic_0001>
module attributes {stable_mosaic.version = 11 : i64} {
  func.func @c3_block_kernel(%arg0: i32, %arg1: i32, %arg2: memref<1x8x16x8xf32, #tpu.memory_space<vmem>>, %arg3: memref<1x2x16x8xf32, #tpu.memory_space<vmem>>, %arg4: memref<8x4xf32, #tpu.memory_space<vmem>>, %arg5: memref<1x4xf32, #tpu.memory_space<vmem>>, %arg6: memref<8x4xf32, #tpu.memory_space<vmem>>, %arg7: memref<1x4xf32, #tpu.memory_space<vmem>>, %arg8: memref<4x4xf32, #tpu.memory_space<vmem>>, %arg9: memref<1x4xf32, #tpu.memory_space<vmem>>, %arg10: memref<3x3x4x4xf32, #tpu.memory_space<vmem>>, %arg11: memref<1x4xf32, #tpu.memory_space<vmem>>, %arg12: memref<4x16xf32, #tpu.memory_space<vmem>>, %arg13: memref<4x16xf32, #tpu.memory_space<vmem>>, %arg14: memref<1x16xf32, #tpu.memory_space<vmem>>, %arg15: memref<1x8x16x16xf32, #tpu.memory_space<vmem>>, %arg16: memref<10x18x4xf32, #tpu.memory_space<vmem>>) attributes {dimension_semantics = [#tpu.dimension_semantics<parallel>, #tpu.dimension_semantics<parallel>], iteration_bounds = array<i64: 2, 2>, scalar_prefetch = 0 : i64, scratch_operands = 1 : i64, tpu.core_type = #tpu.core_type<tc>, window_params = [{transform_indices = @transform_0, window_bounds = array<i64: 1, 8, 16, 8>}, {transform_indices = @transform_1, window_bounds = array<i64: 1, 2, 16, 8>}, {pipeline_mode = #tpu.pipeline_mode<synchronous>, transform_indices = @transform_2, window_bounds = array<i64: 8, 4>}, {pipeline_mode = #tpu.pipeline_mode<synchronous>, transform_indices = @transform_3, window_bounds = array<i64: 1, 4>}, {pipeline_mode = #tpu.pipeline_mode<synchronous>, transform_indices = @transform_4, window_bounds = array<i64: 8, 4>}, {pipeline_mode = #tpu.pipeline_mode<synchronous>, transform_indices = @transform_5, window_bounds = array<i64: 1, 4>}, {pipeline_mode = #tpu.pipeline_mode<synchronous>, transform_indices = @transform_6, window_bounds = array<i64: 4, 4>}, {pipeline_mode = #tpu.pipeline_mode<synchronous>, transform_indices = @transform_7, window_bounds = array<i64: 1, 4>}, {pipeline_mode = #tpu.pipeline_mode<synchronous>, transform_indices = @transform_8, window_bounds = array<i64: 3, 3, 4, 4>}, {pipeline_mode = #tpu.pipeline_mode<synchronous>, transform_indices = @transform_9, window_bounds = array<i64: 1, 4>}, {pipeline_mode = #tpu.pipeline_mode<synchronous>, transform_indices = @transform_10, window_bounds = array<i64: 4, 16>}, {pipeline_mode = #tpu.pipeline_mode<synchronous>, transform_indices = @transform_11, window_bounds = array<i64: 4, 16>}, {pipeline_mode = #tpu.pipeline_mode<synchronous>, transform_indices = @transform_12, window_bounds = array<i64: 1, 16>}, {transform_indices = @transform_13, window_bounds = array<i64: 1, 8, 16, 16>}]} {
    %c0 = arith.constant 0 : index
    %c0_0 = arith.constant 0 : index
    %c0_1 = arith.constant 0 : index
    %c0_2 = arith.constant 0 : index
    %0 = vector.load %arg2[%c0, %c0_0, %c0_1, %c0_2] : memref<1x8x16x8xf32, #tpu.memory_space<vmem>>, vector<1x8x16x8xf32>
    %1 = vector.shape_cast %0 : vector<1x8x16x8xf32> to vector<8x16x8xf32>
    %2 = vector.shape_cast %1 : vector<8x16x8xf32> to vector<128x8xf32>
    %c0_3 = arith.constant 0 : index
    %c0_4 = arith.constant 0 : index
    %3 = vector.load %arg4[%c0_3, %c0_4] : memref<8x4xf32, #tpu.memory_space<vmem>>, vector<8x4xf32>
    %cst = arith.constant dense<0.000000e+00> : vector<128x4xf32>
    %4 = tpu.matmul %2, %3, %cst {dimension_numbers = #tpu.dot_dimension_numbers<[1], [0], [0], [1], [0, 0, 1, 1], [], []>} : vector<128x8xf32>, vector<8x4xf32>, vector<128x4xf32> -> vector<128x4xf32>
    %c0_5 = arith.constant 0 : index
    %c0_6 = arith.constant 0 : index
    %5 = vector.load %arg5[%c0_5, %c0_6] : memref<1x4xf32, #tpu.memory_space<vmem>>, vector<1x4xf32>
    %6 = vector.broadcast %5 : vector<1x4xf32> to vector<128x4xf32>
    %7 = arith.addf %4, %6 : vector<128x4xf32>
    %8 = arith.negf %7 : vector<128x4xf32>
    %9 = math.exp %8 : vector<128x4xf32>
    %cst_7 = arith.constant 1.000000e+00 : f32
    %10 = vector.broadcast %cst_7 : f32 to vector<128x4xf32>
    %11 = arith.addf %10, %9 : vector<128x4xf32>
    %12 = arith.divf %10, %11 : vector<128x4xf32>
    %13 = arith.mulf %7, %12 : vector<128x4xf32>
    %c0_8 = arith.constant 0 : index
    %c0_9 = arith.constant 0 : index
    %14 = vector.load %arg6[%c0_8, %c0_9] : memref<8x4xf32, #tpu.memory_space<vmem>>, vector<8x4xf32>
    %cst_10 = arith.constant dense<0.000000e+00> : vector<128x4xf32>
    %15 = tpu.matmul %2, %14, %cst_10 {dimension_numbers = #tpu.dot_dimension_numbers<[1], [0], [0], [1], [0, 0, 1, 1], [], []>} : vector<128x8xf32>, vector<8x4xf32>, vector<128x4xf32> -> vector<128x4xf32>
    %c0_11 = arith.constant 0 : index
    %c0_12 = arith.constant 0 : index
    %16 = vector.load %arg7[%c0_11, %c0_12] : memref<1x4xf32, #tpu.memory_space<vmem>>, vector<1x4xf32>
    %17 = vector.broadcast %16 : vector<1x4xf32> to vector<128x4xf32>
    %18 = arith.addf %15, %17 : vector<128x4xf32>
    %19 = arith.negf %18 : vector<128x4xf32>
    %20 = math.exp %19 : vector<128x4xf32>
    %cst_13 = arith.constant 1.000000e+00 : f32
    %21 = vector.broadcast %cst_13 : f32 to vector<128x4xf32>
    %22 = arith.addf %21, %20 : vector<128x4xf32>
    %23 = arith.divf %21, %22 : vector<128x4xf32>
    %24 = arith.mulf %18, %23 : vector<128x4xf32>
    %c0_14 = arith.constant 0 : index
    %c0_15 = arith.constant 0 : index
    %25 = vector.load %arg8[%c0_14, %c0_15] : memref<4x4xf32, #tpu.memory_space<vmem>>, vector<4x4xf32>
    %cst_16 = arith.constant dense<0.000000e+00> : vector<128x4xf32>
    %26 = tpu.matmul %13, %25, %cst_16 {dimension_numbers = #tpu.dot_dimension_numbers<[1], [0], [0], [1], [0, 0, 1, 1], [], []>} : vector<128x4xf32>, vector<4x4xf32>, vector<128x4xf32> -> vector<128x4xf32>
    %c0_17 = arith.constant 0 : index
    %c0_18 = arith.constant 0 : index
    %27 = vector.load %arg9[%c0_17, %c0_18] : memref<1x4xf32, #tpu.memory_space<vmem>>, vector<1x4xf32>
    %28 = vector.broadcast %27 : vector<1x4xf32> to vector<128x4xf32>
    %29 = arith.addf %26, %28 : vector<128x4xf32>
    %30 = arith.negf %29 : vector<128x4xf32>
    %31 = math.exp %30 : vector<128x4xf32>
    %cst_19 = arith.constant 1.000000e+00 : f32
    %32 = vector.broadcast %cst_19 : f32 to vector<128x4xf32>
    %33 = arith.addf %32, %31 : vector<128x4xf32>
    %34 = arith.divf %32, %33 : vector<128x4xf32>
    %35 = arith.mulf %29, %34 : vector<128x4xf32>
    %c0_20 = arith.constant 0 : index
    %c0_21 = arith.constant 0 : index
    %c0_22 = arith.constant 0 : index
    %c0_23 = arith.constant 0 : index
    %36 = vector.load %arg3[%c0_20, %c0_21, %c0_22, %c0_23] : memref<1x2x16x8xf32, #tpu.memory_space<vmem>>, vector<1x2x16x8xf32>
    %37 = vector.shape_cast %36 : vector<1x2x16x8xf32> to vector<2x16x8xf32>
    %38 = vector.shape_cast %37 : vector<2x16x8xf32> to vector<32x8xf32>
    %c0_24 = arith.constant 0 : index
    %c0_25 = arith.constant 0 : index
    %39 = vector.load %arg4[%c0_24, %c0_25] : memref<8x4xf32, #tpu.memory_space<vmem>>, vector<8x4xf32>
    %cst_26 = arith.constant dense<0.000000e+00> : vector<32x4xf32>
    %40 = tpu.matmul %38, %39, %cst_26 {dimension_numbers = #tpu.dot_dimension_numbers<[1], [0], [0], [1], [0, 0, 1, 1], [], []>} : vector<32x8xf32>, vector<8x4xf32>, vector<32x4xf32> -> vector<32x4xf32>
    %c0_27 = arith.constant 0 : index
    %c0_28 = arith.constant 0 : index
    %41 = vector.load %arg5[%c0_27, %c0_28] : memref<1x4xf32, #tpu.memory_space<vmem>>, vector<1x4xf32>
    %42 = vector.broadcast %41 : vector<1x4xf32> to vector<32x4xf32>
    %43 = arith.addf %40, %42 : vector<32x4xf32>
    %44 = arith.negf %43 : vector<32x4xf32>
    %45 = math.exp %44 : vector<32x4xf32>
    %cst_29 = arith.constant 1.000000e+00 : f32
    %46 = vector.broadcast %cst_29 : f32 to vector<32x4xf32>
    %47 = arith.addf %46, %45 : vector<32x4xf32>
    %48 = arith.divf %46, %47 : vector<32x4xf32>
    %49 = arith.mulf %43, %48 : vector<32x4xf32>
    %c0_30 = arith.constant 0 : index
    %c0_31 = arith.constant 0 : index
    %50 = vector.load %arg8[%c0_30, %c0_31] : memref<4x4xf32, #tpu.memory_space<vmem>>, vector<4x4xf32>
    %cst_32 = arith.constant dense<0.000000e+00> : vector<32x4xf32>
    %51 = tpu.matmul %49, %50, %cst_32 {dimension_numbers = #tpu.dot_dimension_numbers<[1], [0], [0], [1], [0, 0, 1, 1], [], []>} : vector<32x4xf32>, vector<4x4xf32>, vector<32x4xf32> -> vector<32x4xf32>
    %c0_33 = arith.constant 0 : index
    %c0_34 = arith.constant 0 : index
    %52 = vector.load %arg9[%c0_33, %c0_34] : memref<1x4xf32, #tpu.memory_space<vmem>>, vector<1x4xf32>
    %53 = vector.broadcast %52 : vector<1x4xf32> to vector<32x4xf32>
    %54 = arith.addf %51, %53 : vector<32x4xf32>
    %55 = arith.negf %54 : vector<32x4xf32>
    %56 = math.exp %55 : vector<32x4xf32>
    %cst_35 = arith.constant 1.000000e+00 : f32
    %57 = vector.broadcast %cst_35 : f32 to vector<32x4xf32>
    %58 = arith.addf %57, %56 : vector<32x4xf32>
    %59 = arith.divf %57, %58 : vector<32x4xf32>
    %60 = arith.mulf %54, %59 : vector<32x4xf32>
    %cst_36 = arith.constant 0.000000e+00 : f32
    %61 = vector.broadcast %cst_36 : f32 to vector<1x18x4xf32>
    %cst_37 = arith.constant 0.000000e+00 : f32
    %62 = vector.broadcast %cst_37 : f32 to vector<10x1x4xf32>
    %c0_38 = arith.constant 0 : index
    %c0_39 = arith.constant 0 : index
    %c0_40 = arith.constant 0 : index
    %63 = vector.load %arg16[%c0_38, %c0_39, %c0_40] : memref<10x18x4xf32, #tpu.memory_space<vmem>>, vector<1x18x4xf32>
    tpu.vector_store %arg16[%c0_38, %c0_39, %c0_40], %61 {strides = array<i32>} : memref<10x18x4xf32, #tpu.memory_space<vmem>>, vector<1x18x4xf32>,
    %c9 = arith.constant 9 : index
    %c0_41 = arith.constant 0 : index
    %c0_42 = arith.constant 0 : index
    %64 = vector.load %arg16[%c9, %c0_41, %c0_42] : memref<10x18x4xf32, #tpu.memory_space<vmem>>, vector<1x18x4xf32>
    tpu.vector_store %arg16[%c9, %c0_41, %c0_42], %61 {strides = array<i32>} : memref<10x18x4xf32, #tpu.memory_space<vmem>>, vector<1x18x4xf32>,
    %c0_43 = arith.constant 0 : index
    %c0_44 = arith.constant 0 : index
    %c0_45 = arith.constant 0 : index
    %65 = vector.load %arg16[%c0_43, %c0_44, %c0_45] : memref<10x18x4xf32, #tpu.memory_space<vmem>>, vector<10x1x4xf32>
    tpu.vector_store %arg16[%c0_43, %c0_44, %c0_45], %62 {strides = array<i32>} : memref<10x18x4xf32, #tpu.memory_space<vmem>>, vector<10x1x4xf32>,
    %c0_46 = arith.constant 0 : index
    %c17 = arith.constant 17 : index
    %c0_47 = arith.constant 0 : index
    %66 = vector.load %arg16[%c0_46, %c17, %c0_47] : memref<10x18x4xf32, #tpu.memory_space<vmem>>, vector<10x1x4xf32>
    tpu.vector_store %arg16[%c0_46, %c17, %c0_47], %62 {strides = array<i32>} : memref<10x18x4xf32, #tpu.memory_space<vmem>>, vector<10x1x4xf32>,
    %67 = vector.shape_cast %35 : vector<128x4xf32> to vector<8x16x4xf32>
    %c1 = arith.constant 1 : index
    %c1_48 = arith.constant 1 : index
    %c0_49 = arith.constant 0 : index
    %68 = vector.load %arg16[%c1, %c1_48, %c0_49] : memref<10x18x4xf32, #tpu.memory_space<vmem>>, vector<8x16x4xf32>
    tpu.vector_store %arg16[%c1, %c1_48, %c0_49], %67 {strides = array<i32>} : memref<10x18x4xf32, #tpu.memory_space<vmem>>, vector<8x16x4xf32>,
    %c0_i32 = arith.constant 0 : i32
    %69 = arith.cmpi sgt, %arg1, %c0_i32 : i32
    %70 = arith.extui %69 : i1 to i32
    %c0_i32_50 = arith.constant 0 : i32
    %71 = arith.cmpi ne, %70, %c0_i32_50 : i32
    scf.if %71 {
      %157 = vector.extract_strided_slice %60 {offsets = [0, 0], sizes = [16, 4], strides = [1, 1]} : vector<32x4xf32> to vector<16x4xf32>
      %158 = vector.shape_cast %157 : vector<16x4xf32> to vector<1x16x4xf32>
      %c0_140 = arith.constant 0 : index
      %c1_141 = arith.constant 1 : index
      %c0_142 = arith.constant 0 : index
      %159 = vector.load %arg16[%c0_140, %c1_141, %c0_142] : memref<10x18x4xf32, #tpu.memory_space<vmem>>, vector<1x16x4xf32>
      tpu.vector_store %arg16[%c0_140, %c1_141, %c0_142], %158 {strides = array<i32>} : memref<10x18x4xf32, #tpu.memory_space<vmem>>, vector<1x16x4xf32>,
    } else {
    }
    %c1_i32 = arith.constant 1 : i32
    %72 = arith.cmpi slt, %arg1, %c1_i32 : i32
    %73 = arith.extui %72 : i1 to i32
    %c0_i32_51 = arith.constant 0 : i32
    %74 = arith.cmpi ne, %73, %c0_i32_51 : i32
    scf.if %74 {
      %157 = vector.extract_strided_slice %60 {offsets = [16, 0], sizes = [16, 4], strides = [1, 1]} : vector<32x4xf32> to vector<16x4xf32>
      %158 = vector.shape_cast %157 : vector<16x4xf32> to vector<1x16x4xf32>
      %c9_140 = arith.constant 9 : index
      %c1_141 = arith.constant 1 : index
      %c0_142 = arith.constant 0 : index
      %159 = vector.load %arg16[%c9_140, %c1_141, %c0_142] : memref<10x18x4xf32, #tpu.memory_space<vmem>>, vector<1x16x4xf32>
      tpu.vector_store %arg16[%c9_140, %c1_141, %c0_142], %158 {strides = array<i32>} : memref<10x18x4xf32, #tpu.memory_space<vmem>>, vector<1x16x4xf32>,
    } else {
    }
    %cst_52 = arith.constant 0.000000e+00 : f32
    %75 = vector.broadcast %cst_52 : f32 to vector<128x4xf32>
    %c0_53 = arith.constant 0 : index
    %c0_54 = arith.constant 0 : index
    %c0_55 = arith.constant 0 : index
    %76 = vector.load %arg16[%c0_53, %c0_54, %c0_55] : memref<10x18x4xf32, #tpu.memory_space<vmem>>, vector<8x16x4xf32>
    %77 = vector.shape_cast %76 : vector<8x16x4xf32> to vector<128x4xf32>
    %c0_56 = arith.constant 0 : index
    %c0_57 = arith.constant 0 : index
    %c0_58 = arith.constant 0 : index
    %c0_59 = arith.constant 0 : index
    %78 = vector.load %arg10[%c0_56, %c0_57, %c0_58, %c0_59] : memref<3x3x4x4xf32, #tpu.memory_space<vmem>>, vector<1x1x4x4xf32>
    %79 = vector.shape_cast %78 : vector<1x1x4x4xf32> to vector<4x4xf32>
    %cst_60 = arith.constant dense<0.000000e+00> : vector<128x4xf32>
    %80 = tpu.matmul %77, %79, %cst_60 {dimension_numbers = #tpu.dot_dimension_numbers<[1], [0], [0], [1], [0, 0, 1, 1], [], []>} : vector<128x4xf32>, vector<4x4xf32>, vector<128x4xf32> -> vector<128x4xf32>
    %81 = arith.addf %75, %80 : vector<128x4xf32>
    %c0_61 = arith.constant 0 : index
    %c1_62 = arith.constant 1 : index
    %c0_63 = arith.constant 0 : index
    %82 = vector.load %arg16[%c0_61, %c1_62, %c0_63] : memref<10x18x4xf32, #tpu.memory_space<vmem>>, vector<8x16x4xf32>
    %83 = vector.shape_cast %82 : vector<8x16x4xf32> to vector<128x4xf32>
    %c0_64 = arith.constant 0 : index
    %c1_65 = arith.constant 1 : index
    %c0_66 = arith.constant 0 : index
    %c0_67 = arith.constant 0 : index
    %84 = vector.load %arg10[%c0_64, %c1_65, %c0_66, %c0_67] : memref<3x3x4x4xf32, #tpu.memory_space<vmem>>, vector<1x1x4x4xf32>
    %85 = vector.shape_cast %84 : vector<1x1x4x4xf32> to vector<4x4xf32>
    %cst_68 = arith.constant dense<0.000000e+00> : vector<128x4xf32>
    %86 = tpu.matmul %83, %85, %cst_68 {dimension_numbers = #tpu.dot_dimension_numbers<[1], [0], [0], [1], [0, 0, 1, 1], [], []>} : vector<128x4xf32>, vector<4x4xf32>, vector<128x4xf32> -> vector<128x4xf32>
    %87 = arith.addf %81, %86 : vector<128x4xf32>
    %c0_69 = arith.constant 0 : index
    %c2 = arith.constant 2 : index
    %c0_70 = arith.constant 0 : index
    %88 = vector.load %arg16[%c0_69, %c2, %c0_70] : memref<10x18x4xf32, #tpu.memory_space<vmem>>, vector<8x16x4xf32>
    %89 = vector.shape_cast %88 : vector<8x16x4xf32> to vector<128x4xf32>
    %c0_71 = arith.constant 0 : index
    %c2_72 = arith.constant 2 : index
    %c0_73 = arith.constant 0 : index
    %c0_74 = arith.constant 0 : index
    %90 = vector.load %arg10[%c0_71, %c2_72, %c0_73, %c0_74] : memref<3x3x4x4xf32, #tpu.memory_space<vmem>>, vector<1x1x4x4xf32>
    %91 = vector.shape_cast %90 : vector<1x1x4x4xf32> to vector<4x4xf32>
    %cst_75 = arith.constant dense<0.000000e+00> : vector<128x4xf32>
    %92 = tpu.matmul %89, %91, %cst_75 {dimension_numbers = #tpu.dot_dimension_numbers<[1], [0], [0], [1], [0, 0, 1, 1], [], []>} : vector<128x4xf32>, vector<4x4xf32>, vector<128x4xf32> -> vector<128x4xf32>
    %93 = arith.addf %87, %92 : vector<128x4xf32>
    %c1_76 = arith.constant 1 : index
    %c0_77 = arith.constant 0 : index
    %c0_78 = arith.constant 0 : index
    %94 = vector.load %arg16[%c1_76, %c0_77, %c0_78] : memref<10x18x4xf32, #tpu.memory_space<vmem>>, vector<8x16x4xf32>
    %95 = vector.shape_cast %94 : vector<8x16x4xf32> to vector<128x4xf32>
    %c1_79 = arith.constant 1 : index
    %c0_80 = arith.constant 0 : index
    %c0_81 = arith.constant 0 : index
    %c0_82 = arith.constant 0 : index
    %96 = vector.load %arg10[%c1_79, %c0_80, %c0_81, %c0_82] : memref<3x3x4x4xf32, #tpu.memory_space<vmem>>, vector<1x1x4x4xf32>
    %97 = vector.shape_cast %96 : vector<1x1x4x4xf32> to vector<4x4xf32>
    %cst_83 = arith.constant dense<0.000000e+00> : vector<128x4xf32>
    %98 = tpu.matmul %95, %97, %cst_83 {dimension_numbers = #tpu.dot_dimension_numbers<[1], [0], [0], [1], [0, 0, 1, 1], [], []>} : vector<128x4xf32>, vector<4x4xf32>, vector<128x4xf32> -> vector<128x4xf32>
    %99 = arith.addf %93, %98 : vector<128x4xf32>
    %c1_84 = arith.constant 1 : index
    %c1_85 = arith.constant 1 : index
    %c0_86 = arith.constant 0 : index
    %100 = vector.load %arg16[%c1_84, %c1_85, %c0_86] : memref<10x18x4xf32, #tpu.memory_space<vmem>>, vector<8x16x4xf32>
    %101 = vector.shape_cast %100 : vector<8x16x4xf32> to vector<128x4xf32>
    %c1_87 = arith.constant 1 : index
    %c1_88 = arith.constant 1 : index
    %c0_89 = arith.constant 0 : index
    %c0_90 = arith.constant 0 : index
    %102 = vector.load %arg10[%c1_87, %c1_88, %c0_89, %c0_90] : memref<3x3x4x4xf32, #tpu.memory_space<vmem>>, vector<1x1x4x4xf32>
    %103 = vector.shape_cast %102 : vector<1x1x4x4xf32> to vector<4x4xf32>
    %cst_91 = arith.constant dense<0.000000e+00> : vector<128x4xf32>
    %104 = tpu.matmul %101, %103, %cst_91 {dimension_numbers = #tpu.dot_dimension_numbers<[1], [0], [0], [1], [0, 0, 1, 1], [], []>} : vector<128x4xf32>, vector<4x4xf32>, vector<128x4xf32> -> vector<128x4xf32>
    %105 = arith.addf %99, %104 : vector<128x4xf32>
    %c1_92 = arith.constant 1 : index
    %c2_93 = arith.constant 2 : index
    %c0_94 = arith.constant 0 : index
    %106 = vector.load %arg16[%c1_92, %c2_93, %c0_94] : memref<10x18x4xf32, #tpu.memory_space<vmem>>, vector<8x16x4xf32>
    %107 = vector.shape_cast %106 : vector<8x16x4xf32> to vector<128x4xf32>
    %c1_95 = arith.constant 1 : index
    %c2_96 = arith.constant 2 : index
    %c0_97 = arith.constant 0 : index
    %c0_98 = arith.constant 0 : index
    %108 = vector.load %arg10[%c1_95, %c2_96, %c0_97, %c0_98] : memref<3x3x4x4xf32, #tpu.memory_space<vmem>>, vector<1x1x4x4xf32>
    %109 = vector.shape_cast %108 : vector<1x1x4x4xf32> to vector<4x4xf32>
    %cst_99 = arith.constant dense<0.000000e+00> : vector<128x4xf32>
    %110 = tpu.matmul %107, %109, %cst_99 {dimension_numbers = #tpu.dot_dimension_numbers<[1], [0], [0], [1], [0, 0, 1, 1], [], []>} : vector<128x4xf32>, vector<4x4xf32>, vector<128x4xf32> -> vector<128x4xf32>
    %111 = arith.addf %105, %110 : vector<128x4xf32>
    %c2_100 = arith.constant 2 : index
    %c0_101 = arith.constant 0 : index
    %c0_102 = arith.constant 0 : index
    %112 = vector.load %arg16[%c2_100, %c0_101, %c0_102] : memref<10x18x4xf32, #tpu.memory_space<vmem>>, vector<8x16x4xf32>
    %113 = vector.shape_cast %112 : vector<8x16x4xf32> to vector<128x4xf32>
    %c2_103 = arith.constant 2 : index
    %c0_104 = arith.constant 0 : index
    %c0_105 = arith.constant 0 : index
    %c0_106 = arith.constant 0 : index
    %114 = vector.load %arg10[%c2_103, %c0_104, %c0_105, %c0_106] : memref<3x3x4x4xf32, #tpu.memory_space<vmem>>, vector<1x1x4x4xf32>
    %115 = vector.shape_cast %114 : vector<1x1x4x4xf32> to vector<4x4xf32>
    %cst_107 = arith.constant dense<0.000000e+00> : vector<128x4xf32>
    %116 = tpu.matmul %113, %115, %cst_107 {dimension_numbers = #tpu.dot_dimension_numbers<[1], [0], [0], [1], [0, 0, 1, 1], [], []>} : vector<128x4xf32>, vector<4x4xf32>, vector<128x4xf32> -> vector<128x4xf32>
    %117 = arith.addf %111, %116 : vector<128x4xf32>
    %c2_108 = arith.constant 2 : index
    %c1_109 = arith.constant 1 : index
    %c0_110 = arith.constant 0 : index
    %118 = vector.load %arg16[%c2_108, %c1_109, %c0_110] : memref<10x18x4xf32, #tpu.memory_space<vmem>>, vector<8x16x4xf32>
    %119 = vector.shape_cast %118 : vector<8x16x4xf32> to vector<128x4xf32>
    %c2_111 = arith.constant 2 : index
    %c1_112 = arith.constant 1 : index
    %c0_113 = arith.constant 0 : index
    %c0_114 = arith.constant 0 : index
    %120 = vector.load %arg10[%c2_111, %c1_112, %c0_113, %c0_114] : memref<3x3x4x4xf32, #tpu.memory_space<vmem>>, vector<1x1x4x4xf32>
    %121 = vector.shape_cast %120 : vector<1x1x4x4xf32> to vector<4x4xf32>
    %cst_115 = arith.constant dense<0.000000e+00> : vector<128x4xf32>
    %122 = tpu.matmul %119, %121, %cst_115 {dimension_numbers = #tpu.dot_dimension_numbers<[1], [0], [0], [1], [0, 0, 1, 1], [], []>} : vector<128x4xf32>, vector<4x4xf32>, vector<128x4xf32> -> vector<128x4xf32>
    %123 = arith.addf %117, %122 : vector<128x4xf32>
    %c2_116 = arith.constant 2 : index
    %c2_117 = arith.constant 2 : index
    %c0_118 = arith.constant 0 : index
    %124 = vector.load %arg16[%c2_116, %c2_117, %c0_118] : memref<10x18x4xf32, #tpu.memory_space<vmem>>, vector<8x16x4xf32>
    %125 = vector.shape_cast %124 : vector<8x16x4xf32> to vector<128x4xf32>
    %c2_119 = arith.constant 2 : index
    %c2_120 = arith.constant 2 : index
    %c0_121 = arith.constant 0 : index
    %c0_122 = arith.constant 0 : index
    %126 = vector.load %arg10[%c2_119, %c2_120, %c0_121, %c0_122] : memref<3x3x4x4xf32, #tpu.memory_space<vmem>>, vector<1x1x4x4xf32>
    %127 = vector.shape_cast %126 : vector<1x1x4x4xf32> to vector<4x4xf32>
    %cst_123 = arith.constant dense<0.000000e+00> : vector<128x4xf32>
    %128 = tpu.matmul %125, %127, %cst_123 {dimension_numbers = #tpu.dot_dimension_numbers<[1], [0], [0], [1], [0, 0, 1, 1], [], []>} : vector<128x4xf32>, vector<4x4xf32>, vector<128x4xf32> -> vector<128x4xf32>
    %129 = arith.addf %123, %128 : vector<128x4xf32>
    %c0_124 = arith.constant 0 : index
    %c0_125 = arith.constant 0 : index
    %130 = vector.load %arg11[%c0_124, %c0_125] : memref<1x4xf32, #tpu.memory_space<vmem>>, vector<1x4xf32>
    %131 = vector.broadcast %130 : vector<1x4xf32> to vector<128x4xf32>
    %132 = arith.addf %129, %131 : vector<128x4xf32>
    %133 = arith.negf %132 : vector<128x4xf32>
    %134 = math.exp %133 : vector<128x4xf32>
    %cst_126 = arith.constant 1.000000e+00 : f32
    %135 = vector.broadcast %cst_126 : f32 to vector<128x4xf32>
    %136 = arith.addf %135, %134 : vector<128x4xf32>
    %137 = arith.divf %135, %136 : vector<128x4xf32>
    %138 = arith.mulf %132, %137 : vector<128x4xf32>
    %c0_127 = arith.constant 0 : index
    %c0_128 = arith.constant 0 : index
    %139 = vector.load %arg12[%c0_127, %c0_128] : memref<4x16xf32, #tpu.memory_space<vmem>>, vector<4x16xf32>
    %cst_129 = arith.constant dense<0.000000e+00> : vector<128x16xf32>
    %140 = tpu.matmul %138, %139, %cst_129 {dimension_numbers = #tpu.dot_dimension_numbers<[1], [0], [0], [1], [0, 0, 1, 1], [], []>} : vector<128x4xf32>, vector<4x16xf32>, vector<128x16xf32> -> vector<128x16xf32>
    %c0_130 = arith.constant 0 : index
    %c0_131 = arith.constant 0 : index
    %141 = vector.load %arg13[%c0_130, %c0_131] : memref<4x16xf32, #tpu.memory_space<vmem>>, vector<4x16xf32>
    %cst_132 = arith.constant dense<0.000000e+00> : vector<128x16xf32>
    %142 = tpu.matmul %24, %141, %cst_132 {dimension_numbers = #tpu.dot_dimension_numbers<[1], [0], [0], [1], [0, 0, 1, 1], [], []>} : vector<128x4xf32>, vector<4x16xf32>, vector<128x16xf32> -> vector<128x16xf32>
    %143 = arith.addf %140, %142 : vector<128x16xf32>
    %c0_133 = arith.constant 0 : index
    %c0_134 = arith.constant 0 : index
    %144 = vector.load %arg14[%c0_133, %c0_134] : memref<1x16xf32, #tpu.memory_space<vmem>>, vector<1x16xf32>
    %145 = vector.broadcast %144 : vector<1x16xf32> to vector<128x16xf32>
    %146 = arith.addf %143, %145 : vector<128x16xf32>
    %147 = arith.negf %146 : vector<128x16xf32>
    %148 = math.exp %147 : vector<128x16xf32>
    %cst_135 = arith.constant 1.000000e+00 : f32
    %149 = vector.broadcast %cst_135 : f32 to vector<128x16xf32>
    %150 = arith.addf %149, %148 : vector<128x16xf32>
    %151 = arith.divf %149, %150 : vector<128x16xf32>
    %152 = arith.mulf %146, %151 : vector<128x16xf32>
    %153 = vector.shape_cast %152 : vector<128x16xf32> to vector<8x16x16xf32>
    %c0_136 = arith.constant 0 : index
    %c0_137 = arith.constant 0 : index
    %c0_138 = arith.constant 0 : index
    %c0_139 = arith.constant 0 : index
    %154 = vector.load %arg15[%c0_136, %c0_137, %c0_138, %c0_139] : memref<1x8x16x16xf32, #tpu.memory_space<vmem>>, vector<1x8x16x16xf32>
    %155 = vector.shape_cast %154 : vector<1x8x16x16xf32> to vector<8x16x16xf32>
    %156 = vector.shape_cast %153 : vector<8x16x16xf32> to vector<1x8x16x16xf32>
    tpu.vector_store %arg15[%c0_136, %c0_137, %c0_138, %c0_139], %156 {strides = array<i32>} : memref<1x8x16x16xf32, #tpu.memory_space<vmem>>, vector<1x8x16x16xf32>,
    return
  }
  func.func @transform_0(%arg0: i32, %arg1: i32) -> (i32, i32, i32, i32) {
    %c0_i32 = arith.constant 0 : i32
    %c0_i32_0 = arith.constant 0 : i32
    %c0_i32_1 = arith.constant 0 : i32
    return %arg0, %arg1, %c0_i32, %c0_i32_0 : i32, i32, i32, i32
  }
  func.func @transform_1(%arg0: i32, %arg1: i32) -> (i32, i32, i32, i32) {
    %c0_i32 = arith.constant 0 : i32
    %c0_i32_0 = arith.constant 0 : i32
    %c0_i32_1 = arith.constant 0 : i32
    return %arg0, %arg1, %c0_i32, %c0_i32_0 : i32, i32, i32, i32
  }
  func.func @transform_2(%arg0: i32, %arg1: i32) -> (i32, i32) {
    %c0_i32 = arith.constant 0 : i32
    %c0_i32_0 = arith.constant 0 : i32
    %c0_i32_1 = arith.constant 0 : i32
    return %c0_i32, %c0_i32_0 : i32, i32
  }
  func.func @transform_3(%arg0: i32, %arg1: i32) -> (i32, i32) {
    %c0_i32 = arith.constant 0 : i32
    %c0_i32_0 = arith.constant 0 : i32
    %c0_i32_1 = arith.constant 0 : i32
    return %c0_i32, %c0_i32_0 : i32, i32
  }
  func.func @transform_4(%arg0: i32, %arg1: i32) -> (i32, i32) {
    %c0_i32 = arith.constant 0 : i32
    %c0_i32_0 = arith.constant 0 : i32
    %c0_i32_1 = arith.constant 0 : i32
    return %c0_i32, %c0_i32_0 : i32, i32
  }
  func.func @transform_5(%arg0: i32, %arg1: i32) -> (i32, i32) {
    %c0_i32 = arith.constant 0 : i32
    %c0_i32_0 = arith.constant 0 : i32
    %c0_i32_1 = arith.constant 0 : i32
    return %c0_i32, %c0_i32_0 : i32, i32
  }
  func.func @transform_6(%arg0: i32, %arg1: i32) -> (i32, i32) {
    %c0_i32 = arith.constant 0 : i32
    %c0_i32_0 = arith.constant 0 : i32
    %c0_i32_1 = arith.constant 0 : i32
    return %c0_i32, %c0_i32_0 : i32, i32
  }
  func.func @transform_7(%arg0: i32, %arg1: i32) -> (i32, i32) {
    %c0_i32 = arith.constant 0 : i32
    %c0_i32_0 = arith.constant 0 : i32
    %c0_i32_1 = arith.constant 0 : i32
    return %c0_i32, %c0_i32_0 : i32, i32
  }
  func.func @transform_8(%arg0: i32, %arg1: i32) -> (i32, i32, i32, i32) {
    %c0_i32 = arith.constant 0 : i32
    %c0_i32_0 = arith.constant 0 : i32
    %c0_i32_1 = arith.constant 0 : i32
    %c0_i32_2 = arith.constant 0 : i32
    %c0_i32_3 = arith.constant 0 : i32
    return %c0_i32, %c0_i32_0, %c0_i32_1, %c0_i32_2 : i32, i32, i32, i32
  }
  func.func @transform_9(%arg0: i32, %arg1: i32) -> (i32, i32) {
    %c0_i32 = arith.constant 0 : i32
    %c0_i32_0 = arith.constant 0 : i32
    %c0_i32_1 = arith.constant 0 : i32
    return %c0_i32, %c0_i32_0 : i32, i32
  }
  func.func @transform_10(%arg0: i32, %arg1: i32) -> (i32, i32) {
    %c0_i32 = arith.constant 0 : i32
    %c0_i32_0 = arith.constant 0 : i32
    %c0_i32_1 = arith.constant 0 : i32
    return %c0_i32, %c0_i32_0 : i32, i32
  }
  func.func @transform_11(%arg0: i32, %arg1: i32) -> (i32, i32) {
    %c0_i32 = arith.constant 0 : i32
    %c0_i32_0 = arith.constant 0 : i32
    %c0_i32_1 = arith.constant 0 : i32
    return %c0_i32, %c0_i32_0 : i32, i32
  }
  func.func @transform_12(%arg0: i32, %arg1: i32) -> (i32, i32) {
    %c0_i32 = arith.constant 0 : i32
    %c0_i32_0 = arith.constant 0 : i32
    %c0_i32_1 = arith.constant 0 : i32
    return %c0_i32, %c0_i32_0 : i32, i32
  }
  func.func @transform_13(%arg0: i32, %arg1: i32) -> (i32, i32, i32, i32) {
    %c0_i32 = arith.constant 0 : i32
    %c0_i32_0 = arith.constant 0 : i32
    %c0_i32_1 = arith.constant 0 : i32
    return %arg0, %arg1, %c0_i32, %c0_i32_0 : i32, i32, i32, i32
  }
}

</mosaic_0001>

<llo_original>
// kernel: tpu_custom_call.1
$region0: #{tpu_custom_call.1}
  #allocation0 [shape = 'u32[]', space=smem, size = 0x4, offset = 0x4, fixed_abs, tag = 'smem constant byte address 0x4 - core index']
  #allocation1 [shape = 'u32[72,128]{1,0:T(1,128)}', space=vmem, size = 0x9000, scoped, tag = 'internal scratch']
  #allocation2 [shape = 'f32[10,18,4]{2,1,0:T(8,128)}', space=vmem, size = 0x1e000, scoped, tag = 'scratch operand']
  %s0 = inlined_call_operand.vmem [shape: f32[2,16,16,8], index: 0, kind: input, shape index: {}]
  %s1 = inlined_call_operand.vmem [shape: f32[2,4,16,8], index: 1, kind: input, shape index: {}]
  %s2 = inlined_call_operand.vmem [shape: f32[8,4], index: 2, kind: input, shape index: {}]
  %s3 = inlined_call_operand.vmem [shape: f32[1,4], index: 3, kind: input, shape index: {}]
  %s4 = inlined_call_operand.vmem [shape: f32[8,4], index: 4, kind: input, shape index: {}]
  %s5 = inlined_call_operand.vmem [shape: f32[1,4], index: 5, kind: input, shape index: {}]
  %s6 = inlined_call_operand.vmem [shape: f32[4,4], index: 6, kind: input, shape index: {}]
  %s7 = inlined_call_operand.vmem [shape: f32[1,4], index: 7, kind: input, shape index: {}]
  %s8 = inlined_call_operand.vmem [shape: f32[3,3,4,4], index: 8, kind: input, shape index: {}]
  %s9 = inlined_call_operand.vmem [shape: f32[1,4], index: 9, kind: input, shape index: {}]
  %s10 = inlined_call_operand.vmem [shape: f32[4,16], index: 10, kind: input, shape index: {}]
  %s11 = inlined_call_operand.vmem [shape: f32[4,16], index: 11, kind: input, shape index: {}]
  %s12 = inlined_call_operand.vmem [shape: f32[1,16], index: 12, kind: input, shape index: {}]
  %s13 = inlined_call_operand.hbm [shape: f32[2,16,16,16], index: 13, kind: output, shape index: {}]
  %s14 = sld [smem:[#allocation0]]
  $region93: #{tpu_custom_call.1} parent=0
    _
  %s16 = ssub.s32 1, %s14
  %s17 = scalar_select 0, %s16, %s14
  $region1: #{tpu_custom_call.1} parent=0
    #allocation3 [shape = 'u8[131072]{0}', space=vmem, size = 0x20000, scoped, tag = 'output window, operand 0']
    #allocation4 [shape = 's32[2]{0}', space=sflag, size = 0x8, scoped, tag = 'scoped memory for tpu_custom_call.1']
    %18 = vsyncpa [#allocation4], 0
    %s19 = scalar_lea.sflag [#allocation4], 1
    %20 = vsyncpa %s19, 0
    loop: start=0, step=1, limit=6
    $region2: #{tpu_custom_call.1} parent=1 // loop_pre_header
      _
    $region3: #{tpu_custom_call.1} parent=1 // loop_header
      %s22 = sphi 0, %s26
      %p23 = scmp.ge.s32.totalorder %s22, 6
      %s29 = sphi 0, %s41
      %s30 = sphi 0, %s37
      %s31 = sphi 0, %s29
      %s32 = sphi 0, %s30
      %s33 = sphi 0, %s31
      %s34 = sphi 0, %s32
      %s46 = sphi 0, %s48
      %s49 = sphi 0, %s46
      %s50 = sphi 0, %s49
      %s66 = sphi 0, %s50
      %s74 = sphi 0, %s76
      %s77 = sphi 0, %s74
      %s78 = sphi 0, %s77
      %s94 = sphi 0, %s78
      %s98 = sphi 0, %s98
      %s100 = sphi 0, %s98
      %s101 = sphi 0, %s100
      %s115 = sphi 0, %s101
      %s119 = sphi 0, %s119
      %s121 = sphi 0, %s119
      %s122 = sphi 0, %s121
      %s136 = sphi 0, %s122
      %s140 = sphi 0, %s140
      %s142 = sphi 0, %s140
      %s143 = sphi 0, %s142
      %s157 = sphi 0, %s143
      %s161 = sphi 0, %s161
      %s163 = sphi 0, %s161
      %s164 = sphi 0, %s163
      %s178 = sphi 0, %s164
      %s182 = sphi 0, %s182
      %s184 = sphi 0, %s182
      %s185 = sphi 0, %s184
      %s199 = sphi 0, %s185
      %s203 = sphi 0, %s203
      %s205 = sphi 0, %s203
      %s206 = sphi 0, %s205
      %s220 = sphi 0, %s206
      %s224 = sphi 0, %s224
      %s226 = sphi 0, %s224
      %s227 = sphi 0, %s226
      %s241 = sphi 0, %s227
      %s245 = sphi 0, %s245
      %s247 = sphi 0, %s245
      %s248 = sphi 0, %s247
      %s262 = sphi 0, %s248
      %s266 = sphi 0, %s266
      %s268 = sphi 0, %s266
      %s269 = sphi 0, %s268
      %s283 = sphi 0, %s269
      %s287 = sphi 0, %s287
      %s289 = sphi 0, %s287
      %s290 = sphi 0, %s289
      %s304 = sphi 0, %s290
      %s308 = sphi 0, %s308
      %s310 = sphi 0, %s308
      %s311 = sphi 0, %s310
      %s325 = sphi 0, %s311
      %s333 = sphi 0, %s335
      %s336 = sphi 0, %s333
      %s337 = sphi 0, %s336
      %s353 = sphi 0, %s337
    $region4: #{tpu_custom_call.1} parent=1 // loop_header_branch
      %25 = sbr.rel (%p23) target = $region8
    $region5: #{tpu_custom_call.1} parent=1 // loop_body
      %s27 = ssub.s32 %s22, 1
      %s28 = ssub.s32 %s22, 2
      %s35 = sadd.s32 1, %s30
      %p36 = scmp.ge.s32.totalorder %s35, 2
      %s37 = scalar_select %p36, 0, %s35
      %s38 = sadd.s32 1, %s29
      %s39 = scalar_select %p36, %s38, %s29
      %p40 = scmp.ge.s32.totalorder %s39, 2
      %s41 = scalar_select %p40, 0, %s39
      %s42 = ssub.s32 %s29, %s41
      %s43 = ssub.s32 %s30, %s37
      %s44 = sor.u32 %s42, %s43
      %p45 = scmp.eq.s32.totalorder %s44, 0
      %s47 = sadd.s32 %s46, 1
      %s48 = scalar_select %p45, %s46, %s47
      %p51 = pneg %p45
      %p52 = scmp.eq.s32.totalorder %s22, 3
      %p53 = por %p51, %p52
      %p54 = scmp.ne.s32.totalorder %s46, %s49
      %p55 = scmp.eq.s32.totalorder %s22, 0
      %p56 = por %p54, %p55
      %p57 = scmp.ne.s32.totalorder %s46, %s49
      %p58 = scmp.eq.s32.totalorder %s27, 3
      %p59 = por %p57, %p58
      %p60 = scmp.ne.s32.totalorder %s49, %s50
      %p61 = scmp.eq.s32.totalorder %s27, 0
      %p62 = por %p60, %p61
      %p63 = scmp.ne.s32.totalorder %s49, %s50
      %p64 = scmp.eq.s32.totalorder %s28, 3
      %p65 = por %p63, %p64
      %p67 = scmp.ne.s32.totalorder %s50, %s66
      %p68 = scmp.eq.s32.totalorder %s28, 0
      %p69 = por %p67, %p68
      %s70 = ssub.s32 %s29, %s41
      %s71 = ssub.s32 %s30, %s37
      %s72 = sor.u32 %s70, %s71
      %p73 = scmp.eq.s32.totalorder %s72, 0
      %s75 = sadd.s32 %s74, 1
      %s76 = scalar_select %p73, %s74, %s75
      %p79 = pneg %p73
      %p80 = scmp.eq.s32.totalorder %s22, 3
      %p81 = por %p79, %p80
      %p82 = scmp.ne.s32.totalorder %s74, %s77
      %p83 = scmp.eq.s32.totalorder %s22, 0
      %p84 = por %p82, %p83
      %p85 = scmp.ne.s32.totalorder %s74, %s77
      %p86 = scmp.eq.s32.totalorder %s27, 3
      %p87 = por %p85, %p86
      %p88 = scmp.ne.s32.totalorder %s77, %s78
      %p89 = scmp.eq.s32.totalorder %s27, 0
      %p90 = por %p88, %p89
      %p91 = scmp.ne.s32.totalorder %s77, %s78
      %p92 = scmp.eq.s32.totalorder %s28, 3
      %p93 = por %p91, %p92
      %p95 = scmp.ne.s32.totalorder %s78, %s94
      %p96 = scmp.eq.s32.totalorder %s28, 0
      %p97 = por %p95, %p96
      %s99 = sadd.s32 %s98, 1
      %p102 = scmp.eq.s32.totalorder %s22, 3
      %p103 = scmp.ne.s32.totalorder %s98, %s100
      %p104 = scmp.eq.s32.totalorder %s22, 0
      %p105 = por %p103, %p104
      %p106 = scmp.ne.s32.totalorder %s98, %s100
      %p107 = scmp.eq.s32.totalorder %s27, 3
      %p108 = por %p106, %p107
      %p109 = scmp.ne.s32.totalorder %s100, %s101
      %p110 = scmp.eq.s32.totalorder %s27, 0
      %p111 = por %p109, %p110
      %p112 = scmp.ne.s32.totalorder %s100, %s101
      %p113 = scmp.eq.s32.totalorder %s28, 3
      %p114 = por %p112, %p113
      %p116 = scmp.ne.s32.totalorder %s101, %s115
      %p117 = scmp.eq.s32.totalorder %s28, 0
      %p118 = por %p116, %p117
      %s120 = sadd.s32 %s119, 1
      %p123 = scmp.eq.s32.totalorder %s22, 3
      %p124 = scmp.ne.s32.totalorder %s119, %s121
      %p125 = scmp.eq.s32.totalorder %s22, 0
      %p126 = por %p124, %p125
      %p127 = scmp.ne.s32.totalorder %s119, %s121
      %p128 = scmp.eq.s32.totalorder %s27, 3
      %p129 = por %p127, %p128
      %p130 = scmp.ne.s32.totalorder %s121, %s122
      %p131 = scmp.eq.s32.totalorder %s27, 0
      %p132 = por %p130, %p131
      %p133 = scmp.ne.s32.totalorder %s121, %s122
      %p134 = scmp.eq.s32.totalorder %s28, 3
      %p135 = por %p133, %p134
      %p137 = scmp.ne.s32.totalorder %s122, %s136
      %p138 = scmp.eq.s32.totalorder %s28, 0
      %p139 = por %p137, %p138
      %s141 = sadd.s32 %s140, 1
      %p144 = scmp.eq.s32.totalorder %s22, 3
      %p145 = scmp.ne.s32.totalorder %s140, %s142
      %p146 = scmp.eq.s32.totalorder %s22, 0
      %p147 = por %p145, %p146
      %p148 = scmp.ne.s32.totalorder %s140, %s142
      %p149 = scmp.eq.s32.totalorder %s27, 3
      %p150 = por %p148, %p149
      %p151 = scmp.ne.s32.totalorder %s142, %s143
      %p152 = scmp.eq.s32.totalorder %s27, 0
      %p153 = por %p151, %p152
      %p154 = scmp.ne.s32.totalorder %s142, %s143
      %p155 = scmp.eq.s32.totalorder %s28, 3
      %p156 = por %p154, %p155
      %p158 = scmp.ne.s32.totalorder %s143, %s157
      %p159 = scmp.eq.s32.totalorder %s28, 0
      %p160 = por %p158, %p159
      %s162 = sadd.s32 %s161, 1
      %p165 = scmp.eq.s32.totalorder %s22, 3
      %p166 = scmp.ne.s32.totalorder %s161, %s163
      %p167 = scmp.eq.s32.totalorder %s22, 0
      %p168 = por %p166, %p167
      %p169 = scmp.ne.s32.totalorder %s161, %s163
      %p170 = scmp.eq.s32.totalorder %s27, 3
      %p171 = por %p169, %p170
      %p172 = scmp.ne.s32.totalorder %s163, %s164
      %p173 = scmp.eq.s32.totalorder %s27, 0
      %p174 = por %p172, %p173
      %p175 = scmp.ne.s32.totalorder %s163, %s164
      %p176 = scmp.eq.s32.totalorder %s28, 3
      %p177 = por %p175, %p176
      %p179 = scmp.ne.s32.totalorder %s164, %s178
      %p180 = scmp.eq.s32.totalorder %s28, 0
      %p181 = por %p179, %p180
      %s183 = sadd.s32 %s182, 1
      %p186 = scmp.eq.s32.totalorder %s22, 3
      %p187 = scmp.ne.s32.totalorder %s182, %s184
      %p188 = scmp.eq.s32.totalorder %s22, 0
      %p189 = por %p187, %p188
      %p190 = scmp.ne.s32.totalorder %s182, %s184
      %p191 = scmp.eq.s32.totalorder %s27, 3
      %p192 = por %p190, %p191
      %p193 = scmp.ne.s32.totalorder %s184, %s185
      %p194 = scmp.eq.s32.totalorder %s27, 0
      %p195 = por %p193, %p194
      %p196 = scmp.ne.s32.totalorder %s184, %s185
      %p197 = scmp.eq.s32.totalorder %s28, 3
      %p198 = por %p196, %p197
      %p200 = scmp.ne.s32.totalorder %s185, %s199
      %p201 = scmp.eq.s32.totalorder %s28, 0
      %p202 = por %p200, %p201
      %s204 = sadd.s32 %s203, 1
      %p207 = scmp.eq.s32.totalorder %s22, 3
      %p208 = scmp.ne.s32.totalorder %s203, %s205
      %p209 = scmp.eq.s32.totalorder %s22, 0
      %p210 = por %p208, %p209
      %p211 = scmp.ne.s32.totalorder %s203, %s205
      %p212 = scmp.eq.s32.totalorder %s27, 3
      %p213 = por %p211, %p212
      %p214 = scmp.ne.s32.totalorder %s205, %s206
      %p215 = scmp.eq.s32.totalorder %s27, 0
      %p216 = por %p214, %p215
      %p217 = scmp.ne.s32.totalorder %s205, %s206
      %p218 = scmp.eq.s32.totalorder %s28, 3
      %p219 = por %p217, %p218
      %p221 = scmp.ne.s32.totalorder %s206, %s220
      %p222 = scmp.eq.s32.totalorder %s28, 0
      %p223 = por %p221, %p222
      %s225 = sadd.s32 %s224, 1
      %p228 = scmp.eq.s32.totalorder %s22, 3
      %p229 = scmp.ne.s32.totalorder %s224, %s226
      %p230 = scmp.eq.s32.totalorder %s22, 0
      %p231 = por %p229, %p230
      %p232 = scmp.ne.s32.totalorder %s224, %s226
      %p233 = scmp.eq.s32.totalorder %s27, 3
      %p234 = por %p232, %p233
      %p235 = scmp.ne.s32.totalorder %s226, %s227
      %p236 = scmp.eq.s32.totalorder %s27, 0
      %p237 = por %p235, %p236
      %p238 = scmp.ne.s32.totalorder %s226, %s227
      %p239 = scmp.eq.s32.totalorder %s28, 3
      %p240 = por %p238, %p239
      %p242 = scmp.ne.s32.totalorder %s227, %s241
      %p243 = scmp.eq.s32.totalorder %s28, 0
      %p244 = por %p242, %p243
      %s246 = sadd.s32 %s245, 1
      %p249 = scmp.eq.s32.totalorder %s22, 3
      %p250 = scmp.ne.s32.totalorder %s245, %s247
      %p251 = scmp.eq.s32.totalorder %s22, 0
      %p252 = por %p250, %p251
      %p253 = scmp.ne.s32.totalorder %s245, %s247
      %p254 = scmp.eq.s32.totalorder %s27, 3
      %p255 = por %p253, %p254
      %p256 = scmp.ne.s32.totalorder %s247, %s248
      %p257 = scmp.eq.s32.totalorder %s27, 0
      %p258 = por %p256, %p257
      %p259 = scmp.ne.s32.totalorder %s247, %s248
      %p260 = scmp.eq.s32.totalorder %s28, 3
      %p261 = por %p259, %p260
      %p263 = scmp.ne.s32.totalorder %s248, %s262
      %p264 = scmp.eq.s32.totalorder %s28, 0
      %p265 = por %p263, %p264
      %s267 = sadd.s32 %s266, 1
      %p270 = scmp.eq.s32.totalorder %s22, 3
      %p271 = scmp.ne.s32.totalorder %s266, %s268
      %p272 = scmp.eq.s32.totalorder %s22, 0
      %p273 = por %p271, %p272
      %p274 = scmp.ne.s32.totalorder %s266, %s268
      %p275 = scmp.eq.s32.totalorder %s27, 3
      %p276 = por %p274, %p275
      %p277 = scmp.ne.s32.totalorder %s268, %s269
      %p278 = scmp.eq.s32.totalorder %s27, 0
      %p279 = por %p277, %p278
      %p280 = scmp.ne.s32.totalorder %s268, %s269
      %p281 = scmp.eq.s32.totalorder %s28, 3
      %p282 = por %p280, %p281
      %p284 = scmp.ne.s32.totalorder %s269, %s283
      %p285 = scmp.eq.s32.totalorder %s28, 0
      %p286 = por %p284, %p285
      %s288 = sadd.s32 %s287, 1
      %p291 = scmp.eq.s32.totalorder %s22, 3
      %p292 = scmp.ne.s32.totalorder %s287, %s289
      %p293 = scmp.eq.s32.totalorder %s22, 0
      %p294 = por %p292, %p293
      %p295 = scmp.ne.s32.totalorder %s287, %s289
      %p296 = scmp.eq.s32.totalorder %s27, 3
      %p297 = por %p295, %p296
      %p298 = scmp.ne.s32.totalorder %s289, %s290
      %p299 = scmp.eq.s32.totalorder %s27, 0
      %p300 = por %p298, %p299
      %p301 = scmp.ne.s32.totalorder %s289, %s290
      %p302 = scmp.eq.s32.totalorder %s28, 3
      %p303 = por %p301, %p302
      %p305 = scmp.ne.s32.totalorder %s290, %s304
      %p306 = scmp.eq.s32.totalorder %s28, 0
      %p307 = por %p305, %p306
      %s309 = sadd.s32 %s308, 1
      %p312 = scmp.eq.s32.totalorder %s22, 3
      %p313 = scmp.ne.s32.totalorder %s308, %s310
      %p314 = scmp.eq.s32.totalorder %s22, 0
      %p315 = por %p313, %p314
      %p316 = scmp.ne.s32.totalorder %s308, %s310
      %p317 = scmp.eq.s32.totalorder %s27, 3
      %p318 = por %p316, %p317
      %p319 = scmp.ne.s32.totalorder %s310, %s311
      %p320 = scmp.eq.s32.totalorder %s27, 0
      %p321 = por %p319, %p320
      %p322 = scmp.ne.s32.totalorder %s310, %s311
      %p323 = scmp.eq.s32.totalorder %s28, 3
      %p324 = por %p322, %p323
      %p326 = scmp.ne.s32.totalorder %s311, %s325
      %p327 = scmp.eq.s32.totalorder %s28, 0
      %p328 = por %p326, %p327
      %s329 = ssub.s32 %s29, %s41
      %s330 = ssub.s32 %s30, %s37
      %s331 = sor.u32 %s329, %s330
      %p332 = scmp.eq.s32.totalorder %s331, 0
      %s334 = sadd.s32 %s333, 1
      %s335 = scalar_select %p332, %s333, %s334
      %p338 = pneg %p332
      %p339 = scmp.eq.s32.totalorder %s22, 3
      %p340 = por %p338, %p339
      %p341 = scmp.ne.s32.totalorder %s333, %s336
      %p342 = scmp.eq.s32.totalorder %s22, 0
      %p343 = por %p341, %p342
      %p344 = scmp.ne.s32.totalorder %s333, %s336
      %p345 = scmp.eq.s32.totalorder %s27, 3
      %p346 = por %p344, %p345
      %p347 = scmp.ne.s32.totalorder %s336, %s337
      %p348 = scmp.eq.s32.totalorder %s27, 0
      %p349 = por %p347, %p348
      %p350 = scmp.ne.s32.totalorder %s336, %s337
      %p351 = scmp.eq.s32.totalorder %s28, 3
      %p352 = por %p350, %p351
      %p354 = scmp.ne.s32.totalorder %s337, %s353
      %p355 = scmp.eq.s32.totalorder %s28, 0
      %p356 = por %p354, %p355
      %p357 = scmp.le.s32.totalorder 1, %s22
      %p358 = scmp.lt.s32.totalorder %s22, 5
      %p359 = pnand %p357, %p358
      %p360 = pneg %p359
      // Predicated region
      $region9: #{tpu_custom_call.1} parent=5 // pred_check
        _
      $region10: #{tpu_custom_call.1} parent=5 // pred_check_branch
        %362 = sbr.rel (%p359) target = $region12
      $region11: #{tpu_custom_call.1} parent=5 // pred_region
        %s363 = ssub.s32 %s22, 1
        // Predicated region
        $region13: #{tpu_custom_call.1} parent=11 // pred_check
          %p364 = pneg %p111
        $region14: #{tpu_custom_call.1} parent=11 // pred_check_branch
          %366 = sbr.rel (%p364) target = $region16
        $region15: #{tpu_custom_call.1} parent=11 // pred_region
          _
        $region16: #{tpu_custom_call.1} parent=11 // pred_fallthru
          _
        // Predicated region
        $region17: #{tpu_custom_call.1} parent=11 // pred_check
          %p367 = pneg %p132
        $region18: #{tpu_custom_call.1} parent=11 // pred_check_branch
          %369 = sbr.rel (%p367) target = $region20
        $region19: #{tpu_custom_call.1} parent=11 // pred_region
          _
        $region20: #{tpu_custom_call.1} parent=11 // pred_fallthru
          _
        // Predicated region
        $region21: #{tpu_custom_call.1} parent=11 // pred_check
          %p370 = pneg %p153
        $region22: #{tpu_custom_call.1} parent=11 // pred_check_branch
          %372 = sbr.rel (%p370) target = $region24
        $region23: #{tpu_custom_call.1} parent=11 // pred_region
          _
        $region24: #{tpu_custom_call.1} parent=11 // pred_fallthru
          _
        // Predicated region
        $region25: #{tpu_custom_call.1} parent=11 // pred_check
          %p373 = pneg %p174
        $region26: #{tpu_custom_call.1} parent=11 // pred_check_branch
          %375 = sbr.rel (%p373) target = $region28
        $region27: #{tpu_custom_call.1} parent=11 // pred_region
          _
        $region28: #{tpu_custom_call.1} parent=11 // pred_fallthru
          _
        // Predicated region
        $region29: #{tpu_custom_call.1} parent=11 // pred_check
          %p376 = pneg %p195
        $region30: #{tpu_custom_call.1} parent=11 // pred_check_branch
          %378 = sbr.rel (%p376) target = $region32
        $region31: #{tpu_custom_call.1} parent=11 // pred_region
          _
        $region32: #{tpu_custom_call.1} parent=11 // pred_fallthru
          _
        // Predicated region
        $region33: #{tpu_custom_call.1} parent=11 // pred_check
          %p379 = pneg %p216
        $region34: #{tpu_custom_call.1} parent=11 // pred_check_branch
          %381 = sbr.rel (%p379) target = $region36
        $region35: #{tpu_custom_call.1} parent=11 // pred_region
          _
        $region36: #{tpu_custom_call.1} parent=11 // pred_fallthru
          _
        // Predicated region
        $region37: #{tpu_custom_call.1} parent=11 // pred_check
          %p382 = pneg %p237
        $region38: #{tpu_custom_call.1} parent=11 // pred_check_branch
          %384 = sbr.rel (%p382) target = $region40
        $region39: #{tpu_custom_call.1} parent=11 // pred_region
          _
        $region40: #{tpu_custom_call.1} parent=11 // pred_fallthru
          _
        // Predicated region
        $region41: #{tpu_custom_call.1} parent=11 // pred_check
          %p385 = pneg %p258
        $region42: #{tpu_custom_call.1} parent=11 // pred_check_branch
          %387 = sbr.rel (%p385) target = $region44
        $region43: #{tpu_custom_call.1} parent=11 // pred_region
          _
        $region44: #{tpu_custom_call.1} parent=11 // pred_fallthru
          _
        // Predicated region
        $region45: #{tpu_custom_call.1} parent=11 // pred_check
          %p388 = pneg %p279
        $region46: #{tpu_custom_call.1} parent=11 // pred_check_branch
          %390 = sbr.rel (%p388) target = $region48
        $region47: #{tpu_custom_call.1} parent=11 // pred_region
          _
        $region48: #{tpu_custom_call.1} parent=11 // pred_fallthru
          _
        // Predicated region
        $region49: #{tpu_custom_call.1} parent=11 // pred_check
          %p391 = pneg %p300
        $region50: #{tpu_custom_call.1} parent=11 // pred_check_branch
          %393 = sbr.rel (%p391) target = $region52
        $region51: #{tpu_custom_call.1} parent=11 // pred_region
          _
        $region52: #{tpu_custom_call.1} parent=11 // pred_fallthru
          _
        // Predicated region
        $region53: #{tpu_custom_call.1} parent=11 // pred_check
          %p394 = pneg %p321
        $region54: #{tpu_custom_call.1} parent=11 // pred_check_branch
          %396 = sbr.rel (%p394) target = $region56
        $region55: #{tpu_custom_call.1} parent=11 // pred_region
          _
        $region56: #{tpu_custom_call.1} parent=11 // pred_fallthru
          _
      $region12: #{tpu_custom_call.1} parent=5 // pred_fallthru
        _
      %p397 = scmp.lt.s32.totalorder %s22, 4
      // Predicated region
      $region57: #{tpu_custom_call.1} parent=5 // pred_check
        %p398 = pneg %p397
      $region58: #{tpu_custom_call.1} parent=5 // pred_check_branch
        %400 = sbr.rel (%p398) target = $region60
      $region59: #{tpu_custom_call.1} parent=5 // pred_region
        // Predicated region
        $region61: #{tpu_custom_call.1} parent=59 // pred_check
          %p401 = pneg %p56
        $region62: #{tpu_custom_call.1} parent=59 // pred_check_branch
          %403 = sbr.rel (%p401) target = $region64
        $region63: #{tpu_custom_call.1} parent=59 // pred_region
          %s404 = smul.u32 8, %s30
          %p405 = scmp.lt.s32.totalorder %s29, 1
          %s406 = scalar_select %p405, %s29, 1
          %p407 = scmp.lt.s32.totalorder %s404, 15
          %s408 = scalar_select %p407, %s404, 15
          %s409 = smul.addr %s408, 2
          %s410 = smul.addr %s406, 32
          %s411 = sadd.s32 %s409, %s410
          %s412 = smul.addr %s411, 8
          %s413 = scalar_lea.vmem %s0, %s412
          %s414 = smul.u32 8, %s30
        $region64: #{tpu_custom_call.1} parent=59 // pred_fallthru
          _
        // Predicated region
        $region65: #{tpu_custom_call.1} parent=59 // pred_check
          %p415 = pneg %p84
        $region66: #{tpu_custom_call.1} parent=59 // pred_check_branch
          %417 = sbr.rel (%p415) target = $region68
        $region67: #{tpu_custom_call.1} parent=59 // pred_region
          %s418 = smul.u32 2, %s30
          %p419 = scmp.lt.s32.totalorder %s29, 1
          %s420 = scalar_select %p419, %s29, 1
          %p421 = scmp.lt.s32.totalorder %s418, 3
          %s422 = scalar_select %p421, %s418, 3
          %s423 = smul.addr %s422, 2
          %s424 = smul.addr %s420, 8
          %s425 = sadd.s32 %s423, %s424
          %s426 = smul.addr %s425, 8
          %s427 = scalar_lea.vmem %s1, %s426
          %s428 = smul.u32 2, %s30
        $region68: #{tpu_custom_call.1} parent=59 // pred_fallthru
          _
      $region60: #{tpu_custom_call.1} parent=5 // pred_fallthru
        _
      %p429 = scmp.le.s32.totalorder 1, %s22
      %p430 = scmp.lt.s32.totalorder %s22, 5
      %p431 = pnand %p429, %p430
      %p432 = pneg %p431
      // Predicated region
      $region69: #{tpu_custom_call.1} parent=5 // pred_check
        _
      $region70: #{tpu_custom_call.1} parent=5 // pred_check_branch
        %434 = sbr.rel (%p431) target = $region72
      $region71: #{tpu_custom_call.1} parent=5 // pred_region
        %s435 = ssub.s32 %s22, 1
        %s436 = smul.u32 8, %s32
        %p437 = scmp.lt.s32.totalorder %s31, 1
        %s438 = scalar_select %p437, %s31, 1
        %p439 = scmp.lt.s32.totalorder %s436, 15
        %s440 = scalar_select %p439, %s436, 15
        %s441 = smul.addr %s440, 2
        %s442 = smul.addr %s438, 32
        %s443 = sadd.s32 %s441, %s442
        %s444 = smul.addr %s443, 8
        %s445 = scalar_lea.vmem %s0, %s444
        %p446 = pneg %p62
        %p447 = pneg %p59
        %s448 = smul.u32 2, %s32
        %p449 = scmp.lt.s32.totalorder %s31, 1
        %s450 = scalar_select %p449, %s31, 1
        %p451 = scmp.lt.s32.totalorder %s448, 3
        %s452 = scalar_select %p451, %s448, 3
        %s453 = smul.addr %s452, 2
        %s454 = smul.addr %s450, 8
        %s455 = sadd.s32 %s453, %s454
        %s456 = smul.addr %s455, 8
        %s457 = scalar_lea.vmem %s1, %s456
        %p458 = pneg %p90
        %p459 = pneg %p87
        %p460 = pneg %p111
        %p461 = pneg %p108
        %p462 = pneg %p132
        %p463 = pneg %p129
        %p464 = pneg %p153
        %p465 = pneg %p150
        %p466 = pneg %p174
        %p467 = pneg %p171
        %p468 = pneg %p195
        %p469 = pneg %p192
        %p470 = pneg %p216
        %p471 = pneg %p213
        %p472 = pneg %p237
        %p473 = pneg %p234
        %p474 = pneg %p258
        %p475 = pneg %p255
        %p476 = pneg %p279
        %p477 = pneg %p276
        %p478 = pneg %p300
        %p479 = pneg %p297
        %p480 = pneg %p321
        %p481 = pneg %p318
        %p482 = pneg %p349
        %p483 = pneg %p346
        %s484 = sand.u32 %s336, 1
        %s485 = scalar_lea.sflag [#allocation4], %s484
        %s486 = sand.u32 %s336, 1
        %s487 = smul.addr %s486, 128
        %s488 = scalar_lea.vmem [#allocation3], %s487
        %s489 = smul.u32 8, %s32
        %p490 = scmp.lt.s32.totalorder %s31, 1
        %s491 = scalar_select %p490, %s31, 1
        %p492 = scmp.lt.s32.totalorder %s489, 15
        %s493 = scalar_select %p492, %s489, 15
        %s494 = smul.addr %s493, 2
        %s495 = smul.addr %s491, 32
        %s496 = sadd.s32 %s494, %s495
        %s497 = smul.addr %s496, 8
        %s498 = scalar_lea.vmem %s0, %s497
        %s499 = smul.u32 8, %s32
        %s500 = smul.u32 2, %s32
        %p501 = scmp.lt.s32.totalorder %s31, 1
        %s502 = scalar_select %p501, %s31, 1
        %p503 = scmp.lt.s32.totalorder %s500, 3
        %s504 = scalar_select %p503, %s500, 3
        %s505 = smul.addr %s504, 2
        %s506 = smul.addr %s502, 8
        %s507 = sadd.s32 %s505, %s506
        %s508 = smul.addr %s507, 8
        %s509 = scalar_lea.vmem %s1, %s508
        %s510 = smul.u32 2, %s32
        %s511 = smul.u32 8, %s32
        %v512 = vld [vmem:[%s498] sm:$0xff]
        %v513 = vld [vmem:[%s498 + $0x8] sm:$0xff]
        %v514 = vld [vmem:[%s498 + $0x10] sm:$0xff]
        %v515 = vld [vmem:[%s498 + $0x18] sm:$0xff]
        %v516 = vld [vmem:[%s498 + $0x20] sm:$0xff]
        %v517 = vld [vmem:[%s498 + $0x28] sm:$0xff]
        %v518 = vld [vmem:[%s498 + $0x30] sm:$0xff]
        %v519 = vld [vmem:[%s498 + $0x38] sm:$0xff]
        %v520 = vld [vmem:[%s498 + $0x40] sm:$0xff]
        %v521 = vld [vmem:[%s498 + $0x48] sm:$0xff]
        %v522 = vld [vmem:[%s498 + $0x50] sm:$0xff]
        %v523 = vld [vmem:[%s498 + $0x58] sm:$0xff]
        %v524 = vld [vmem:[%s498 + $0x60] sm:$0xff]
        %v525 = vld [vmem:[%s498 + $0x68] sm:$0xff]
        %v526 = vld [vmem:[%s498 + $0x70] sm:$0xff]
        %v527 = vld [vmem:[%s498 + $0x78] sm:$0xff]
        %v528 = vld [vmem:[%s2] sm:$0xff]
        %v529 = vld [vmem:[%s3] sm:$0x1]
        %v531 = vperm.slane %v529, 0
        %vm533 = vcmask 64512
        %v535 = vsel %vm533, %v512, 0
        %v538 = vsel %vm533, %v513, 0
        %v541 = vsel %vm533, %v514, 0
        %v544 = vsel %vm533, %v515, 0
        %v547 = vsel %vm533, %v516, 0
        %v550 = vsel %vm533, %v517, 0
        %v553 = vsel %vm533, %v518, 0
        %v556 = vsel %vm533, %v519, 0
        %v559 = vsel %vm533, %v520, 0
        %v562 = vsel %vm533, %v521, 0
        %v565 = vsel %vm533, %v522, 0
        %v568 = vsel %vm533, %v523, 0
        %v571 = vsel %vm533, %v524, 0
        %v574 = vsel %vm533, %v525, 0
        %v577 = vsel %vm533, %v526, 0
        %v580 = vsel %vm533, %v527, 0
        %582 = vmatpush.msra.mxu0 0.0
        %583 = vmatpush.msra.mxu0 0.0
        %584 = vmatpush.msra.mxu0 0.0
        %585 = vmatpush.msra.mxu0 0.0
        %586 = vmatpush.msra.mxu0 0.0
        %587 = vmatpush.msra.mxu0 0.0
        %588 = vmatpush.msra.mxu0 0.0
        %589 = vmatpush.msra.mxu0 0.0
        %590 = vmatpush.msra.mxu0 0.0
        %591 = vmatpush.msra.mxu0 0.0
        %592 = vmatpush.msra.mxu0 0.0
        %593 = vmatpush.msra.mxu0 0.0
        %594 = vmatpush.msra.mxu0 0.0
        %595 = vmatpush.msra.mxu0 0.0
        %596 = vmatpush.msra.mxu0 0.0
        %597 = vmatpush.msra.mxu0 %v528
        %598 = vmatmul.f32.gmra.mxu0 %v535
        %v599 = vpop.f32.mrf.mxu0
        %v600 = vadd.f32 %v531, %v599
        %601 = vmatmul.f32.gmra.mxu0 %v538
        %v602 = vpop.f32.mrf.mxu0
        %v603 = vadd.f32 %v531, %v602
        %604 = vmatmul.f32.gmra.mxu0 %v541
        %v605 = vpop.f32.mrf.mxu0
        %v606 = vadd.f32 %v531, %v605
        %607 = vmatmul.f32.gmra.mxu0 %v544
        %v608 = vpop.f32.mrf.mxu0
        %v609 = vadd.f32 %v531, %v608
        %610 = vmatmul.f32.gmra.mxu0 %v547
        %v611 = vpop.f32.mrf.mxu0
        %v612 = vadd.f32 %v531, %v611
        %613 = vmatmul.f32.gmra.mxu0 %v550
        %v614 = vpop.f32.mrf.mxu0
        %v615 = vadd.f32 %v531, %v614
        %616 = vmatmul.f32.gmra.mxu0 %v553
        %v617 = vpop.f32.mrf.mxu0
        %v618 = vadd.f32 %v531, %v617
        %619 = vmatmul.f32.gmra.mxu0 %v556
        %v620 = vpop.f32.mrf.mxu0
        %v621 = vadd.f32 %v531, %v620
        %622 = vmatmul.f32.gmra.mxu0 %v559
        %v623 = vpop.f32.mrf.mxu0
        %v624 = vadd.f32 %v531, %v623
        %625 = vmatmul.f32.gmra.mxu0 %v562
        %v626 = vpop.f32.mrf.mxu0
        %v627 = vadd.f32 %v531, %v626
        %628 = vmatmul.f32.gmra.mxu0 %v565
        %v629 = vpop.f32.mrf.mxu0
        %v630 = vadd.f32 %v531, %v629
        %631 = vmatmul.f32.gmra.mxu0 %v568
        %v632 = vpop.f32.mrf.mxu0
        %v633 = vadd.f32 %v531, %v632
        %634 = vmatmul.f32.gmra.mxu0 %v571
        %v635 = vpop.f32.mrf.mxu0
        %v636 = vadd.f32 %v531, %v635
        %637 = vmatmul.f32.gmra.mxu0 %v574
        %v638 = vpop.f32.mrf.mxu0
        %v639 = vadd.f32 %v531, %v638
        %640 = vmatmul.f32.gmra.mxu0 %v577
        %v641 = vpop.f32.mrf.mxu0
        %v642 = vadd.f32 %v531, %v641
        %643 = vmatmul.f32.gmra.mxu0 %v580
        %v644 = vpop.f32.mrf.mxu0
        %v645 = vadd.f32 %v531, %v644
        %646 = vdwg.mxu0
        %v647 = vxor.u32 %v600, 2147483648
        %v648 = vxor.u32 %v603, 2147483648
        %v649 = vxor.u32 %v606, 2147483648
        %v650 = vxor.u32 %v609, 2147483648
        %v651 = vxor.u32 %v612, 2147483648
        %v652 = vxor.u32 %v615, 2147483648
        %v653 = vxor.u32 %v618, 2147483648
        %v654 = vxor.u32 %v621, 2147483648
        %v655 = vxor.u32 %v624, 2147483648
        %v656 = vxor.u32 %v627, 2147483648
        %v657 = vxor.u32 %v630, 2147483648
        %v658 = vxor.u32 %v633, 2147483648
        %v659 = vxor.u32 %v636, 2147483648
        %v660 = vxor.u32 %v639, 2147483648
        %v661 = vxor.u32 %v642, 2147483648
        %v662 = vxor.u32 %v645, 2147483648
        %v663 = vmul.f32 %v647, 1.442695
        %v664 = vpow.pop %v663
        %v665 = vmul.f32 %v648, 1.442695
        %v666 = vpow.pop %v665
        %v667 = vmul.f32 %v649, 1.442695
        %v668 = vpow.pop %v667
        %v669 = vmul.f32 %v650, 1.442695
        %v670 = vpow.pop %v669
        %v671 = vmul.f32 %v651, 1.442695
        %v672 = vpow.pop %v671
        %v673 = vmul.f32 %v652, 1.442695
        %v674 = vpow.pop %v673
        %v675 = vmul.f32 %v653, 1.442695
        %v676 = vpow.pop %v675
        %v677 = vmul.f32 %v654, 1.442695
        %v678 = vpow.pop %v677
        %v679 = vmul.f32 %v655, 1.442695
        %v680 = vpow.pop %v679
        %v681 = vmul.f32 %v656, 1.442695
        %v682 = vpow.pop %v681
        %v683 = vmul.f32 %v657, 1.442695
        %v684 = vpow.pop %v683
        %v685 = vmul.f32 %v658, 1.442695
        %v686 = vpow.pop %v685
        %v687 = vmul.f32 %v659, 1.442695
        %v688 = vpow.pop %v687
        %v689 = vmul.f32 %v660, 1.442695
        %v690 = vpow.pop %v689
        %v691 = vmul.f32 %v661, 1.442695
        %v692 = vpow.pop %v691
        %v693 = vmul.f32 %v662, 1.442695
        %v694 = vpow.pop %v693
        %v695 = vadd.f32 %v664, 1.0
        %v696 = vadd.f32 %v666, 1.0
        %v697 = vadd.f32 %v668, 1.0
        %v698 = vadd.f32 %v670, 1.0
        %v699 = vadd.f32 %v672, 1.0
        %v700 = vadd.f32 %v674, 1.0
        %v701 = vadd.f32 %v676, 1.0
        %v702 = vadd.f32 %v678, 1.0
        %v703 = vadd.f32 %v680, 1.0
        %v704 = vadd.f32 %v682, 1.0
        %v705 = vadd.f32 %v684, 1.0
        %v706 = vadd.f32 %v686, 1.0
        %v707 = vadd.f32 %v688, 1.0
        %v708 = vadd.f32 %v690, 1.0
        %v709 = vadd.f32 %v692, 1.0
        %v710 = vadd.f32 %v694, 1.0
        %v711 = vrcp.pop %v695
        %v712 = vmul.f32 %v695, %v711
        %v713 = vsub.f32 1.0, %v712
        %v714 = vmul.f32 %v711, %v713
        %v715 = vadd.f32 %v711, %v714
        %vm716 = vweird.f32 %v695
        %vm717 = vweird.f32 %v711
        %vm718 = vmor %vm716, %vm717
        %v719 = vsel %vm718, %v711, %v715
        %v720 = vand.u32 2147483647, %v695
        %vm721 = vcmp.eq.f32.partialorder %v720, 8.507059e+37
        %v722 = vand.u32 %v695, 2147483648
        %v723 = vor.u32 1.1754944e-38, %v722
        %v724 = vsel %vm721, %v723, %v719
        %v725 = vmul.f32 1.0, %v724
        %v726 = vrcp.pop %v696
        %v727 = vmul.f32 %v696, %v726
        %v728 = vsub.f32 1.0, %v727
        %v729 = vmul.f32 %v726, %v728
        %v730 = vadd.f32 %v726, %v729
        %vm731 = vweird.f32 %v696
        %vm732 = vweird.f32 %v726
        %vm733 = vmor %vm731, %vm732
        %v734 = vsel %vm733, %v726, %v730
        %v735 = vand.u32 2147483647, %v696
        %vm736 = vcmp.eq.f32.partialorder %v735, 8.507059e+37
        %v737 = vand.u32 %v696, 2147483648
        %v738 = vor.u32 1.1754944e-38, %v737
        %v739 = vsel %vm736, %v738, %v734
        %v740 = vmul.f32 1.0, %v739
        %v741 = vrcp.pop %v697
        %v742 = vmul.f32 %v697, %v741
        %v743 = vsub.f32 1.0, %v742
        %v744 = vmul.f32 %v741, %v743
        %v745 = vadd.f32 %v741, %v744
        %vm746 = vweird.f32 %v697
        %vm747 = vweird.f32 %v741
        %vm748 = vmor %vm746, %vm747
        %v749 = vsel %vm748, %v741, %v745
        %v750 = vand.u32 2147483647, %v697
        %vm751 = vcmp.eq.f32.partialorder %v750, 8.507059e+37
        %v752 = vand.u32 %v697, 2147483648
        %v753 = vor.u32 1.1754944e-38, %v752
        %v754 = vsel %vm751, %v753, %v749
        %v755 = vmul.f32 1.0, %v754
        %v756 = vrcp.pop %v698
        %v757 = vmul.f32 %v698, %v756
        %v758 = vsub.f32 1.0, %v757
        %v759 = vmul.f32 %v756, %v758
        %v760 = vadd.f32 %v756, %v759
        %vm761 = vweird.f32 %v698
        %vm762 = vweird.f32 %v756
        %vm763 = vmor %vm761, %vm762
        %v764 = vsel %vm763, %v756, %v760
        %v765 = vand.u32 2147483647, %v698
        %vm766 = vcmp.eq.f32.partialorder %v765, 8.507059e+37
        %v767 = vand.u32 %v698, 2147483648
        %v768 = vor.u32 1.1754944e-38, %v767
        %v769 = vsel %vm766, %v768, %v764
        %v770 = vmul.f32 1.0, %v769
        %v771 = vrcp.pop %v699
        %v772 = vmul.f32 %v699, %v771
        %v773 = vsub.f32 1.0, %v772
        %v774 = vmul.f32 %v771, %v773
        %v775 = vadd.f32 %v771, %v774
        %vm776 = vweird.f32 %v699
        %vm777 = vweird.f32 %v771
        %vm778 = vmor %vm776, %vm777
        %v779 = vsel %vm778, %v771, %v775
        %v780 = vand.u32 2147483647, %v699
        %vm781 = vcmp.eq.f32.partialorder %v780, 8.507059e+37
        %v782 = vand.u32 %v699, 2147483648
        %v783 = vor.u32 1.1754944e-38, %v782
        %v784 = vsel %vm781, %v783, %v779
        %v785 = vmul.f32 1.0, %v784
        %v786 = vrcp.pop %v700
        %v787 = vmul.f32 %v700, %v786
        %v788 = vsub.f32 1.0, %v787
        %v789 = vmul.f32 %v786, %v788
        %v790 = vadd.f32 %v786, %v789
        %vm791 = vweird.f32 %v700
        %vm792 = vweird.f32 %v786
        %vm793 = vmor %vm791, %vm792
        %v794 = vsel %vm793, %v786, %v790
        %v795 = vand.u32 2147483647, %v700
        %vm796 = vcmp.eq.f32.partialorder %v795, 8.507059e+37
        %v797 = vand.u32 %v700, 2147483648
        %v798 = vor.u32 1.1754944e-38, %v797
        %v799 = vsel %vm796, %v798, %v794
        %v800 = vmul.f32 1.0, %v799
        %v801 = vrcp.pop %v701
        %v802 = vmul.f32 %v701, %v801
        %v803 = vsub.f32 1.0, %v802
        %v804 = vmul.f32 %v801, %v803
        %v805 = vadd.f32 %v801, %v804
        %vm806 = vweird.f32 %v701
        %vm807 = vweird.f32 %v801
        %vm808 = vmor %vm806, %vm807
        %v809 = vsel %vm808, %v801, %v805
        %v810 = vand.u32 2147483647, %v701
        %vm811 = vcmp.eq.f32.partialorder %v810, 8.507059e+37
        %v812 = vand.u32 %v701, 2147483648
        %v813 = vor.u32 1.1754944e-38, %v812
        %v814 = vsel %vm811, %v813, %v809
        %v815 = vmul.f32 1.0, %v814
        %v816 = vrcp.pop %v702
        %v817 = vmul.f32 %v702, %v816
        %v818 = vsub.f32 1.0, %v817
        %v819 = vmul.f32 %v816, %v818
        %v820 = vadd.f32 %v816, %v819
        %vm821 = vweird.f32 %v702
        %vm822 = vweird.f32 %v816
        %vm823 = vmor %vm821, %vm822
        %v824 = vsel %vm823, %v816, %v820
        %v825 = vand.u32 2147483647, %v702
        %vm826 = vcmp.eq.f32.partialorder %v825, 8.507059e+37
        %v827 = vand.u32 %v702, 2147483648
        %v828 = vor.u32 1.1754944e-38, %v827
        %v829 = vsel %vm826, %v828, %v824
        %v830 = vmul.f32 1.0, %v829
        %v831 = vrcp.pop %v703
        %v832 = vmul.f32 %v703, %v831
        %v833 = vsub.f32 1.0, %v832
        %v834 = vmul.f32 %v831, %v833
        %v835 = vadd.f32 %v831, %v834
        %vm836 = vweird.f32 %v703
        %vm837 = vweird.f32 %v831
        %vm838 = vmor %vm836, %vm837
        %v839 = vsel %vm838, %v831, %v835
        %v840 = vand.u32 2147483647, %v703
        %vm841 = vcmp.eq.f32.partialorder %v840, 8.507059e+37
        %v842 = vand.u32 %v703, 2147483648
        %v843 = vor.u32 1.1754944e-38, %v842
        %v844 = vsel %vm841, %v843, %v839
        %v845 = vmul.f32 1.0, %v844
        %v846 = vrcp.pop %v704
        %v847 = vmul.f32 %v704, %v846
        %v848 = vsub.f32 1.0, %v847
        %v849 = vmul.f32 %v846, %v848
        %v850 = vadd.f32 %v846, %v849
        %vm851 = vweird.f32 %v704
        %vm852 = vweird.f32 %v846
        %vm853 = vmor %vm851, %vm852
        %v854 = vsel %vm853, %v846, %v850
        %v855 = vand.u32 2147483647, %v704
        %vm856 = vcmp.eq.f32.partialorder %v855, 8.507059e+37
        %v857 = vand.u32 %v704, 2147483648
        %v858 = vor.u32 1.1754944e-38, %v857
        %v859 = vsel %vm856, %v858, %v854
        %v860 = vmul.f32 1.0, %v859
        %v861 = vrcp.pop %v705
        %v862 = vmul.f32 %v705, %v861
        %v863 = vsub.f32 1.0, %v862
        %v864 = vmul.f32 %v861, %v863
        %v865 = vadd.f32 %v861, %v864
        %vm866 = vweird.f32 %v705
        %vm867 = vweird.f32 %v861
        %vm868 = vmor %vm866, %vm867
        %v869 = vsel %vm868, %v861, %v865
        %v870 = vand.u32 2147483647, %v705
        %vm871 = vcmp.eq.f32.partialorder %v870, 8.507059e+37
        %v872 = vand.u32 %v705, 2147483648
        %v873 = vor.u32 1.1754944e-38, %v872
        %v874 = vsel %vm871, %v873, %v869
        %v875 = vmul.f32 1.0, %v874
        %v876 = vrcp.pop %v706
        %v877 = vmul.f32 %v706, %v876
        %v878 = vsub.f32 1.0, %v877
        %v879 = vmul.f32 %v876, %v878
        %v880 = vadd.f32 %v876, %v879
        %vm881 = vweird.f32 %v706
        %vm882 = vweird.f32 %v876
        %vm883 = vmor %vm881, %vm882
        %v884 = vsel %vm883, %v876, %v880
        %v885 = vand.u32 2147483647, %v706
        %vm886 = vcmp.eq.f32.partialorder %v885, 8.507059e+37
        %v887 = vand.u32 %v706, 2147483648
        %v888 = vor.u32 1.1754944e-38, %v887
        %v889 = vsel %vm886, %v888, %v884
        %v890 = vmul.f32 1.0, %v889
        %v891 = vrcp.pop %v707
        %v892 = vmul.f32 %v707, %v891
        %v893 = vsub.f32 1.0, %v892
        %v894 = vmul.f32 %v891, %v893
        %v895 = vadd.f32 %v891, %v894
        %vm896 = vweird.f32 %v707
        %vm897 = vweird.f32 %v891
        %vm898 = vmor %vm896, %vm897
        %v899 = vsel %vm898, %v891, %v895
        %v900 = vand.u32 2147483647, %v707
        %vm901 = vcmp.eq.f32.partialorder %v900, 8.507059e+37
        %v902 = vand.u32 %v707, 2147483648
        %v903 = vor.u32 1.1754944e-38, %v902
        %v904 = vsel %vm901, %v903, %v899
        %v905 = vmul.f32 1.0, %v904
        %v906 = vrcp.pop %v708
        %v907 = vmul.f32 %v708, %v906
        %v908 = vsub.f32 1.0, %v907
        %v909 = vmul.f32 %v906, %v908
        %v910 = vadd.f32 %v906, %v909
        %vm911 = vweird.f32 %v708
        %vm912 = vweird.f32 %v906
        %vm913 = vmor %vm911, %vm912
        %v914 = vsel %vm913, %v906, %v910
        %v915 = vand.u32 2147483647, %v708
        %vm916 = vcmp.eq.f32.partialorder %v915, 8.507059e+37
        %v917 = vand.u32 %v708, 2147483648
        %v918 = vor.u32 1.1754944e-38, %v917
        %v919 = vsel %vm916, %v918, %v914
        %v920 = vmul.f32 1.0, %v919
        %v921 = vrcp.pop %v709
        %v922 = vmul.f32 %v709, %v921
        %v923 = vsub.f32 1.0, %v922
        %v924 = vmul.f32 %v921, %v923
        %v925 = vadd.f32 %v921, %v924
        %vm926 = vweird.f32 %v709
        %vm927 = vweird.f32 %v921
        %vm928 = vmor %vm926, %vm927
        %v929 = vsel %vm928, %v921, %v925
        %v930 = vand.u32 2147483647, %v709
        %vm931 = vcmp.eq.f32.partialorder %v930, 8.507059e+37
        %v932 = vand.u32 %v709, 2147483648
        %v933 = vor.u32 1.1754944e-38, %v932
        %v934 = vsel %vm931, %v933, %v929
        %v935 = vmul.f32 1.0, %v934
        %v936 = vrcp.pop %v710
        %v937 = vmul.f32 %v710, %v936
        %v938 = vsub.f32 1.0, %v937
        %v939 = vmul.f32 %v936, %v938
        %v940 = vadd.f32 %v936, %v939
        %vm941 = vweird.f32 %v710
        %vm942 = vweird.f32 %v936
        %vm943 = vmor %vm941, %vm942
        %v944 = vsel %vm943, %v936, %v940
        %v945 = vand.u32 2147483647, %v710
        %vm946 = vcmp.eq.f32.partialorder %v945, 8.507059e+37
        %v947 = vand.u32 %v710, 2147483648
        %v948 = vor.u32 1.1754944e-38, %v947
        %v949 = vsel %vm946, %v948, %v944
        %v950 = vmul.f32 1.0, %v949
        %v951 = vmul.f32 %v600, %v725
        %v952 = vmul.f32 %v603, %v740
        %v953 = vmul.f32 %v606, %v755
        %v954 = vmul.f32 %v609, %v770
        %v955 = vmul.f32 %v612, %v785
        %v956 = vmul.f32 %v615, %v800
        %v957 = vmul.f32 %v618, %v815
        %v958 = vmul.f32 %v621, %v830
        %v959 = vmul.f32 %v624, %v845
        %v960 = vmul.f32 %v627, %v860
        %v961 = vmul.f32 %v630, %v875
        %v962 = vmul.f32 %v633, %v890
        %v963 = vmul.f32 %v636, %v905
        %v964 = vmul.f32 %v639, %v920
        %v965 = vmul.f32 %v642, %v935
        %v966 = vmul.f32 %v645, %v950
        %v967 = vld [vmem:[%s4] sm:$0xff]
        %v968 = vld [vmem:[%s5] sm:$0x1]
        %v970 = vperm.slane %v968, 0
        %972 = vmatpush.msra.mxu0 0.0
        %973 = vmatpush.msra.mxu0 0.0
        %974 = vmatpush.msra.mxu0 0.0
        %975 = vmatpush.msra.mxu0 0.0
        %976 = vmatpush.msra.mxu0 0.0
        %977 = vmatpush.msra.mxu0 0.0
        %978 = vmatpush.msra.mxu0 0.0
        %979 = vmatpush.msra.mxu0 0.0
        %980 = vmatpush.msra.mxu0 0.0
        %981 = vmatpush.msra.mxu0 0.0
        %982 = vmatpush.msra.mxu0 0.0
        %983 = vmatpush.msra.mxu0 0.0
        %984 = vmatpush.msra.mxu0 0.0
        %985 = vmatpush.msra.mxu0 0.0
        %986 = vmatpush.msra.mxu0 0.0
        %987 = vmatpush.msra.mxu0 %v967
        %988 = vmatmul.f32.gmra.mxu0 %v535
        %v989 = vpop.f32.mrf.mxu0
        %v990 = vadd.f32 %v970, %v989
        %991 = vmatmul.f32.gmra.mxu0 %v538
        %v992 = vpop.f32.mrf.mxu0
        %v993 = vadd.f32 %v970, %v992
        %994 = vmatmul.f32.gmra.mxu0 %v541
        %v995 = vpop.f32.mrf.mxu0
        %v996 = vadd.f32 %v970, %v995
        %997 = vmatmul.f32.gmra.mxu0 %v544
        %v998 = vpop.f32.mrf.mxu0
        %v999 = vadd.f32 %v970, %v998
        %1000 = vmatmul.f32.gmra.mxu0 %v547
        %v1001 = vpop.f32.mrf.mxu0
        %v1002 = vadd.f32 %v970, %v1001
        %1003 = vmatmul.f32.gmra.mxu0 %v550
        %v1004 = vpop.f32.mrf.mxu0
        %v1005 = vadd.f32 %v970, %v1004
        %1006 = vmatmul.f32.gmra.mxu0 %v553
        %v1007 = vpop.f32.mrf.mxu0
        %v1008 = vadd.f32 %v970, %v1007
        %1009 = vmatmul.f32.gmra.mxu0 %v556
        %v1010 = vpop.f32.mrf.mxu0
        %v1011 = vadd.f32 %v970, %v1010
        %1012 = vmatmul.f32.gmra.mxu0 %v559
        %v1013 = vpop.f32.mrf.mxu0
        %v1014 = vadd.f32 %v970, %v1013
        %1015 = vmatmul.f32.gmra.mxu0 %v562
        %v1016 = vpop.f32.mrf.mxu0
        %v1017 = vadd.f32 %v970, %v1016
        %1018 = vmatmul.f32.gmra.mxu0 %v565
        %v1019 = vpop.f32.mrf.mxu0
        %v1020 = vadd.f32 %v970, %v1019
        %1021 = vmatmul.f32.gmra.mxu0 %v568
        %v1022 = vpop.f32.mrf.mxu0
        %v1023 = vadd.f32 %v970, %v1022
        %1024 = vmatmul.f32.gmra.mxu0 %v571
        %v1025 = vpop.f32.mrf.mxu0
        %v1026 = vadd.f32 %v970, %v1025
        %1027 = vmatmul.f32.gmra.mxu0 %v574
        %v1028 = vpop.f32.mrf.mxu0
        %v1029 = vadd.f32 %v970, %v1028
        %1030 = vmatmul.f32.gmra.mxu0 %v577
        %v1031 = vpop.f32.mrf.mxu0
        %v1032 = vadd.f32 %v970, %v1031
        %1033 = vmatmul.f32.gmra.mxu0 %v580
        %v1034 = vpop.f32.mrf.mxu0
        %v1035 = vadd.f32 %v970, %v1034
        %1036 = vdwg.mxu0
        %v1037 = vxor.u32 %v990, 2147483648
        %v1038 = vxor.u32 %v993, 2147483648
        %v1039 = vxor.u32 %v996, 2147483648
        %v1040 = vxor.u32 %v999, 2147483648
        %v1041 = vxor.u32 %v1002, 2147483648
        %v1042 = vxor.u32 %v1005, 2147483648
        %v1043 = vxor.u32 %v1008, 2147483648
        %v1044 = vxor.u32 %v1011, 2147483648
        %v1045 = vxor.u32 %v1014, 2147483648
        %v1046 = vxor.u32 %v1017, 2147483648
        %v1047 = vxor.u32 %v1020, 2147483648
        %v1048 = vxor.u32 %v1023, 2147483648
        %v1049 = vxor.u32 %v1026, 2147483648
        %v1050 = vxor.u32 %v1029, 2147483648
        %v1051 = vxor.u32 %v1032, 2147483648
        %v1052 = vxor.u32 %v1035, 2147483648
        %v1053 = vmul.f32 %v1037, 1.442695
        %v1054 = vpow.pop %v1053
        %v1055 = vmul.f32 %v1038, 1.442695
        %v1056 = vpow.pop %v1055
        %v1057 = vmul.f32 %v1039, 1.442695
        %v1058 = vpow.pop %v1057
        %v1059 = vmul.f32 %v1040, 1.442695
        %v1060 = vpow.pop %v1059
        %v1061 = vmul.f32 %v1041, 1.442695
        %v1062 = vpow.pop %v1061
        %v1063 = vmul.f32 %v1042, 1.442695
        %v1064 = vpow.pop %v1063
        %v1065 = vmul.f32 %v1043, 1.442695
        %v1066 = vpow.pop %v1065
        %v1067 = vmul.f32 %v1044, 1.442695
        %v1068 = vpow.pop %v1067
        %v1069 = vmul.f32 %v1045, 1.442695
        %v1070 = vpow.pop %v1069
        %v1071 = vmul.f32 %v1046, 1.442695
        %v1072 = vpow.pop %v1071
        %v1073 = vmul.f32 %v1047, 1.442695
        %v1074 = vpow.pop %v1073
        %v1075 = vmul.f32 %v1048, 1.442695
        %v1076 = vpow.pop %v1075
        %v1077 = vmul.f32 %v1049, 1.442695
        %v1078 = vpow.pop %v1077
        %v1079 = vmul.f32 %v1050, 1.442695
        %v1080 = vpow.pop %v1079
        %v1081 = vmul.f32 %v1051, 1.442695
        %v1082 = vpow.pop %v1081
        %v1083 = vmul.f32 %v1052, 1.442695
        %v1084 = vpow.pop %v1083
        %v1085 = vadd.f32 %v1054, 1.0
        %v1086 = vadd.f32 %v1056, 1.0
        %v1087 = vadd.f32 %v1058, 1.0
        %v1088 = vadd.f32 %v1060, 1.0
        %v1089 = vadd.f32 %v1062, 1.0
        %v1090 = vadd.f32 %v1064, 1.0
        %v1091 = vadd.f32 %v1066, 1.0
        %v1092 = vadd.f32 %v1068, 1.0
        %v1093 = vadd.f32 %v1070, 1.0
        %v1094 = vadd.f32 %v1072, 1.0
        %v1095 = vadd.f32 %v1074, 1.0
        %v1096 = vadd.f32 %v1076, 1.0
        %v1097 = vadd.f32 %v1078, 1.0
        %v1098 = vadd.f32 %v1080, 1.0
        %v1099 = vadd.f32 %v1082, 1.0
        %v1100 = vadd.f32 %v1084, 1.0
        %v1101 = vrcp.pop %v1085
        %v1102 = vmul.f32 %v1085, %v1101
        %v1103 = vsub.f32 1.0, %v1102
        %v1104 = vmul.f32 %v1101, %v1103
        %v1105 = vadd.f32 %v1101, %v1104
        %vm1106 = vweird.f32 %v1085
        %vm1107 = vweird.f32 %v1101
        %vm1108 = vmor %vm1106, %vm1107
        %v1109 = vsel %vm1108, %v1101, %v1105
        %v1110 = vand.u32 2147483647, %v1085
        %vm1111 = vcmp.eq.f32.partialorder %v1110, 8.507059e+37
        %v1112 = vand.u32 %v1085, 2147483648
        %v1113 = vor.u32 1.1754944e-38, %v1112
        %v1114 = vsel %vm1111, %v1113, %v1109
        %v1115 = vmul.f32 1.0, %v1114
        %v1116 = vrcp.pop %v1086
        %v1117 = vmul.f32 %v1086, %v1116
        %v1118 = vsub.f32 1.0, %v1117
        %v1119 = vmul.f32 %v1116, %v1118
        %v1120 = vadd.f32 %v1116, %v1119
        %vm1121 = vweird.f32 %v1086
        %vm1122 = vweird.f32 %v1116
        %vm1123 = vmor %vm1121, %vm1122
        %v1124 = vsel %vm1123, %v1116, %v1120
        %v1125 = vand.u32 2147483647, %v1086
        %vm1126 = vcmp.eq.f32.partialorder %v1125, 8.507059e+37
        %v1127 = vand.u32 %v1086, 2147483648
        %v1128 = vor.u32 1.1754944e-38, %v1127
        %v1129 = vsel %vm1126, %v1128, %v1124
        %v1130 = vmul.f32 1.0, %v1129
        %v1131 = vrcp.pop %v1087
        %v1132 = vmul.f32 %v1087, %v1131
        %v1133 = vsub.f32 1.0, %v1132
        %v1134 = vmul.f32 %v1131, %v1133
        %v1135 = vadd.f32 %v1131, %v1134
        %vm1136 = vweird.f32 %v1087
        %vm1137 = vweird.f32 %v1131
        %vm1138 = vmor %vm1136, %vm1137
        %v1139 = vsel %vm1138, %v1131, %v1135
        %v1140 = vand.u32 2147483647, %v1087
        %vm1141 = vcmp.eq.f32.partialorder %v1140, 8.507059e+37
        %v1142 = vand.u32 %v1087, 2147483648
        %v1143 = vor.u32 1.1754944e-38, %v1142
        %v1144 = vsel %vm1141, %v1143, %v1139
        %v1145 = vmul.f32 1.0, %v1144
        %v1146 = vrcp.pop %v1088
        %v1147 = vmul.f32 %v1088, %v1146
        %v1148 = vsub.f32 1.0, %v1147
        %v1149 = vmul.f32 %v1146, %v1148
        %v1150 = vadd.f32 %v1146, %v1149
        %vm1151 = vweird.f32 %v1088
        %vm1152 = vweird.f32 %v1146
        %vm1153 = vmor %vm1151, %vm1152
        %v1154 = vsel %vm1153, %v1146, %v1150
        %v1155 = vand.u32 2147483647, %v1088
        %vm1156 = vcmp.eq.f32.partialorder %v1155, 8.507059e+37
        %v1157 = vand.u32 %v1088, 2147483648
        %v1158 = vor.u32 1.1754944e-38, %v1157
        %v1159 = vsel %vm1156, %v1158, %v1154
        %v1160 = vmul.f32 1.0, %v1159
        %v1161 = vrcp.pop %v1089
        %v1162 = vmul.f32 %v1089, %v1161
        %v1163 = vsub.f32 1.0, %v1162
        %v1164 = vmul.f32 %v1161, %v1163
        %v1165 = vadd.f32 %v1161, %v1164
        %vm1166 = vweird.f32 %v1089
        %vm1167 = vweird.f32 %v1161
        %vm1168 = vmor %vm1166, %vm1167
        %v1169 = vsel %vm1168, %v1161, %v1165
        %v1170 = vand.u32 2147483647, %v1089
        %vm1171 = vcmp.eq.f32.partialorder %v1170, 8.507059e+37
        %v1172 = vand.u32 %v1089, 2147483648
        %v1173 = vor.u32 1.1754944e-38, %v1172
        %v1174 = vsel %vm1171, %v1173, %v1169
        %v1175 = vmul.f32 1.0, %v1174
        %v1176 = vrcp.pop %v1090
        %v1177 = vmul.f32 %v1090, %v1176
        %v1178 = vsub.f32 1.0, %v1177
        %v1179 = vmul.f32 %v1176, %v1178
        %v1180 = vadd.f32 %v1176, %v1179
        %vm1181 = vweird.f32 %v1090
        %vm1182 = vweird.f32 %v1176
        %vm1183 = vmor %vm1181, %vm1182
        %v1184 = vsel %vm1183, %v1176, %v1180
        %v1185 = vand.u32 2147483647, %v1090
        %vm1186 = vcmp.eq.f32.partialorder %v1185, 8.507059e+37
        %v1187 = vand.u32 %v1090, 2147483648
        %v1188 = vor.u32 1.1754944e-38, %v1187
        %v1189 = vsel %vm1186, %v1188, %v1184
        %v1190 = vmul.f32 1.0, %v1189
        %v1191 = vrcp.pop %v1091
        %v1192 = vmul.f32 %v1091, %v1191
        %v1193 = vsub.f32 1.0, %v1192
        %v1194 = vmul.f32 %v1191, %v1193
        %v1195 = vadd.f32 %v1191, %v1194
        %vm1196 = vweird.f32 %v1091
        %vm1197 = vweird.f32 %v1191
        %vm1198 = vmor %vm1196, %vm1197
        %v1199 = vsel %vm1198, %v1191, %v1195
        %v1200 = vand.u32 2147483647, %v1091
        %vm1201 = vcmp.eq.f32.partialorder %v1200, 8.507059e+37
        %v1202 = vand.u32 %v1091, 2147483648
        %v1203 = vor.u32 1.1754944e-38, %v1202
        %v1204 = vsel %vm1201, %v1203, %v1199
        %v1205 = vmul.f32 1.0, %v1204
        %v1206 = vrcp.pop %v1092
        %v1207 = vmul.f32 %v1092, %v1206
        %v1208 = vsub.f32 1.0, %v1207
        %v1209 = vmul.f32 %v1206, %v1208
        %v1210 = vadd.f32 %v1206, %v1209
        %vm1211 = vweird.f32 %v1092
        %vm1212 = vweird.f32 %v1206
        %vm1213 = vmor %vm1211, %vm1212
        %v1214 = vsel %vm1213, %v1206, %v1210
        %v1215 = vand.u32 2147483647, %v1092
        %vm1216 = vcmp.eq.f32.partialorder %v1215, 8.507059e+37
        %v1217 = vand.u32 %v1092, 2147483648
        %v1218 = vor.u32 1.1754944e-38, %v1217
        %v1219 = vsel %vm1216, %v1218, %v1214
        %v1220 = vmul.f32 1.0, %v1219
        %v1221 = vrcp.pop %v1093
        %v1222 = vmul.f32 %v1093, %v1221
        %v1223 = vsub.f32 1.0, %v1222
        %v1224 = vmul.f32 %v1221, %v1223
        %v1225 = vadd.f32 %v1221, %v1224
        %vm1226 = vweird.f32 %v1093
        %vm1227 = vweird.f32 %v1221
        %vm1228 = vmor %vm1226, %vm1227
        %v1229 = vsel %vm1228, %v1221, %v1225
        %v1230 = vand.u32 2147483647, %v1093
        %vm1231 = vcmp.eq.f32.partialorder %v1230, 8.507059e+37
        %v1232 = vand.u32 %v1093, 2147483648
        %v1233 = vor.u32 1.1754944e-38, %v1232
        %v1234 = vsel %vm1231, %v1233, %v1229
        %v1235 = vmul.f32 1.0, %v1234
        %v1236 = vrcp.pop %v1094
        %v1237 = vmul.f32 %v1094, %v1236
        %v1238 = vsub.f32 1.0, %v1237
        %v1239 = vmul.f32 %v1236, %v1238
        %v1240 = vadd.f32 %v1236, %v1239
        %vm1241 = vweird.f32 %v1094
        %vm1242 = vweird.f32 %v1236
        %vm1243 = vmor %vm1241, %vm1242
        %v1244 = vsel %vm1243, %v1236, %v1240
        %v1245 = vand.u32 2147483647, %v1094
        %vm1246 = vcmp.eq.f32.partialorder %v1245, 8.507059e+37
        %v1247 = vand.u32 %v1094, 2147483648
        %v1248 = vor.u32 1.1754944e-38, %v1247
        %v1249 = vsel %vm1246, %v1248, %v1244
        %v1250 = vmul.f32 1.0, %v1249
        %v1251 = vrcp.pop %v1095
        %v1252 = vmul.f32 %v1095, %v1251
        %v1253 = vsub.f32 1.0, %v1252
        %v1254 = vmul.f32 %v1251, %v1253
        %v1255 = vadd.f32 %v1251, %v1254
        %vm1256 = vweird.f32 %v1095
        %vm1257 = vweird.f32 %v1251
        %vm1258 = vmor %vm1256, %vm1257
        %v1259 = vsel %vm1258, %v1251, %v1255
        %v1260 = vand.u32 2147483647, %v1095
        %vm1261 = vcmp.eq.f32.partialorder %v1260, 8.507059e+37
        %v1262 = vand.u32 %v1095, 2147483648
        %v1263 = vor.u32 1.1754944e-38, %v1262
        %v1264 = vsel %vm1261, %v1263, %v1259
        %v1265 = vmul.f32 1.0, %v1264
        %v1266 = vrcp.pop %v1096
        %v1267 = vmul.f32 %v1096, %v1266
        %v1268 = vsub.f32 1.0, %v1267
        %v1269 = vmul.f32 %v1266, %v1268
        %v1270 = vadd.f32 %v1266, %v1269
        %vm1271 = vweird.f32 %v1096
        %vm1272 = vweird.f32 %v1266
        %vm1273 = vmor %vm1271, %vm1272
        %v1274 = vsel %vm1273, %v1266, %v1270
        %v1275 = vand.u32 2147483647, %v1096
        %vm1276 = vcmp.eq.f32.partialorder %v1275, 8.507059e+37
        %v1277 = vand.u32 %v1096, 2147483648
        %v1278 = vor.u32 1.1754944e-38, %v1277
        %v1279 = vsel %vm1276, %v1278, %v1274
        %v1280 = vmul.f32 1.0, %v1279
        %v1281 = vrcp.pop %v1097
        %v1282 = vmul.f32 %v1097, %v1281
        %v1283 = vsub.f32 1.0, %v1282
        %v1284 = vmul.f32 %v1281, %v1283
        %v1285 = vadd.f32 %v1281, %v1284
        %vm1286 = vweird.f32 %v1097
        %vm1287 = vweird.f32 %v1281
        %vm1288 = vmor %vm1286, %vm1287
        %v1289 = vsel %vm1288, %v1281, %v1285
        %v1290 = vand.u32 2147483647, %v1097
        %vm1291 = vcmp.eq.f32.partialorder %v1290, 8.507059e+37
        %v1292 = vand.u32 %v1097, 2147483648
        %v1293 = vor.u32 1.1754944e-38, %v1292
        %v1294 = vsel %vm1291, %v1293, %v1289
        %v1295 = vmul.f32 1.0, %v1294
        %v1296 = vrcp.pop %v1098
        %v1297 = vmul.f32 %v1098, %v1296
        %v1298 = vsub.f32 1.0, %v1297
        %v1299 = vmul.f32 %v1296, %v1298
        %v1300 = vadd.f32 %v1296, %v1299
        %vm1301 = vweird.f32 %v1098
        %vm1302 = vweird.f32 %v1296
        %vm1303 = vmor %vm1301, %vm1302
        %v1304 = vsel %vm1303, %v1296, %v1300
        %v1305 = vand.u32 2147483647, %v1098
        %vm1306 = vcmp.eq.f32.partialorder %v1305, 8.507059e+37
        %v1307 = vand.u32 %v1098, 2147483648
        %v1308 = vor.u32 1.1754944e-38, %v1307
        %v1309 = vsel %vm1306, %v1308, %v1304
        %v1310 = vmul.f32 1.0, %v1309
        %v1311 = vrcp.pop %v1099
        %v1312 = vmul.f32 %v1099, %v1311
        %v1313 = vsub.f32 1.0, %v1312
        %v1314 = vmul.f32 %v1311, %v1313
        %v1315 = vadd.f32 %v1311, %v1314
        %vm1316 = vweird.f32 %v1099
        %vm1317 = vweird.f32 %v1311
        %vm1318 = vmor %vm1316, %vm1317
        %v1319 = vsel %vm1318, %v1311, %v1315
        %v1320 = vand.u32 2147483647, %v1099
        %vm1321 = vcmp.eq.f32.partialorder %v1320, 8.507059e+37
        %v1322 = vand.u32 %v1099, 2147483648
        %v1323 = vor.u32 1.1754944e-38, %v1322
        %v1324 = vsel %vm1321, %v1323, %v1319
        %v1325 = vmul.f32 1.0, %v1324
        %v1326 = vrcp.pop %v1100
        %v1327 = vmul.f32 %v1100, %v1326
        %v1328 = vsub.f32 1.0, %v1327
        %v1329 = vmul.f32 %v1326, %v1328
        %v1330 = vadd.f32 %v1326, %v1329
        %vm1331 = vweird.f32 %v1100
        %vm1332 = vweird.f32 %v1326
        %vm1333 = vmor %vm1331, %vm1332
        %v1334 = vsel %vm1333, %v1326, %v1330
        %v1335 = vand.u32 2147483647, %v1100
        %vm1336 = vcmp.eq.f32.partialorder %v1335, 8.507059e+37
        %v1337 = vand.u32 %v1100, 2147483648
        %v1338 = vor.u32 1.1754944e-38, %v1337
        %v1339 = vsel %vm1336, %v1338, %v1334
        %v1340 = vmul.f32 1.0, %v1339
        %v1341 = vmul.f32 %v990, %v1115
        %v1342 = vmul.f32 %v993, %v1130
        %v1343 = vmul.f32 %v996, %v1145
        %v1344 = vmul.f32 %v999, %v1160
        %v1345 = vmul.f32 %v1002, %v1175
        %v1346 = vmul.f32 %v1005, %v1190
        %v1347 = vmul.f32 %v1008, %v1205
        %v1348 = vmul.f32 %v1011, %v1220
        %v1349 = vmul.f32 %v1014, %v1235
        %v1350 = vmul.f32 %v1017, %v1250
        %v1351 = vmul.f32 %v1020, %v1265
        %v1352 = vmul.f32 %v1023, %v1280
        %v1353 = vmul.f32 %v1026, %v1295
        %v1354 = vmul.f32 %v1029, %v1310
        %v1355 = vmul.f32 %v1032, %v1325
        %v1356 = vmul.f32 %v1035, %v1340
        %v1357 = vld [vmem:[%s6] sm:$0xf]
        %v1358 = vld [vmem:[%s7] sm:$0x1]
        %v1360 = vperm.slane %v1358, 0
        %vm1362 = vcmask 31744
        %v1364 = vsel %vm1362, %v951, 0
        %v1367 = vsel %vm1362, %v952, 0
        %v1370 = vsel %vm1362, %v953, 0
        %v1373 = vsel %vm1362, %v954, 0
        %v1376 = vsel %vm1362, %v955, 0
        %v1379 = vsel %vm1362, %v956, 0
        %v1382 = vsel %vm1362, %v957, 0
        %v1385 = vsel %vm1362, %v958, 0
        %v1388 = vsel %vm1362, %v959, 0
        %v1391 = vsel %vm1362, %v960, 0
        %v1394 = vsel %vm1362, %v961, 0
        %v1397 = vsel %vm1362, %v962, 0
        %v1400 = vsel %vm1362, %v963, 0
        %v1403 = vsel %vm1362, %v964, 0
        %v1406 = vsel %vm1362, %v965, 0
        %v1409 = vsel %vm1362, %v966, 0
        %vm1411 = vcmask 1043456
        %v1413 = vsel %vm1411, %v1357, 0
        %1415 = vmatpush.msra.mxu0 0.0
        %1416 = vmatpush.msra.mxu0 0.0
        %1417 = vmatpush.msra.mxu0 0.0
        %1418 = vmatpush.msra.mxu0 0.0
        %1419 = vmatpush.msra.mxu0 0.0
        %1420 = vmatpush.msra.mxu0 0.0
        %1421 = vmatpush.msra.mxu0 0.0
        %1422 = vmatpush.msra.mxu0 0.0
        %1423 = vmatpush.msra.mxu0 0.0
        %1424 = vmatpush.msra.mxu0 0.0
        %1425 = vmatpush.msra.mxu0 0.0
        %1426 = vmatpush.msra.mxu0 0.0
        %1427 = vmatpush.msra.mxu0 0.0
        %1428 = vmatpush.msra.mxu0 0.0
        %1429 = vmatpush.msra.mxu0 0.0
        %1430 = vmatpush.msra.mxu0 %v1413
        %1431 = vmatmul.f32.gmra.mxu0 %v1364
        %v1432 = vpop.f32.mrf.mxu0
        %v1433 = vadd.f32 %v1360, %v1432
        %1434 = vmatmul.f32.gmra.mxu0 %v1367
        %v1435 = vpop.f32.mrf.mxu0
        %v1436 = vadd.f32 %v1360, %v1435
        %1437 = vmatmul.f32.gmra.mxu0 %v1370
        %v1438 = vpop.f32.mrf.mxu0
        %v1439 = vadd.f32 %v1360, %v1438
        %1440 = vmatmul.f32.gmra.mxu0 %v1373
        %v1441 = vpop.f32.mrf.mxu0
        %v1442 = vadd.f32 %v1360, %v1441
        %1443 = vmatmul.f32.gmra.mxu0 %v1376
        %v1444 = vpop.f32.mrf.mxu0
        %v1445 = vadd.f32 %v1360, %v1444
        %1446 = vmatmul.f32.gmra.mxu0 %v1379
        %v1447 = vpop.f32.mrf.mxu0
        %v1448 = vadd.f32 %v1360, %v1447
        %1449 = vmatmul.f32.gmra.mxu0 %v1382
        %v1450 = vpop.f32.mrf.mxu0
        %v1451 = vadd.f32 %v1360, %v1450
        %1452 = vmatmul.f32.gmra.mxu0 %v1385
        %v1453 = vpop.f32.mrf.mxu0
        %v1454 = vadd.f32 %v1360, %v1453
        %1455 = vmatmul.f32.gmra.mxu0 %v1388
        %v1456 = vpop.f32.mrf.mxu0
        %v1457 = vadd.f32 %v1360, %v1456
        %1458 = vmatmul.f32.gmra.mxu0 %v1391
        %v1459 = vpop.f32.mrf.mxu0
        %v1460 = vadd.f32 %v1360, %v1459
        %1461 = vmatmul.f32.gmra.mxu0 %v1394
        %v1462 = vpop.f32.mrf.mxu0
        %v1463 = vadd.f32 %v1360, %v1462
        %1464 = vmatmul.f32.gmra.mxu0 %v1397
        %v1465 = vpop.f32.mrf.mxu0
        %v1466 = vadd.f32 %v1360, %v1465
        %1467 = vmatmul.f32.gmra.mxu0 %v1400
        %v1468 = vpop.f32.mrf.mxu0
        %v1469 = vadd.f32 %v1360, %v1468
        %1470 = vmatmul.f32.gmra.mxu0 %v1403
        %v1471 = vpop.f32.mrf.mxu0
        %v1472 = vadd.f32 %v1360, %v1471
        %1473 = vmatmul.f32.gmra.mxu0 %v1406
        %v1474 = vpop.f32.mrf.mxu0
        %v1475 = vadd.f32 %v1360, %v1474
        %1476 = vmatmul.f32.gmra.mxu0 %v1409
        %v1477 = vpop.f32.mrf.mxu0
        %v1478 = vadd.f32 %v1360, %v1477
        %1479 = vdwg.mxu0
        %v1480 = vxor.u32 %v1433, 2147483648
        %v1481 = vxor.u32 %v1436, 2147483648
        %v1482 = vxor.u32 %v1439, 2147483648
        %v1483 = vxor.u32 %v1442, 2147483648
        %v1484 = vxor.u32 %v1445, 2147483648
        %v1485 = vxor.u32 %v1448, 2147483648
        %v1486 = vxor.u32 %v1451, 2147483648
        %v1487 = vxor.u32 %v1454, 2147483648
        %v1488 = vxor.u32 %v1457, 2147483648
        %v1489 = vxor.u32 %v1460, 2147483648
        %v1490 = vxor.u32 %v1463, 2147483648
        %v1491 = vxor.u32 %v1466, 2147483648
        %v1492 = vxor.u32 %v1469, 2147483648
        %v1493 = vxor.u32 %v1472, 2147483648
        %v1494 = vxor.u32 %v1475, 2147483648
        %v1495 = vxor.u32 %v1478, 2147483648
        %v1496 = vmul.f32 %v1480, 1.442695
        %v1497 = vpow.pop %v1496
        %v1498 = vmul.f32 %v1481, 1.442695
        %v1499 = vpow.pop %v1498
        %v1500 = vmul.f32 %v1482, 1.442695
        %v1501 = vpow.pop %v1500
        %v1502 = vmul.f32 %v1483, 1.442695
        %v1503 = vpow.pop %v1502
        %v1504 = vmul.f32 %v1484, 1.442695
        %v1505 = vpow.pop %v1504
        %v1506 = vmul.f32 %v1485, 1.442695
        %v1507 = vpow.pop %v1506
        %v1508 = vmul.f32 %v1486, 1.442695
        %v1509 = vpow.pop %v1508
        %v1510 = vmul.f32 %v1487, 1.442695
        %v1511 = vpow.pop %v1510
        %v1512 = vmul.f32 %v1488, 1.442695
        %v1513 = vpow.pop %v1512
        %v1514 = vmul.f32 %v1489, 1.442695
        %v1515 = vpow.pop %v1514
        %v1516 = vmul.f32 %v1490, 1.442695
        %v1517 = vpow.pop %v1516
        %v1518 = vmul.f32 %v1491, 1.442695
        %v1519 = vpow.pop %v1518
        %v1520 = vmul.f32 %v1492, 1.442695
        %v1521 = vpow.pop %v1520
        %v1522 = vmul.f32 %v1493, 1.442695
        %v1523 = vpow.pop %v1522
        %v1524 = vmul.f32 %v1494, 1.442695
        %v1525 = vpow.pop %v1524
        %v1526 = vmul.f32 %v1495, 1.442695
        %v1527 = vpow.pop %v1526
        %v1528 = vadd.f32 %v1497, 1.0
        %v1529 = vadd.f32 %v1499, 1.0
        %v1530 = vadd.f32 %v1501, 1.0
        %v1531 = vadd.f32 %v1503, 1.0
        %v1532 = vadd.f32 %v1505, 1.0
        %v1533 = vadd.f32 %v1507, 1.0
        %v1534 = vadd.f32 %v1509, 1.0
        %v1535 = vadd.f32 %v1511, 1.0
        %v1536 = vadd.f32 %v1513, 1.0
        %v1537 = vadd.f32 %v1515, 1.0
        %v1538 = vadd.f32 %v1517, 1.0
        %v1539 = vadd.f32 %v1519, 1.0
        %v1540 = vadd.f32 %v1521, 1.0
        %v1541 = vadd.f32 %v1523, 1.0
        %v1542 = vadd.f32 %v1525, 1.0
        %v1543 = vadd.f32 %v1527, 1.0
        %v1544 = vrcp.pop %v1528
        %v1545 = vmul.f32 %v1528, %v1544
        %v1546 = vsub.f32 1.0, %v1545
        %v1547 = vmul.f32 %v1544, %v1546
        %v1548 = vadd.f32 %v1544, %v1547
        %vm1549 = vweird.f32 %v1528
        %vm1550 = vweird.f32 %v1544
        %vm1551 = vmor %vm1549, %vm1550
        %v1552 = vsel %vm1551, %v1544, %v1548
        %v1553 = vand.u32 2147483647, %v1528
        %vm1554 = vcmp.eq.f32.partialorder %v1553, 8.507059e+37
        %v1555 = vand.u32 %v1528, 2147483648
        %v1556 = vor.u32 1.1754944e-38, %v1555
        %v1557 = vsel %vm1554, %v1556, %v1552
        %v1558 = vmul.f32 1.0, %v1557
        %v1559 = vrcp.pop %v1529
        %v1560 = vmul.f32 %v1529, %v1559
        %v1561 = vsub.f32 1.0, %v1560
        %v1562 = vmul.f32 %v1559, %v1561
        %v1563 = vadd.f32 %v1559, %v1562
        %vm1564 = vweird.f32 %v1529
        %vm1565 = vweird.f32 %v1559
        %vm1566 = vmor %vm1564, %vm1565
        %v1567 = vsel %vm1566, %v1559, %v1563
        %v1568 = vand.u32 2147483647, %v1529
        %vm1569 = vcmp.eq.f32.partialorder %v1568, 8.507059e+37
        %v1570 = vand.u32 %v1529, 2147483648
        %v1571 = vor.u32 1.1754944e-38, %v1570
        %v1572 = vsel %vm1569, %v1571, %v1567
        %v1573 = vmul.f32 1.0, %v1572
        %v1574 = vrcp.pop %v1530
        %v1575 = vmul.f32 %v1530, %v1574
        %v1576 = vsub.f32 1.0, %v1575
        %v1577 = vmul.f32 %v1574, %v1576
        %v1578 = vadd.f32 %v1574, %v1577
        %vm1579 = vweird.f32 %v1530
        %vm1580 = vweird.f32 %v1574
        %vm1581 = vmor %vm1579, %vm1580
        %v1582 = vsel %vm1581, %v1574, %v1578
        %v1583 = vand.u32 2147483647, %v1530
        %vm1584 = vcmp.eq.f32.partialorder %v1583, 8.507059e+37
        %v1585 = vand.u32 %v1530, 2147483648
        %v1586 = vor.u32 1.1754944e-38, %v1585
        %v1587 = vsel %vm1584, %v1586, %v1582
        %v1588 = vmul.f32 1.0, %v1587
        %v1589 = vrcp.pop %v1531
        %v1590 = vmul.f32 %v1531, %v1589
        %v1591 = vsub.f32 1.0, %v1590
        %v1592 = vmul.f32 %v1589, %v1591
        %v1593 = vadd.f32 %v1589, %v1592
        %vm1594 = vweird.f32 %v1531
        %vm1595 = vweird.f32 %v1589
        %vm1596 = vmor %vm1594, %vm1595
        %v1597 = vsel %vm1596, %v1589, %v1593
        %v1598 = vand.u32 2147483647, %v1531
        %vm1599 = vcmp.eq.f32.partialorder %v1598, 8.507059e+37
        %v1600 = vand.u32 %v1531, 2147483648
        %v1601 = vor.u32 1.1754944e-38, %v1600
        %v1602 = vsel %vm1599, %v1601, %v1597
        %v1603 = vmul.f32 1.0, %v1602
        %v1604 = vrcp.pop %v1532
        %v1605 = vmul.f32 %v1532, %v1604
        %v1606 = vsub.f32 1.0, %v1605
        %v1607 = vmul.f32 %v1604, %v1606
        %v1608 = vadd.f32 %v1604, %v1607
        %vm1609 = vweird.f32 %v1532
        %vm1610 = vweird.f32 %v1604
        %vm1611 = vmor %vm1609, %vm1610
        %v1612 = vsel %vm1611, %v1604, %v1608
        %v1613 = vand.u32 2147483647, %v1532
        %vm1614 = vcmp.eq.f32.partialorder %v1613, 8.507059e+37
        %v1615 = vand.u32 %v1532, 2147483648
        %v1616 = vor.u32 1.1754944e-38, %v1615
        %v1617 = vsel %vm1614, %v1616, %v1612
        %v1618 = vmul.f32 1.0, %v1617
        %v1619 = vrcp.pop %v1533
        %v1620 = vmul.f32 %v1533, %v1619
        %v1621 = vsub.f32 1.0, %v1620
        %v1622 = vmul.f32 %v1619, %v1621
        %v1623 = vadd.f32 %v1619, %v1622
        %vm1624 = vweird.f32 %v1533
        %vm1625 = vweird.f32 %v1619
        %vm1626 = vmor %vm1624, %vm1625
        %v1627 = vsel %vm1626, %v1619, %v1623
        %v1628 = vand.u32 2147483647, %v1533
        %vm1629 = vcmp.eq.f32.partialorder %v1628, 8.507059e+37
        %v1630 = vand.u32 %v1533, 2147483648
        %v1631 = vor.u32 1.1754944e-38, %v1630
        %v1632 = vsel %vm1629, %v1631, %v1627
        %v1633 = vmul.f32 1.0, %v1632
        %v1634 = vrcp.pop %v1534
        %v1635 = vmul.f32 %v1534, %v1634
        %v1636 = vsub.f32 1.0, %v1635
        %v1637 = vmul.f32 %v1634, %v1636
        %v1638 = vadd.f32 %v1634, %v1637
        %vm1639 = vweird.f32 %v1534
        %vm1640 = vweird.f32 %v1634
        %vm1641 = vmor %vm1639, %vm1640
        %v1642 = vsel %vm1641, %v1634, %v1638
        %v1643 = vand.u32 2147483647, %v1534
        %vm1644 = vcmp.eq.f32.partialorder %v1643, 8.507059e+37
        %v1645 = vand.u32 %v1534, 2147483648
        %v1646 = vor.u32 1.1754944e-38, %v1645
        %v1647 = vsel %vm1644, %v1646, %v1642
        %v1648 = vmul.f32 1.0, %v1647
        %v1649 = vrcp.pop %v1535
        %v1650 = vmul.f32 %v1535, %v1649
        %v1651 = vsub.f32 1.0, %v1650
        %v1652 = vmul.f32 %v1649, %v1651
        %v1653 = vadd.f32 %v1649, %v1652
        %vm1654 = vweird.f32 %v1535
        %vm1655 = vweird.f32 %v1649
        %vm1656 = vmor %vm1654, %vm1655
        %v1657 = vsel %vm1656, %v1649, %v1653
        %v1658 = vand.u32 2147483647, %v1535
        %vm1659 = vcmp.eq.f32.partialorder %v1658, 8.507059e+37
        %v1660 = vand.u32 %v1535, 2147483648
        %v1661 = vor.u32 1.1754944e-38, %v1660
        %v1662 = vsel %vm1659, %v1661, %v1657
        %v1663 = vmul.f32 1.0, %v1662
        %v1664 = vrcp.pop %v1536
        %v1665 = vmul.f32 %v1536, %v1664
        %v1666 = vsub.f32 1.0, %v1665
        %v1667 = vmul.f32 %v1664, %v1666
        %v1668 = vadd.f32 %v1664, %v1667
        %vm1669 = vweird.f32 %v1536
        %vm1670 = vweird.f32 %v1664
        %vm1671 = vmor %vm1669, %vm1670
        %v1672 = vsel %vm1671, %v1664, %v1668
        %v1673 = vand.u32 2147483647, %v1536
        %vm1674 = vcmp.eq.f32.partialorder %v1673, 8.507059e+37
        %v1675 = vand.u32 %v1536, 2147483648
        %v1676 = vor.u32 1.1754944e-38, %v1675
        %v1677 = vsel %vm1674, %v1676, %v1672
        %v1678 = vmul.f32 1.0, %v1677
        %v1679 = vrcp.pop %v1537
        %v1680 = vmul.f32 %v1537, %v1679
        %v1681 = vsub.f32 1.0, %v1680
        %v1682 = vmul.f32 %v1679, %v1681
        %v1683 = vadd.f32 %v1679, %v1682
        %vm1684 = vweird.f32 %v1537
        %vm1685 = vweird.f32 %v1679
        %vm1686 = vmor %vm1684, %vm1685
        %v1687 = vsel %vm1686, %v1679, %v1683
        %v1688 = vand.u32 2147483647, %v1537
        %vm1689 = vcmp.eq.f32.partialorder %v1688, 8.507059e+37
        %v1690 = vand.u32 %v1537, 2147483648
        %v1691 = vor.u32 1.1754944e-38, %v1690
        %v1692 = vsel %vm1689, %v1691, %v1687
        %v1693 = vmul.f32 1.0, %v1692
        %v1694 = vrcp.pop %v1538
        %v1695 = vmul.f32 %v1538, %v1694
        %v1696 = vsub.f32 1.0, %v1695
        %v1697 = vmul.f32 %v1694, %v1696
        %v1698 = vadd.f32 %v1694, %v1697
        %vm1699 = vweird.f32 %v1538
        %vm1700 = vweird.f32 %v1694
        %vm1701 = vmor %vm1699, %vm1700
        %v1702 = vsel %vm1701, %v1694, %v1698
        %v1703 = vand.u32 2147483647, %v1538
        %vm1704 = vcmp.eq.f32.partialorder %v1703, 8.507059e+37
        %v1705 = vand.u32 %v1538, 2147483648
        %v1706 = vor.u32 1.1754944e-38, %v1705
        %v1707 = vsel %vm1704, %v1706, %v1702
        %v1708 = vmul.f32 1.0, %v1707
        %v1709 = vrcp.pop %v1539
        %v1710 = vmul.f32 %v1539, %v1709
        %v1711 = vsub.f32 1.0, %v1710
        %v1712 = vmul.f32 %v1709, %v1711
        %v1713 = vadd.f32 %v1709, %v1712
        %vm1714 = vweird.f32 %v1539
        %vm1715 = vweird.f32 %v1709
        %vm1716 = vmor %vm1714, %vm1715
        %v1717 = vsel %vm1716, %v1709, %v1713
        %v1718 = vand.u32 2147483647, %v1539
        %vm1719 = vcmp.eq.f32.partialorder %v1718, 8.507059e+37
        %v1720 = vand.u32 %v1539, 2147483648
        %v1721 = vor.u32 1.1754944e-38, %v1720
        %v1722 = vsel %vm1719, %v1721, %v1717
        %v1723 = vmul.f32 1.0, %v1722
        %v1724 = vrcp.pop %v1540
        %v1725 = vmul.f32 %v1540, %v1724
        %v1726 = vsub.f32 1.0, %v1725
        %v1727 = vmul.f32 %v1724, %v1726
        %v1728 = vadd.f32 %v1724, %v1727
        %vm1729 = vweird.f32 %v1540
        %vm1730 = vweird.f32 %v1724
        %vm1731 = vmor %vm1729, %vm1730
        %v1732 = vsel %vm1731, %v1724, %v1728
        %v1733 = vand.u32 2147483647, %v1540
        %vm1734 = vcmp.eq.f32.partialorder %v1733, 8.507059e+37
        %v1735 = vand.u32 %v1540, 2147483648
        %v1736 = vor.u32 1.1754944e-38, %v1735
        %v1737 = vsel %vm1734, %v1736, %v1732
        %v1738 = vmul.f32 1.0, %v1737
        %v1739 = vrcp.pop %v1541
        %v1740 = vmul.f32 %v1541, %v1739
        %v1741 = vsub.f32 1.0, %v1740
        %v1742 = vmul.f32 %v1739, %v1741
        %v1743 = vadd.f32 %v1739, %v1742
        %vm1744 = vweird.f32 %v1541
        %vm1745 = vweird.f32 %v1739
        %vm1746 = vmor %vm1744, %vm1745
        %v1747 = vsel %vm1746, %v1739, %v1743
        %v1748 = vand.u32 2147483647, %v1541
        %vm1749 = vcmp.eq.f32.partialorder %v1748, 8.507059e+37
        %v1750 = vand.u32 %v1541, 2147483648
        %v1751 = vor.u32 1.1754944e-38, %v1750
        %v1752 = vsel %vm1749, %v1751, %v1747
        %v1753 = vmul.f32 1.0, %v1752
        %v1754 = vrcp.pop %v1542
        %v1755 = vmul.f32 %v1542, %v1754
        %v1756 = vsub.f32 1.0, %v1755
        %v1757 = vmul.f32 %v1754, %v1756
        %v1758 = vadd.f32 %v1754, %v1757
        %vm1759 = vweird.f32 %v1542
        %vm1760 = vweird.f32 %v1754
        %vm1761 = vmor %vm1759, %vm1760
        %v1762 = vsel %vm1761, %v1754, %v1758
        %v1763 = vand.u32 2147483647, %v1542
        %vm1764 = vcmp.eq.f32.partialorder %v1763, 8.507059e+37
        %v1765 = vand.u32 %v1542, 2147483648
        %v1766 = vor.u32 1.1754944e-38, %v1765
        %v1767 = vsel %vm1764, %v1766, %v1762
        %v1768 = vmul.f32 1.0, %v1767
        %v1769 = vrcp.pop %v1543
        %v1770 = vmul.f32 %v1543, %v1769
        %v1771 = vsub.f32 1.0, %v1770
        %v1772 = vmul.f32 %v1769, %v1771
        %v1773 = vadd.f32 %v1769, %v1772
        %vm1774 = vweird.f32 %v1543
        %vm1775 = vweird.f32 %v1769
        %vm1776 = vmor %vm1774, %vm1775
        %v1777 = vsel %vm1776, %v1769, %v1773
        %v1778 = vand.u32 2147483647, %v1543
        %vm1779 = vcmp.eq.f32.partialorder %v1778, 8.507059e+37
        %v1780 = vand.u32 %v1543, 2147483648
        %v1781 = vor.u32 1.1754944e-38, %v1780
        %v1782 = vsel %vm1779, %v1781, %v1777
        %v1783 = vmul.f32 1.0, %v1782
        %v1784 = vmul.f32 %v1433, %v1558
        %v1785 = vmul.f32 %v1436, %v1573
        %v1786 = vmul.f32 %v1439, %v1588
        %v1787 = vmul.f32 %v1442, %v1603
        %v1788 = vmul.f32 %v1445, %v1618
        %v1789 = vmul.f32 %v1448, %v1633
        %v1790 = vmul.f32 %v1451, %v1648
        %v1791 = vmul.f32 %v1454, %v1663
        %v1792 = vmul.f32 %v1457, %v1678
        %v1793 = vmul.f32 %v1460, %v1693
        %v1794 = vmul.f32 %v1463, %v1708
        %v1795 = vmul.f32 %v1466, %v1723
        %v1796 = vmul.f32 %v1469, %v1738
        %v1797 = vmul.f32 %v1472, %v1753
        %v1798 = vmul.f32 %v1475, %v1768
        %v1799 = vmul.f32 %v1478, %v1783
        %v1800 = vld [vmem:[%s509] sm:$0xff]
        %v1801 = vld [vmem:[%s509 + $0x8] sm:$0xff]
        %v1802 = vld [vmem:[%s509 + $0x10] sm:$0xff]
        %v1803 = vld [vmem:[%s509 + $0x18] sm:$0xff]
        %v1805 = vsel %vm533, %v1800, 0
        %v1808 = vsel %vm533, %v1801, 0
        %v1811 = vsel %vm533, %v1802, 0
        %v1814 = vsel %vm533, %v1803, 0
        %1816 = vmatpush.msra.mxu0 0.0
        %1817 = vmatpush.msra.mxu0 0.0
        %1818 = vmatpush.msra.mxu0 0.0
        %1819 = vmatpush.msra.mxu0 0.0
        %1820 = vmatpush.msra.mxu0 0.0
        %1821 = vmatpush.msra.mxu0 0.0
        %1822 = vmatpush.msra.mxu0 0.0
        %1823 = vmatpush.msra.mxu0 0.0
        %1824 = vmatpush.msra.mxu0 0.0
        %1825 = vmatpush.msra.mxu0 0.0
        %1826 = vmatpush.msra.mxu0 0.0
        %1827 = vmatpush.msra.mxu0 0.0
        %1828 = vmatpush.msra.mxu0 0.0
        %1829 = vmatpush.msra.mxu0 0.0
        %1830 = vmatpush.msra.mxu0 0.0
        %1831 = vmatpush.msra.mxu0 %v528
        %1832 = vmatmul.f32.gmra.mxu0 %v1805
        %v1833 = vpop.f32.mrf.mxu0
        %v1834 = vadd.f32 %v531, %v1833
        %1835 = vmatmul.f32.gmra.mxu0 %v1808
        %v1836 = vpop.f32.mrf.mxu0
        %v1837 = vadd.f32 %v531, %v1836
        %1838 = vmatmul.f32.gmra.mxu0 %v1811
        %v1839 = vpop.f32.mrf.mxu0
        %v1840 = vadd.f32 %v531, %v1839
        %1841 = vmatmul.f32.gmra.mxu0 %v1814
        %v1842 = vpop.f32.mrf.mxu0
        %v1843 = vadd.f32 %v531, %v1842
        %1844 = vdwg.mxu0
        %v1845 = vxor.u32 %v1834, 2147483648
        %v1846 = vxor.u32 %v1837, 2147483648
        %v1847 = vxor.u32 %v1840, 2147483648
        %v1848 = vxor.u32 %v1843, 2147483648
        %v1849 = vmul.f32 %v1845, 1.442695
        %v1850 = vpow.pop %v1849
        %v1851 = vmul.f32 %v1846, 1.442695
        %v1852 = vpow.pop %v1851
        %v1853 = vmul.f32 %v1847, 1.442695
        %v1854 = vpow.pop %v1853
        %v1855 = vmul.f32 %v1848, 1.442695
        %v1856 = vpow.pop %v1855
        %v1857 = vadd.f32 %v1850, 1.0
        %v1858 = vadd.f32 %v1852, 1.0
        %v1859 = vadd.f32 %v1854, 1.0
        %v1860 = vadd.f32 %v1856, 1.0
        %v1861 = vrcp.pop %v1857
        %v1862 = vmul.f32 %v1857, %v1861
        %v1863 = vsub.f32 1.0, %v1862
        %v1864 = vmul.f32 %v1861, %v1863
        %v1865 = vadd.f32 %v1861, %v1864
        %vm1866 = vweird.f32 %v1857
        %vm1867 = vweird.f32 %v1861
        %vm1868 = vmor %vm1866, %vm1867
        %v1869 = vsel %vm1868, %v1861, %v1865
        %v1870 = vand.u32 2147483647, %v1857
        %vm1871 = vcmp.eq.f32.partialorder %v1870, 8.507059e+37
        %v1872 = vand.u32 %v1857, 2147483648
        %v1873 = vor.u32 1.1754944e-38, %v1872
        %v1874 = vsel %vm1871, %v1873, %v1869
        %v1875 = vmul.f32 1.0, %v1874
        %v1876 = vrcp.pop %v1858
        %v1877 = vmul.f32 %v1858, %v1876
        %v1878 = vsub.f32 1.0, %v1877
        %v1879 = vmul.f32 %v1876, %v1878
        %v1880 = vadd.f32 %v1876, %v1879
        %vm1881 = vweird.f32 %v1858
        %vm1882 = vweird.f32 %v1876
        %vm1883 = vmor %vm1881, %vm1882
        %v1884 = vsel %vm1883, %v1876, %v1880
        %v1885 = vand.u32 2147483647, %v1858
        %vm1886 = vcmp.eq.f32.partialorder %v1885, 8.507059e+37
        %v1887 = vand.u32 %v1858, 2147483648
        %v1888 = vor.u32 1.1754944e-38, %v1887
        %v1889 = vsel %vm1886, %v1888, %v1884
        %v1890 = vmul.f32 1.0, %v1889
        %v1891 = vrcp.pop %v1859
        %v1892 = vmul.f32 %v1859, %v1891
        %v1893 = vsub.f32 1.0, %v1892
        %v1894 = vmul.f32 %v1891, %v1893
        %v1895 = vadd.f32 %v1891, %v1894
        %vm1896 = vweird.f32 %v1859
        %vm1897 = vweird.f32 %v1891
        %vm1898 = vmor %vm1896, %vm1897
        %v1899 = vsel %vm1898, %v1891, %v1895
        %v1900 = vand.u32 2147483647, %v1859
        %vm1901 = vcmp.eq.f32.partialorder %v1900, 8.507059e+37
        %v1902 = vand.u32 %v1859, 2147483648
        %v1903 = vor.u32 1.1754944e-38, %v1902
        %v1904 = vsel %vm1901, %v1903, %v1899
        %v1905 = vmul.f32 1.0, %v1904
        %v1906 = vrcp.pop %v1860
        %v1907 = vmul.f32 %v1860, %v1906
        %v1908 = vsub.f32 1.0, %v1907
        %v1909 = vmul.f32 %v1906, %v1908
        %v1910 = vadd.f32 %v1906, %v1909
        %vm1911 = vweird.f32 %v1860
        %vm1912 = vweird.f32 %v1906
        %vm1913 = vmor %vm1911, %vm1912
        %v1914 = vsel %vm1913, %v1906, %v1910
        %v1915 = vand.u32 2147483647, %v1860
        %vm1916 = vcmp.eq.f32.partialorder %v1915, 8.507059e+37
        %v1917 = vand.u32 %v1860, 2147483648
        %v1918 = vor.u32 1.1754944e-38, %v1917
        %v1919 = vsel %vm1916, %v1918, %v1914
        %v1920 = vmul.f32 1.0, %v1919
        %v1921 = vmul.f32 %v1834, %v1875
        %v1922 = vmul.f32 %v1837, %v1890
        %v1923 = vmul.f32 %v1840, %v1905
        %v1924 = vmul.f32 %v1843, %v1920
        %v1926 = vsel %vm1362, %v1921, 0
        %v1929 = vsel %vm1362, %v1922, 0
        %v1932 = vsel %vm1362, %v1923, 0
        %v1935 = vsel %vm1362, %v1924, 0
        %1937 = vmatpush.msra.mxu0 0.0
        %1938 = vmatpush.msra.mxu0 0.0
        %1939 = vmatpush.msra.mxu0 0.0
        %1940 = vmatpush.msra.mxu0 0.0
        %1941 = vmatpush.msra.mxu0 0.0
        %1942 = vmatpush.msra.mxu0 0.0
        %1943 = vmatpush.msra.mxu0 0.0
        %1944 = vmatpush.msra.mxu0 0.0
        %1945 = vmatpush.msra.mxu0 0.0
        %1946 = vmatpush.msra.mxu0 0.0
        %1947 = vmatpush.msra.mxu0 0.0
        %1948 = vmatpush.msra.mxu0 0.0
        %1949 = vmatpush.msra.mxu0 0.0
        %1950 = vmatpush.msra.mxu0 0.0
        %1951 = vmatpush.msra.mxu0 0.0
        %1952 = vmatpush.msra.mxu0 %v1413
        %1953 = vmatmul.f32.gmra.mxu0 %v1926
        %v1954 = vpop.f32.mrf.mxu0
        %v1955 = vadd.f32 %v1360, %v1954
        %1956 = vmatmul.f32.gmra.mxu0 %v1929
        %v1957 = vpop.f32.mrf.mxu0
        %v1958 = vadd.f32 %v1360, %v1957
        %1959 = vmatmul.f32.gmra.mxu0 %v1932
        %v1960 = vpop.f32.mrf.mxu0
        %v1961 = vadd.f32 %v1360, %v1960
        %1962 = vmatmul.f32.gmra.mxu0 %v1935
        %v1963 = vpop.f32.mrf.mxu0
        %v1964 = vadd.f32 %v1360, %v1963
        %1965 = vdwg.mxu0
        %v1966 = vxor.u32 %v1955, 2147483648
        %v1967 = vxor.u32 %v1958, 2147483648
        %v1968 = vxor.u32 %v1961, 2147483648
        %v1969 = vxor.u32 %v1964, 2147483648
        %v1970 = vmul.f32 %v1966, 1.442695
        %v1971 = vpow.pop %v1970
        %v1972 = vmul.f32 %v1967, 1.442695
        %v1973 = vpow.pop %v1972
        %v1974 = vmul.f32 %v1968, 1.442695
        %v1975 = vpow.pop %v1974
        %v1976 = vmul.f32 %v1969, 1.442695
        %v1977 = vpow.pop %v1976
        %v1978 = vadd.f32 %v1971, 1.0
        %v1979 = vadd.f32 %v1973, 1.0
        %v1980 = vadd.f32 %v1975, 1.0
        %v1981 = vadd.f32 %v1977, 1.0
        %v1982 = vrcp.pop %v1978
        %v1983 = vmul.f32 %v1978, %v1982
        %v1984 = vsub.f32 1.0, %v1983
        %v1985 = vmul.f32 %v1982, %v1984
        %v1986 = vadd.f32 %v1982, %v1985
        %vm1987 = vweird.f32 %v1978
        %vm1988 = vweird.f32 %v1982
        %vm1989 = vmor %vm1987, %vm1988
        %v1990 = vsel %vm1989, %v1982, %v1986
        %v1991 = vand.u32 2147483647, %v1978
        %vm1992 = vcmp.eq.f32.partialorder %v1991, 8.507059e+37
        %v1993 = vand.u32 %v1978, 2147483648
        %v1994 = vor.u32 1.1754944e-38, %v1993
        %v1995 = vsel %vm1992, %v1994, %v1990
        %v1996 = vmul.f32 1.0, %v1995
        %v1997 = vrcp.pop %v1979
        %v1998 = vmul.f32 %v1979, %v1997
        %v1999 = vsub.f32 1.0, %v1998
        %v2000 = vmul.f32 %v1997, %v1999
        %v2001 = vadd.f32 %v1997, %v2000
        %vm2002 = vweird.f32 %v1979
        %vm2003 = vweird.f32 %v1997
        %vm2004 = vmor %vm2002, %vm2003
        %v2005 = vsel %vm2004, %v1997, %v2001
        %v2006 = vand.u32 2147483647, %v1979
        %vm2007 = vcmp.eq.f32.partialorder %v2006, 8.507059e+37
        %v2008 = vand.u32 %v1979, 2147483648
        %v2009 = vor.u32 1.1754944e-38, %v2008
        %v2010 = vsel %vm2007, %v2009, %v2005
        %v2011 = vmul.f32 1.0, %v2010
        %v2012 = vrcp.pop %v1980
        %v2013 = vmul.f32 %v1980, %v2012
        %v2014 = vsub.f32 1.0, %v2013
        %v2015 = vmul.f32 %v2012, %v2014
        %v2016 = vadd.f32 %v2012, %v2015
        %vm2017 = vweird.f32 %v1980
        %vm2018 = vweird.f32 %v2012
        %vm2019 = vmor %vm2017, %vm2018
        %v2020 = vsel %vm2019, %v2012, %v2016
        %v2021 = vand.u32 2147483647, %v1980
        %vm2022 = vcmp.eq.f32.partialorder %v2021, 8.507059e+37
        %v2023 = vand.u32 %v1980, 2147483648
        %v2024 = vor.u32 1.1754944e-38, %v2023
        %v2025 = vsel %vm2022, %v2024, %v2020
        %v2026 = vmul.f32 1.0, %v2025
        %v2027 = vrcp.pop %v1981
        %v2028 = vmul.f32 %v1981, %v2027
        %v2029 = vsub.f32 1.0, %v2028
        %v2030 = vmul.f32 %v2027, %v2029
        %v2031 = vadd.f32 %v2027, %v2030
        %vm2032 = vweird.f32 %v1981
        %vm2033 = vweird.f32 %v2027
        %vm2034 = vmor %vm2032, %vm2033
        %v2035 = vsel %vm2034, %v2027, %v2031
        %v2036 = vand.u32 2147483647, %v1981
        %vm2037 = vcmp.eq.f32.partialorder %v2036, 8.507059e+37
        %v2038 = vand.u32 %v1981, 2147483648
        %v2039 = vor.u32 1.1754944e-38, %v2038
        %v2040 = vsel %vm2037, %v2039, %v2035
        %v2041 = vmul.f32 1.0, %v2040
        %v2042 = vmul.f32 %v1955, %v1996
        %v2043 = vmul.f32 %v1958, %v2011
        %v2044 = vmul.f32 %v1961, %v2026
        %v2045 = vmul.f32 %v1964, %v2041
        %2046 = vst.msk [vmem:[#allocation2] sm:$0xff] %vm1362, 0.0
        %2047 = vst.msk [vmem:[#allocation2 + $0x8] sm:$0xff] %vm1362, 0.0
        %vm2048 = vcmask 25600
        %2049 = vst.msk [vmem:[#allocation2 + $0x10] sm:$0x3] %vm2048, 0.0
        %s2050 = scalar_lea.vmem [#allocation2], 216
        %2051 = vst.msk [vmem:[%s2050] sm:$0xff] %vm1362, 0.0
        %2052 = vst.msk [vmem:[%s2050 + $0x8] sm:$0xff] %vm1362, 0.0
        %2053 = vst.msk [vmem:[%s2050 + $0x10] sm:$0x3] %vm2048, 0.0
        %vm2054 = vcmask 24576
        %2055 = vst.msk [vmem:[#allocation2] sm:$0x1] %vm2054, 0.0
        %2056 = vst.msk [vmem:[#allocation2 + $0x18] sm:$0x1] %vm2054, 0.0
        %2057 = vst.msk [vmem:[#allocation2 + $0x30] sm:$0x1] %vm2054, 0.0
        %2058 = vst.msk [vmem:[#allocation2 + $0x48] sm:$0x1] %vm2054, 0.0
        %2059 = vst.msk [vmem:[#allocation2 + $0x60] sm:$0x1] %vm2054, 0.0
        %2060 = vst.msk [vmem:[#allocation2 + $0x78] sm:$0x1] %vm2054, 0.0
        %2061 = vst.msk [vmem:[#allocation2 + $0x90] sm:$0x1] %vm2054, 0.0
        %2062 = vst.msk [vmem:[#allocation2 + $0xa8] sm:$0x1] %vm2054, 0.0
        %2063 = vst.msk [vmem:[#allocation2 + $0xc0] sm:$0x1] %vm2054, 0.0
        %2064 = vst.msk [vmem:[#allocation2 + $0xd8] sm:$0x1] %vm2054, 0.0
        %2065 = vst.msk [vmem:[#allocation2 + $0x11] sm:$0x1] %vm2054, 0.0
        %2066 = vst.msk [vmem:[#allocation2 + $0x29] sm:$0x1] %vm2054, 0.0
        %2067 = vst.msk [vmem:[#allocation2 + $0x41] sm:$0x1] %vm2054, 0.0
        %2068 = vst.msk [vmem:[#allocation2 + $0x59] sm:$0x1] %vm2054, 0.0
        %2069 = vst.msk [vmem:[#allocation2 + $0x71] sm:$0x1] %vm2054, 0.0
        %2070 = vst.msk [vmem:[#allocation2 + $0x89] sm:$0x1] %vm2054, 0.0
        %2071 = vst.msk [vmem:[#allocation2 + $0xa1] sm:$0x1] %vm2054, 0.0
        %2072 = vst.msk [vmem:[#allocation2 + $0xb9] sm:$0x1] %vm2054, 0.0
        %2073 = vst.msk [vmem:[#allocation2 + $0xd1] sm:$0x1] %vm2054, 0.0
        %2074 = vst.msk [vmem:[#allocation2 + $0xe9] sm:$0x1] %vm2054, 0.0
        %s2075 = scalar_lea.vmem [#allocation2], 24
        %2076 = vst.msk [vmem:[%s2075 + $0x1] sm:$0xff] %vm1362, %v1784
        %2077 = vst.msk [vmem:[%s2075 + $0x9] sm:$0xff] %vm1362, %v1785
        %2078 = vst.msk [vmem:[%s2075 + $0x19] sm:$0xff] %vm1362, %v1786
        %2079 = vst.msk [vmem:[%s2075 + $0x21] sm:$0xff] %vm1362, %v1787
        %2080 = vst.msk [vmem:[%s2075 + $0x31] sm:$0xff] %vm1362, %v1788
        %2081 = vst.msk [vmem:[%s2075 + $0x39] sm:$0xff] %vm1362, %v1789
        %2082 = vst.msk [vmem:[%s2075 + $0x49] sm:$0xff] %vm1362, %v1790
        %2083 = vst.msk [vmem:[%s2075 + $0x51] sm:$0xff] %vm1362, %v1791
        %2084 = vst.msk [vmem:[%s2075 + $0x61] sm:$0xff] %vm1362, %v1792
        %2085 = vst.msk [vmem:[%s2075 + $0x69] sm:$0xff] %vm1362, %v1793
        %2086 = vst.msk [vmem:[%s2075 + $0x79] sm:$0xff] %vm1362, %v1794
        %2087 = vst.msk [vmem:[%s2075 + $0x81] sm:$0xff] %vm1362, %v1795
        %2088 = vst.msk [vmem:[%s2075 + $0x91] sm:$0xff] %vm1362, %v1796
        %2089 = vst.msk [vmem:[%s2075 + $0x99] sm:$0xff] %vm1362, %v1797
        %2090 = vst.msk [vmem:[%s2075 + $0xa9] sm:$0xff] %vm1362, %v1798
        %2091 = vst.msk [vmem:[%s2075 + $0xb1] sm:$0xff] %vm1362, %v1799
        %p2092 = scmp.gt.s32.totalorder %s32, 0
        // Predicated region
        $region73: #{tpu_custom_call.1} parent=71 // pred_check
          %p2093 = pneg %p2092
        $region74: #{tpu_custom_call.1} parent=71 // pred_check_branch
          %2095 = sbr.rel (%p2093) target = $region76
        $region75: #{tpu_custom_call.1} parent=71 // pred_region
          %2096 = vst.msk [vmem:[#allocation2 + $0x1] sm:$0xff] %vm1362, %v2042
          %2097 = vst.msk [vmem:[#allocation2 + $0x9] sm:$0xff] %vm1362, %v2043
        $region76: #{tpu_custom_call.1} parent=71 // pred_fallthru
          _
        %p2098 = scmp.lt.s32.totalorder %s32, 1
        // Predicated region
        $region77: #{tpu_custom_call.1} parent=71 // pred_check
          %p2099 = pneg %p2098
        $region78: #{tpu_custom_call.1} parent=71 // pred_check_branch
          %2101 = sbr.rel (%p2099) target = $region80
        $region79: #{tpu_custom_call.1} parent=71 // pred_region
          %2102 = vst.msk [vmem:[%s2050 + $0x1] sm:$0xff] %vm1362, %v2044
          %2103 = vst.msk [vmem:[%s2050 + $0x9] sm:$0xff] %vm1362, %v2045
        $region80: #{tpu_custom_call.1} parent=71 // pred_fallthru
          _
        %v2104 = vld [vmem:[#allocation2] sm:$0xff]
        %v2105 = vld [vmem:[#allocation2 + $0x8] sm:$0xff]
        %v2106 = vld [vmem:[#allocation2 + $0x18] sm:$0xff]
        %v2107 = vld [vmem:[#allocation2 + $0x20] sm:$0xff]
        %v2108 = vld [vmem:[#allocation2 + $0x30] sm:$0xff]
        %v2109 = vld [vmem:[#allocation2 + $0x38] sm:$0xff]
        %v2110 = vld [vmem:[#allocation2 + $0x48] sm:$0xff]
        %v2111 = vld [vmem:[#allocation2 + $0x50] sm:$0xff]
        %v2112 = vld [vmem:[#allocation2 + $0x60] sm:$0xff]
        %v2113 = vld [vmem:[#allocation2 + $0x68] sm:$0xff]
        %v2114 = vld [vmem:[#allocation2 + $0x78] sm:$0xff]
        %v2115 = vld [vmem:[#allocation2 + $0x80] sm:$0xff]
        %v2116 = vld [vmem:[#allocation2 + $0x90] sm:$0xff]
        %v2117 = vld [vmem:[#allocation2 + $0x98] sm:$0xff]
        %v2118 = vld [vmem:[#allocation2 + $0xa8] sm:$0xff]
        %v2119 = vld [vmem:[#allocation2 + $0xb0] sm:$0xff]
        %v2120 = vld [vmem:[%s8] sm:$0xf]
        %v2121 = vld [vmem:[#allocation2 + $0x1] sm:$0xff]
        %v2122 = vld [vmem:[#allocation2 + $0x9] sm:$0xff]
        %v2123 = vld [vmem:[#allocation2 + $0x19] sm:$0xff]
        %v2124 = vld [vmem:[#allocation2 + $0x21] sm:$0xff]
        %v2125 = vld [vmem:[#allocation2 + $0x31] sm:$0xff]
        %v2126 = vld [vmem:[#allocation2 + $0x39] sm:$0xff]
        %v2127 = vld [vmem:[#allocation2 + $0x49] sm:$0xff]
        %v2128 = vld [vmem:[#allocation2 + $0x51] sm:$0xff]
        %v2129 = vld [vmem:[#allocation2 + $0x61] sm:$0xff]
        %v2130 = vld [vmem:[#allocation2 + $0x69] sm:$0xff]
        %v2131 = vld [vmem:[#allocation2 + $0x79] sm:$0xff]
        %v2132 = vld [vmem:[#allocation2 + $0x81] sm:$0xff]
        %v2133 = vld [vmem:[#allocation2 + $0x91] sm:$0xff]
        %v2134 = vld [vmem:[#allocation2 + $0x99] sm:$0xff]
        %v2135 = vld [vmem:[#allocation2 + $0xa9] sm:$0xff]
        %v2136 = vld [vmem:[#allocation2 + $0xb1] sm:$0xff]
        %s2137 = scalar_lea.vmem %s8, 4
        %v2138 = vld [vmem:[%s2137] sm:$0xf]
        %v2140 = vsel %vm1362, %v2121, 0
        %v2143 = vsel %vm1362, %v2122, 0
        %v2146 = vsel %vm1362, %v2123, 0
        %v2149 = vsel %vm1362, %v2124, 0
        %v2152 = vsel %vm1362, %v2125, 0
        %v2155 = vsel %vm1362, %v2126, 0
        %v2158 = vsel %vm1362, %v2127, 0
        %v2161 = vsel %vm1362, %v2128, 0
        %v2164 = vsel %vm1362, %v2129, 0
        %v2167 = vsel %vm1362, %v2130, 0
        %v2170 = vsel %vm1362, %v2131, 0
        %v2173 = vsel %vm1362, %v2132, 0
        %v2176 = vsel %vm1362, %v2133, 0
        %v2179 = vsel %vm1362, %v2134, 0
        %v2182 = vsel %vm1362, %v2135, 0
        %v2185 = vsel %vm1362, %v2136, 0
        %v2188 = vsel %vm1411, %v2138, 0
        %2190 = vmatpush.msra.mxu0 0.0
        %2191 = vmatpush.msra.mxu0 0.0
        %2192 = vmatpush.msra.mxu0 0.0
        %2193 = vmatpush.msra.mxu0 0.0
        %2194 = vmatpush.msra.mxu0 0.0
        %2195 = vmatpush.msra.mxu0 0.0
        %2196 = vmatpush.msra.mxu0 0.0
        %2197 = vmatpush.msra.mxu0 0.0
        %2198 = vmatpush.msra.mxu0 0.0
        %2199 = vmatpush.msra.mxu0 0.0
        %2200 = vmatpush.msra.mxu0 0.0
        %2201 = vmatpush.msra.mxu0 0.0
        %2202 = vmatpush.msra.mxu0 0.0
        %2203 = vmatpush.msra.mxu0 0.0
        %2204 = vmatpush.msra.mxu0 0.0
        %2205 = vmatpush.msra.mxu0 %v2188
        %2206 = vmatmul.f32.gmra.mxu0 %v2140
        %v2207 = vpop.f32.mrf.mxu0
        %v2208 = vadd.f32 0.0, %v2207
        %2209 = vmatmul.f32.gmra.mxu0 %v2143
        %v2210 = vpop.f32.mrf.mxu0
        %v2211 = vadd.f32 0.0, %v2210
        %2212 = vmatmul.f32.gmra.mxu0 %v2146
        %v2213 = vpop.f32.mrf.mxu0
        %v2214 = vadd.f32 0.0, %v2213
        %2215 = vmatmul.f32.gmra.mxu0 %v2149
        %v2216 = vpop.f32.mrf.mxu0
        %v2217 = vadd.f32 0.0, %v2216
        %2218 = vmatmul.f32.gmra.mxu0 %v2152
        %v2219 = vpop.f32.mrf.mxu0
        %v2220 = vadd.f32 0.0, %v2219
        %2221 = vmatmul.f32.gmra.mxu0 %v2155
        %v2222 = vpop.f32.mrf.mxu0
        %v2223 = vadd.f32 0.0, %v2222
        %2224 = vmatmul.f32.gmra.mxu0 %v2158
        %v2225 = vpop.f32.mrf.mxu0
        %v2226 = vadd.f32 0.0, %v2225
        %2227 = vmatmul.f32.gmra.mxu0 %v2161
        %v2228 = vpop.f32.mrf.mxu0
        %v2229 = vadd.f32 0.0, %v2228
        %2230 = vmatmul.f32.gmra.mxu0 %v2164
        %v2231 = vpop.f32.mrf.mxu0
        %v2232 = vadd.f32 0.0, %v2231
        %2233 = vmatmul.f32.gmra.mxu0 %v2167
        %v2234 = vpop.f32.mrf.mxu0
        %v2235 = vadd.f32 0.0, %v2234
        %2236 = vmatmul.f32.gmra.mxu0 %v2170
        %v2237 = vpop.f32.mrf.mxu0
        %v2238 = vadd.f32 0.0, %v2237
        %2239 = vmatmul.f32.gmra.mxu0 %v2173
        %v2240 = vpop.f32.mrf.mxu0
        %v2241 = vadd.f32 0.0, %v2240
        %2242 = vmatmul.f32.gmra.mxu0 %v2176
        %v2243 = vpop.f32.mrf.mxu0
        %v2244 = vadd.f32 0.0, %v2243
        %2245 = vmatmul.f32.gmra.mxu0 %v2179
        %v2246 = vpop.f32.mrf.mxu0
        %v2247 = vadd.f32 0.0, %v2246
        %2248 = vmatmul.f32.gmra.mxu0 %v2182
        %v2249 = vpop.f32.mrf.mxu0
        %v2250 = vadd.f32 0.0, %v2249
        %2251 = vmatmul.f32.gmra.mxu0 %v2185
        %v2252 = vpop.f32.mrf.mxu0
        %v2253 = vadd.f32 0.0, %v2252
        %2254 = vdwg.mxu0
        %v2256 = vsel %vm1362, %v2104, 0
        %v2259 = vsel %vm1362, %v2105, 0
        %v2262 = vsel %vm1362, %v2106, 0
        %v2265 = vsel %vm1362, %v2107, 0
        %v2268 = vsel %vm1362, %v2108, 0
        %v2271 = vsel %vm1362, %v2109, 0
        %v2274 = vsel %vm1362, %v2110, 0
        %v2277 = vsel %vm1362, %v2111, 0
        %v2280 = vsel %vm1362, %v2112, 0
        %v2283 = vsel %vm1362, %v2113, 0
        %v2286 = vsel %vm1362, %v2114, 0
        %v2289 = vsel %vm1362, %v2115, 0
        %v2292 = vsel %vm1362, %v2116, 0
        %v2295 = vsel %vm1362, %v2117, 0
        %v2298 = vsel %vm1362, %v2118, 0
        %v2301 = vsel %vm1362, %v2119, 0
        %v2304 = vsel %vm1411, %v2120, 0
        %2306 = vmatpush.msra.mxu0 0.0
        %2307 = vmatpush.msra.mxu0 0.0
        %2308 = vmatpush.msra.mxu0 0.0
        %2309 = vmatpush.msra.mxu0 0.0
        %2310 = vmatpush.msra.mxu0 0.0
        %2311 = vmatpush.msra.mxu0 0.0
        %2312 = vmatpush.msra.mxu0 0.0
        %2313 = vmatpush.msra.mxu0 0.0
        %2314 = vmatpush.msra.mxu0 0.0
        %2315 = vmatpush.msra.mxu0 0.0
        %2316 = vmatpush.msra.mxu0 0.0
        %2317 = vmatpush.msra.mxu0 0.0
        %2318 = vmatpush.msra.mxu0 0.0
        %2319 = vmatpush.msra.mxu0 0.0
        %2320 = vmatpush.msra.mxu0 0.0
        %2321 = vmatpush.msra.mxu0 %v2304
        %2322 = vmatmul.f32.gmra.mxu0 %v2256
        %v2323 = vpop.f32.mrf.mxu0
        %v2324 = vadd.f32 %v2208, %v2323
        %2325 = vmatmul.f32.gmra.mxu0 %v2259
        %v2326 = vpop.f32.mrf.mxu0
        %v2327 = vadd.f32 %v2211, %v2326
        %2328 = vmatmul.f32.gmra.mxu0 %v2262
        %v2329 = vpop.f32.mrf.mxu0
        %v2330 = vadd.f32 %v2214, %v2329
        %2331 = vmatmul.f32.gmra.mxu0 %v2265
        %v2332 = vpop.f32.mrf.mxu0
        %v2333 = vadd.f32 %v2217, %v2332
        %2334 = vmatmul.f32.gmra.mxu0 %v2268
        %v2335 = vpop.f32.mrf.mxu0
        %v2336 = vadd.f32 %v2220, %v2335
        %2337 = vmatmul.f32.gmra.mxu0 %v2271
        %v2338 = vpop.f32.mrf.mxu0
        %v2339 = vadd.f32 %v2223, %v2338
        %2340 = vmatmul.f32.gmra.mxu0 %v2274
        %v2341 = vpop.f32.mrf.mxu0
        %v2342 = vadd.f32 %v2226, %v2341
        %2343 = vmatmul.f32.gmra.mxu0 %v2277
        %v2344 = vpop.f32.mrf.mxu0
        %v2345 = vadd.f32 %v2229, %v2344
        %2346 = vmatmul.f32.gmra.mxu0 %v2280
        %v2347 = vpop.f32.mrf.mxu0
        %v2348 = vadd.f32 %v2232, %v2347
        %2349 = vmatmul.f32.gmra.mxu0 %v2283
        %v2350 = vpop.f32.mrf.mxu0
        %v2351 = vadd.f32 %v2235, %v2350
        %2352 = vmatmul.f32.gmra.mxu0 %v2286
        %v2353 = vpop.f32.mrf.mxu0
        %v2354 = vadd.f32 %v2238, %v2353
        %2355 = vmatmul.f32.gmra.mxu0 %v2289
        %v2356 = vpop.f32.mrf.mxu0
        %v2357 = vadd.f32 %v2241, %v2356
        %2358 = vmatmul.f32.gmra.mxu0 %v2292
        %v2359 = vpop.f32.mrf.mxu0
        %v2360 = vadd.f32 %v2244, %v2359
        %2361 = vmatmul.f32.gmra.mxu0 %v2295
        %v2362 = vpop.f32.mrf.mxu0
        %v2363 = vadd.f32 %v2247, %v2362
        %2364 = vmatmul.f32.gmra.mxu0 %v2298
        %v2365 = vpop.f32.mrf.mxu0
        %v2366 = vadd.f32 %v2250, %v2365
        %2367 = vmatmul.f32.gmra.mxu0 %v2301
        %v2368 = vpop.f32.mrf.mxu0
        %v2369 = vadd.f32 %v2253, %v2368
        %2370 = vdwg.mxu0
        %v2371 = vld [vmem:[#allocation2 + $0x2] sm:$0xff]
        %v2372 = vld [vmem:[#allocation2 + $0xa] sm:$0xff]
        %v2373 = vld [vmem:[#allocation2 + $0x1a] sm:$0xff]
        %v2374 = vld [vmem:[#allocation2 + $0x22] sm:$0xff]
        %v2375 = vld [vmem:[#allocation2 + $0x32] sm:$0xff]
        %v2376 = vld [vmem:[#allocation2 + $0x3a] sm:$0xff]
        %v2377 = vld [vmem:[#allocation2 + $0x4a] sm:$0xff]
        %v2378 = vld [vmem:[#allocation2 + $0x52] sm:$0xff]
        %v2379 = vld [vmem:[#allocation2 + $0x62] sm:$0xff]
        %v2380 = vld [vmem:[#allocation2 + $0x6a] sm:$0xff]
        %v2381 = vld [vmem:[#allocation2 + $0x7a] sm:$0xff]
        %v2382 = vld [vmem:[#allocation2 + $0x82] sm:$0xff]
        %v2383 = vld [vmem:[#allocation2 + $0x92] sm:$0xff]
        %v2384 = vld [vmem:[#allocation2 + $0x9a] sm:$0xff]
        %v2385 = vld [vmem:[#allocation2 + $0xaa] sm:$0xff]
        %v2386 = vld [vmem:[#allocation2 + $0xb2] sm:$0xff]
        %s2387 = scalar_lea.vmem %s8, 8
        %v2388 = vld [vmem:[%s2387] sm:$0xf]
        %v2390 = vsel %vm1362, %v2371, 0
        %v2393 = vsel %vm1362, %v2372, 0
        %v2396 = vsel %vm1362, %v2373, 0
        %v2399 = vsel %vm1362, %v2374, 0
        %v2402 = vsel %vm1362, %v2375, 0
        %v2405 = vsel %vm1362, %v2376, 0
        %v2408 = vsel %vm1362, %v2377, 0
        %v2411 = vsel %vm1362, %v2378, 0
        %v2414 = vsel %vm1362, %v2379, 0
        %v2417 = vsel %vm1362, %v2380, 0
        %v2420 = vsel %vm1362, %v2381, 0
        %v2423 = vsel %vm1362, %v2382, 0
        %v2426 = vsel %vm1362, %v2383, 0
        %v2429 = vsel %vm1362, %v2384, 0
        %v2432 = vsel %vm1362, %v2385, 0
        %v2435 = vsel %vm1362, %v2386, 0
        %v2438 = vsel %vm1411, %v2388, 0
        %2440 = vmatpush.msra.mxu0 0.0
        %2441 = vmatpush.msra.mxu0 0.0
        %2442 = vmatpush.msra.mxu0 0.0
        %2443 = vmatpush.msra.mxu0 0.0
        %2444 = vmatpush.msra.mxu0 0.0
        %2445 = vmatpush.msra.mxu0 0.0
        %2446 = vmatpush.msra.mxu0 0.0
        %2447 = vmatpush.msra.mxu0 0.0
        %2448 = vmatpush.msra.mxu0 0.0
        %2449 = vmatpush.msra.mxu0 0.0
        %2450 = vmatpush.msra.mxu0 0.0
        %2451 = vmatpush.msra.mxu0 0.0
        %2452 = vmatpush.msra.mxu0 0.0
        %2453 = vmatpush.msra.mxu0 0.0
        %2454 = vmatpush.msra.mxu0 0.0
        %2455 = vmatpush.msra.mxu0 %v2438
        %2456 = vmatmul.f32.gmra.mxu0 %v2390
        %v2457 = vpop.f32.mrf.mxu0
        %v2458 = vadd.f32 0.0, %v2457
        %2459 = vmatmul.f32.gmra.mxu0 %v2393
        %v2460 = vpop.f32.mrf.mxu0
        %v2461 = vadd.f32 0.0, %v2460
        %2462 = vmatmul.f32.gmra.mxu0 %v2396
        %v2463 = vpop.f32.mrf.mxu0
        %v2464 = vadd.f32 0.0, %v2463
        %2465 = vmatmul.f32.gmra.mxu0 %v2399
        %v2466 = vpop.f32.mrf.mxu0
        %v2467 = vadd.f32 0.0, %v2466
        %2468 = vmatmul.f32.gmra.mxu0 %v2402
        %v2469 = vpop.f32.mrf.mxu0
        %v2470 = vadd.f32 0.0, %v2469
        %2471 = vmatmul.f32.gmra.mxu0 %v2405
        %v2472 = vpop.f32.mrf.mxu0
        %v2473 = vadd.f32 0.0, %v2472
        %2474 = vmatmul.f32.gmra.mxu0 %v2408
        %v2475 = vpop.f32.mrf.mxu0
        %v2476 = vadd.f32 0.0, %v2475
        %2477 = vmatmul.f32.gmra.mxu0 %v2411
        %v2478 = vpop.f32.mrf.mxu0
        %v2479 = vadd.f32 0.0, %v2478
        %2480 = vmatmul.f32.gmra.mxu0 %v2414
        %v2481 = vpop.f32.mrf.mxu0
        %v2482 = vadd.f32 0.0, %v2481
        %2483 = vmatmul.f32.gmra.mxu0 %v2417
        %v2484 = vpop.f32.mrf.mxu0
        %v2485 = vadd.f32 0.0, %v2484
        %2486 = vmatmul.f32.gmra.mxu0 %v2420
        %v2487 = vpop.f32.mrf.mxu0
        %v2488 = vadd.f32 0.0, %v2487
        %2489 = vmatmul.f32.gmra.mxu0 %v2423
        %v2490 = vpop.f32.mrf.mxu0
        %v2491 = vadd.f32 0.0, %v2490
        %2492 = vmatmul.f32.gmra.mxu0 %v2426
        %v2493 = vpop.f32.mrf.mxu0
        %v2494 = vadd.f32 0.0, %v2493
        %2495 = vmatmul.f32.gmra.mxu0 %v2429
        %v2496 = vpop.f32.mrf.mxu0
        %v2497 = vadd.f32 0.0, %v2496
        %2498 = vmatmul.f32.gmra.mxu0 %v2432
        %v2499 = vpop.f32.mrf.mxu0
        %v2500 = vadd.f32 0.0, %v2499
        %2501 = vmatmul.f32.gmra.mxu0 %v2435
        %v2502 = vpop.f32.mrf.mxu0
        %v2503 = vadd.f32 0.0, %v2502
        %2504 = vdwg.mxu0
        %v2505 = vadd.f32 %v2324, %v2458
        %v2506 = vadd.f32 %v2327, %v2461
        %v2507 = vadd.f32 %v2330, %v2464
        %v2508 = vadd.f32 %v2333, %v2467
        %v2509 = vadd.f32 %v2336, %v2470
        %v2510 = vadd.f32 %v2339, %v2473
        %v2511 = vadd.f32 %v2342, %v2476
        %v2512 = vadd.f32 %v2345, %v2479
        %v2513 = vadd.f32 %v2348, %v2482
        %v2514 = vadd.f32 %v2351, %v2485
        %v2515 = vadd.f32 %v2354, %v2488
        %v2516 = vadd.f32 %v2357, %v2491
        %v2517 = vadd.f32 %v2360, %v2494
        %v2518 = vadd.f32 %v2363, %v2497
        %v2519 = vadd.f32 %v2366, %v2500
        %v2520 = vadd.f32 %v2369, %v2503
        %v2521 = vld [vmem:[%s2075] sm:$0xff]
        %v2522 = vld [vmem:[%s2075 + $0x8] sm:$0xff]
        %v2523 = vld [vmem:[%s2075 + $0x18] sm:$0xff]
        %v2524 = vld [vmem:[%s2075 + $0x20] sm:$0xff]
        %v2525 = vld [vmem:[%s2075 + $0x30] sm:$0xff]
        %v2526 = vld [vmem:[%s2075 + $0x38] sm:$0xff]
        %v2527 = vld [vmem:[%s2075 + $0x48] sm:$0xff]
        %v2528 = vld [vmem:[%s2075 + $0x50] sm:$0xff]
        %v2529 = vld [vmem:[%s2075 + $0x60] sm:$0xff]
        %v2530 = vld [vmem:[%s2075 + $0x68] sm:$0xff]
        %v2531 = vld [vmem:[%s2075 + $0x78] sm:$0xff]
        %v2532 = vld [vmem:[%s2075 + $0x80] sm:$0xff]
        %v2533 = vld [vmem:[%s2075 + $0x90] sm:$0xff]
        %v2534 = vld [vmem:[%s2075 + $0x98] sm:$0xff]
        %v2535 = vld [vmem:[%s2075 + $0xa8] sm:$0xff]
        %v2536 = vld [vmem:[%s2075 + $0xb0] sm:$0xff]
        %s2537 = scalar_lea.vmem %s8, 12
        %v2538 = vld [vmem:[%s2537] sm:$0xf]
        %v2540 = vsel %vm1362, %v2521, 0
        %v2543 = vsel %vm1362, %v2522, 0
        %v2546 = vsel %vm1362, %v2523, 0
        %v2549 = vsel %vm1362, %v2524, 0
        %v2552 = vsel %vm1362, %v2525, 0
        %v2555 = vsel %vm1362, %v2526, 0
        %v2558 = vsel %vm1362, %v2527, 0
        %v2561 = vsel %vm1362, %v2528, 0
        %v2564 = vsel %vm1362, %v2529, 0
        %v2567 = vsel %vm1362, %v2530, 0
        %v2570 = vsel %vm1362, %v2531, 0
        %v2573 = vsel %vm1362, %v2532, 0
        %v2576 = vsel %vm1362, %v2533, 0
        %v2579 = vsel %vm1362, %v2534, 0
        %v2582 = vsel %vm1362, %v2535, 0
        %v2585 = vsel %vm1362, %v2536, 0
        %v2588 = vsel %vm1411, %v2538, 0
        %2590 = vmatpush.msra.mxu0 0.0
        %2591 = vmatpush.msra.mxu0 0.0
        %2592 = vmatpush.msra.mxu0 0.0
        %2593 = vmatpush.msra.mxu0 0.0
        %2594 = vmatpush.msra.mxu0 0.0
        %2595 = vmatpush.msra.mxu0 0.0
        %2596 = vmatpush.msra.mxu0 0.0
        %2597 = vmatpush.msra.mxu0 0.0
        %2598 = vmatpush.msra.mxu0 0.0
        %2599 = vmatpush.msra.mxu0 0.0
        %2600 = vmatpush.msra.mxu0 0.0
        %2601 = vmatpush.msra.mxu0 0.0
        %2602 = vmatpush.msra.mxu0 0.0
        %2603 = vmatpush.msra.mxu0 0.0
        %2604 = vmatpush.msra.mxu0 0.0
        %2605 = vmatpush.msra.mxu0 %v2588
        %2606 = vmatmul.f32.gmra.mxu0 %v2540
        %v2607 = vpop.f32.mrf.mxu0
        %v2608 = vadd.f32 0.0, %v2607
        %2609 = vmatmul.f32.gmra.mxu0 %v2543
        %v2610 = vpop.f32.mrf.mxu0
        %v2611 = vadd.f32 0.0, %v2610
        %2612 = vmatmul.f32.gmra.mxu0 %v2546
        %v2613 = vpop.f32.mrf.mxu0
        %v2614 = vadd.f32 0.0, %v2613
        %2615 = vmatmul.f32.gmra.mxu0 %v2549
        %v2616 = vpop.f32.mrf.mxu0
        %v2617 = vadd.f32 0.0, %v2616
        %2618 = vmatmul.f32.gmra.mxu0 %v2552
        %v2619 = vpop.f32.mrf.mxu0
        %v2620 = vadd.f32 0.0, %v2619
        %2621 = vmatmul.f32.gmra.mxu0 %v2555
        %v2622 = vpop.f32.mrf.mxu0
        %v2623 = vadd.f32 0.0, %v2622
        %2624 = vmatmul.f32.gmra.mxu0 %v2558
        %v2625 = vpop.f32.mrf.mxu0
        %v2626 = vadd.f32 0.0, %v2625
        %2627 = vmatmul.f32.gmra.mxu0 %v2561
        %v2628 = vpop.f32.mrf.mxu0
        %v2629 = vadd.f32 0.0, %v2628
        %2630 = vmatmul.f32.gmra.mxu0 %v2564
        %v2631 = vpop.f32.mrf.mxu0
        %v2632 = vadd.f32 0.0, %v2631
        %2633 = vmatmul.f32.gmra.mxu0 %v2567
        %v2634 = vpop.f32.mrf.mxu0
        %v2635 = vadd.f32 0.0, %v2634
        %2636 = vmatmul.f32.gmra.mxu0 %v2570
        %v2637 = vpop.f32.mrf.mxu0
        %v2638 = vadd.f32 0.0, %v2637
        %2639 = vmatmul.f32.gmra.mxu0 %v2573
        %v2640 = vpop.f32.mrf.mxu0
        %v2641 = vadd.f32 0.0, %v2640
        %2642 = vmatmul.f32.gmra.mxu0 %v2576
        %v2643 = vpop.f32.mrf.mxu0
        %v2644 = vadd.f32 0.0, %v2643
        %2645 = vmatmul.f32.gmra.mxu0 %v2579
        %v2646 = vpop.f32.mrf.mxu0
        %v2647 = vadd.f32 0.0, %v2646
        %2648 = vmatmul.f32.gmra.mxu0 %v2582
        %v2649 = vpop.f32.mrf.mxu0
        %v2650 = vadd.f32 0.0, %v2649
        %2651 = vmatmul.f32.gmra.mxu0 %v2585
        %v2652 = vpop.f32.mrf.mxu0
        %v2653 = vadd.f32 0.0, %v2652
        %2654 = vdwg.mxu0
        %v2655 = vadd.f32 %v2505, %v2608
        %v2656 = vadd.f32 %v2506, %v2611
        %v2657 = vadd.f32 %v2507, %v2614
        %v2658 = vadd.f32 %v2508, %v2617
        %v2659 = vadd.f32 %v2509, %v2620
        %v2660 = vadd.f32 %v2510, %v2623
        %v2661 = vadd.f32 %v2511, %v2626
        %v2662 = vadd.f32 %v2512, %v2629
        %v2663 = vadd.f32 %v2513, %v2632
        %v2664 = vadd.f32 %v2514, %v2635
        %v2665 = vadd.f32 %v2515, %v2638
        %v2666 = vadd.f32 %v2516, %v2641
        %v2667 = vadd.f32 %v2517, %v2644
        %v2668 = vadd.f32 %v2518, %v2647
        %v2669 = vadd.f32 %v2519, %v2650
        %v2670 = vadd.f32 %v2520, %v2653
        %v2671 = vld [vmem:[%s2075 + $0x1] sm:$0xff]
        %v2672 = vld [vmem:[%s2075 + $0x9] sm:$0xff]
        %v2673 = vld [vmem:[%s2075 + $0x19] sm:$0xff]
        %v2674 = vld [vmem:[%s2075 + $0x21] sm:$0xff]
        %v2675 = vld [vmem:[%s2075 + $0x31] sm:$0xff]
        %v2676 = vld [vmem:[%s2075 + $0x39] sm:$0xff]
        %v2677 = vld [vmem:[%s2075 + $0x49] sm:$0xff]
        %v2678 = vld [vmem:[%s2075 + $0x51] sm:$0xff]
        %v2679 = vld [vmem:[%s2075 + $0x61] sm:$0xff]
        %v2680 = vld [vmem:[%s2075 + $0x69] sm:$0xff]
        %v2681 = vld [vmem:[%s2075 + $0x79] sm:$0xff]
        %v2682 = vld [vmem:[%s2075 + $0x81] sm:$0xff]
        %v2683 = vld [vmem:[%s2075 + $0x91] sm:$0xff]
        %v2684 = vld [vmem:[%s2075 + $0x99] sm:$0xff]
        %v2685 = vld [vmem:[%s2075 + $0xa9] sm:$0xff]
        %v2686 = vld [vmem:[%s2075 + $0xb1] sm:$0xff]
        %s2687 = scalar_lea.vmem %s8, 16
        %v2688 = vld [vmem:[%s2687] sm:$0xf]
        %v2690 = vsel %vm1362, %v2671, 0
        %v2693 = vsel %vm1362, %v2672, 0
        %v2696 = vsel %vm1362, %v2673, 0
        %v2699 = vsel %vm1362, %v2674, 0
        %v2702 = vsel %vm1362, %v2675, 0
        %v2705 = vsel %vm1362, %v2676, 0
        %v2708 = vsel %vm1362, %v2677, 0
        %v2711 = vsel %vm1362, %v2678, 0
        %v2714 = vsel %vm1362, %v2679, 0
        %v2717 = vsel %vm1362, %v2680, 0
        %v2720 = vsel %vm1362, %v2681, 0
        %v2723 = vsel %vm1362, %v2682, 0
        %v2726 = vsel %vm1362, %v2683, 0
        %v2729 = vsel %vm1362, %v2684, 0
        %v2732 = vsel %vm1362, %v2685, 0
        %v2735 = vsel %vm1362, %v2686, 0
        %v2738 = vsel %vm1411, %v2688, 0
        %2740 = vmatpush.msra.mxu0 0.0
        %2741 = vmatpush.msra.mxu0 0.0
        %2742 = vmatpush.msra.mxu0 0.0
        %2743 = vmatpush.msra.mxu0 0.0
        %2744 = vmatpush.msra.mxu0 0.0
        %2745 = vmatpush.msra.mxu0 0.0
        %2746 = vmatpush.msra.mxu0 0.0
        %2747 = vmatpush.msra.mxu0 0.0
        %2748 = vmatpush.msra.mxu0 0.0
        %2749 = vmatpush.msra.mxu0 0.0
        %2750 = vmatpush.msra.mxu0 0.0
        %2751 = vmatpush.msra.mxu0 0.0
        %2752 = vmatpush.msra.mxu0 0.0
        %2753 = vmatpush.msra.mxu0 0.0
        %2754 = vmatpush.msra.mxu0 0.0
        %2755 = vmatpush.msra.mxu0 %v2738
        %2756 = vmatmul.f32.gmra.mxu0 %v2690
        %v2757 = vpop.f32.mrf.mxu0
        %v2758 = vadd.f32 0.0, %v2757
        %2759 = vmatmul.f32.gmra.mxu0 %v2693
        %v2760 = vpop.f32.mrf.mxu0
        %v2761 = vadd.f32 0.0, %v2760
        %2762 = vmatmul.f32.gmra.mxu0 %v2696
        %v2763 = vpop.f32.mrf.mxu0
        %v2764 = vadd.f32 0.0, %v2763
        %2765 = vmatmul.f32.gmra.mxu0 %v2699
        %v2766 = vpop.f32.mrf.mxu0
        %v2767 = vadd.f32 0.0, %v2766
        %2768 = vmatmul.f32.gmra.mxu0 %v2702
        %v2769 = vpop.f32.mrf.mxu0
        %v2770 = vadd.f32 0.0, %v2769
        %2771 = vmatmul.f32.gmra.mxu0 %v2705
        %v2772 = vpop.f32.mrf.mxu0
        %v2773 = vadd.f32 0.0, %v2772
        %2774 = vmatmul.f32.gmra.mxu0 %v2708
        %v2775 = vpop.f32.mrf.mxu0
        %v2776 = vadd.f32 0.0, %v2775
        %2777 = vmatmul.f32.gmra.mxu0 %v2711
        %v2778 = vpop.f32.mrf.mxu0
        %v2779 = vadd.f32 0.0, %v2778
        %2780 = vmatmul.f32.gmra.mxu0 %v2714
        %v2781 = vpop.f32.mrf.mxu0
        %v2782 = vadd.f32 0.0, %v2781
        %2783 = vmatmul.f32.gmra.mxu0 %v2717
        %v2784 = vpop.f32.mrf.mxu0
        %v2785 = vadd.f32 0.0, %v2784
        %2786 = vmatmul.f32.gmra.mxu0 %v2720
        %v2787 = vpop.f32.mrf.mxu0
        %v2788 = vadd.f32 0.0, %v2787
        %2789 = vmatmul.f32.gmra.mxu0 %v2723
        %v2790 = vpop.f32.mrf.mxu0
        %v2791 = vadd.f32 0.0, %v2790
        %2792 = vmatmul.f32.gmra.mxu0 %v2726
        %v2793 = vpop.f32.mrf.mxu0
        %v2794 = vadd.f32 0.0, %v2793
        %2795 = vmatmul.f32.gmra.mxu0 %v2729
        %v2796 = vpop.f32.mrf.mxu0
        %v2797 = vadd.f32 0.0, %v2796
        %2798 = vmatmul.f32.gmra.mxu0 %v2732
        %v2799 = vpop.f32.mrf.mxu0
        %v2800 = vadd.f32 0.0, %v2799
        %2801 = vmatmul.f32.gmra.mxu0 %v2735
        %v2802 = vpop.f32.mrf.mxu0
        %v2803 = vadd.f32 0.0, %v2802
        %2804 = vdwg.mxu0
        %v2805 = vadd.f32 %v2655, %v2758
        %v2806 = vadd.f32 %v2656, %v2761
        %v2807 = vadd.f32 %v2657, %v2764
        %v2808 = vadd.f32 %v2658, %v2767
        %v2809 = vadd.f32 %v2659, %v2770
        %v2810 = vadd.f32 %v2660, %v2773
        %v2811 = vadd.f32 %v2661, %v2776
        %v2812 = vadd.f32 %v2662, %v2779
        %v2813 = vadd.f32 %v2663, %v2782
        %v2814 = vadd.f32 %v2664, %v2785
        %v2815 = vadd.f32 %v2665, %v2788
        %v2816 = vadd.f32 %v2666, %v2791
        %v2817 = vadd.f32 %v2667, %v2794
        %v2818 = vadd.f32 %v2668, %v2797
        %v2819 = vadd.f32 %v2669, %v2800
        %v2820 = vadd.f32 %v2670, %v2803
        %v2821 = vld [vmem:[%s2075 + $0x2] sm:$0xff]
        %v2822 = vld [vmem:[%s2075 + $0xa] sm:$0xff]
        %v2823 = vld [vmem:[%s2075 + $0x1a] sm:$0xff]
        %v2824 = vld [vmem:[%s2075 + $0x22] sm:$0xff]
        %v2825 = vld [vmem:[%s2075 + $0x32] sm:$0xff]
        %v2826 = vld [vmem:[%s2075 + $0x3a] sm:$0xff]
        %v2827 = vld [vmem:[%s2075 + $0x4a] sm:$0xff]
        %v2828 = vld [vmem:[%s2075 + $0x52] sm:$0xff]
        %v2829 = vld [vmem:[%s2075 + $0x62] sm:$0xff]
        %v2830 = vld [vmem:[%s2075 + $0x6a] sm:$0xff]
        %v2831 = vld [vmem:[%s2075 + $0x7a] sm:$0xff]
        %v2832 = vld [vmem:[%s2075 + $0x82] sm:$0xff]
        %v2833 = vld [vmem:[%s2075 + $0x92] sm:$0xff]
        %v2834 = vld [vmem:[%s2075 + $0x9a] sm:$0xff]
        %v2835 = vld [vmem:[%s2075 + $0xaa] sm:$0xff]
        %v2836 = vld [vmem:[%s2075 + $0xb2] sm:$0xff]
        %s2837 = scalar_lea.vmem %s8, 20
        %v2838 = vld [vmem:[%s2837] sm:$0xf]
        %v2840 = vsel %vm1362, %v2821, 0
        %v2843 = vsel %vm1362, %v2822, 0
        %v2846 = vsel %vm1362, %v2823, 0
        %v2849 = vsel %vm1362, %v2824, 0
        %v2852 = vsel %vm1362, %v2825, 0
        %v2855 = vsel %vm1362, %v2826, 0
        %v2858 = vsel %vm1362, %v2827, 0
        %v2861 = vsel %vm1362, %v2828, 0
        %v2864 = vsel %vm1362, %v2829, 0
        %v2867 = vsel %vm1362, %v2830, 0
        %v2870 = vsel %vm1362, %v2831, 0
        %v2873 = vsel %vm1362, %v2832, 0
        %v2876 = vsel %vm1362, %v2833, 0
        %v2879 = vsel %vm1362, %v2834, 0
        %v2882 = vsel %vm1362, %v2835, 0
        %v2885 = vsel %vm1362, %v2836, 0
        %v2888 = vsel %vm1411, %v2838, 0
        %2890 = vmatpush.msra.mxu0 0.0
        %2891 = vmatpush.msra.mxu0 0.0
        %2892 = vmatpush.msra.mxu0 0.0
        %2893 = vmatpush.msra.mxu0 0.0
        %2894 = vmatpush.msra.mxu0 0.0
        %2895 = vmatpush.msra.mxu0 0.0
        %2896 = vmatpush.msra.mxu0 0.0
        %2897 = vmatpush.msra.mxu0 0.0
        %2898 = vmatpush.msra.mxu0 0.0
        %2899 = vmatpush.msra.mxu0 0.0
        %2900 = vmatpush.msra.mxu0 0.0
        %2901 = vmatpush.msra.mxu0 0.0
        %2902 = vmatpush.msra.mxu0 0.0
        %2903 = vmatpush.msra.mxu0 0.0
        %2904 = vmatpush.msra.mxu0 0.0
        %2905 = vmatpush.msra.mxu0 %v2888
        %2906 = vmatmul.f32.gmra.mxu0 %v2840
        %v2907 = vpop.f32.mrf.mxu0
        %v2908 = vadd.f32 0.0, %v2907
        %2909 = vmatmul.f32.gmra.mxu0 %v2843
        %v2910 = vpop.f32.mrf.mxu0
        %v2911 = vadd.f32 0.0, %v2910
        %2912 = vmatmul.f32.gmra.mxu0 %v2846
        %v2913 = vpop.f32.mrf.mxu0
        %v2914 = vadd.f32 0.0, %v2913
        %2915 = vmatmul.f32.gmra.mxu0 %v2849
        %v2916 = vpop.f32.mrf.mxu0
        %v2917 = vadd.f32 0.0, %v2916
        %2918 = vmatmul.f32.gmra.mxu0 %v2852
        %v2919 = vpop.f32.mrf.mxu0
        %v2920 = vadd.f32 0.0, %v2919
        %2921 = vmatmul.f32.gmra.mxu0 %v2855
        %v2922 = vpop.f32.mrf.mxu0
        %v2923 = vadd.f32 0.0, %v2922
        %2924 = vmatmul.f32.gmra.mxu0 %v2858
        %v2925 = vpop.f32.mrf.mxu0
        %v2926 = vadd.f32 0.0, %v2925
        %2927 = vmatmul.f32.gmra.mxu0 %v2861
        %v2928 = vpop.f32.mrf.mxu0
        %v2929 = vadd.f32 0.0, %v2928
        %2930 = vmatmul.f32.gmra.mxu0 %v2864
        %v2931 = vpop.f32.mrf.mxu0
        %v2932 = vadd.f32 0.0, %v2931
        %2933 = vmatmul.f32.gmra.mxu0 %v2867
        %v2934 = vpop.f32.mrf.mxu0
        %v2935 = vadd.f32 0.0, %v2934
        %2936 = vmatmul.f32.gmra.mxu0 %v2870
        %v2937 = vpop.f32.mrf.mxu0
        %v2938 = vadd.f32 0.0, %v2937
        %2939 = vmatmul.f32.gmra.mxu0 %v2873
        %v2940 = vpop.f32.mrf.mxu0
        %v2941 = vadd.f32 0.0, %v2940
        %2942 = vmatmul.f32.gmra.mxu0 %v2876
        %v2943 = vpop.f32.mrf.mxu0
        %v2944 = vadd.f32 0.0, %v2943
        %2945 = vmatmul.f32.gmra.mxu0 %v2879
        %v2946 = vpop.f32.mrf.mxu0
        %v2947 = vadd.f32 0.0, %v2946
        %2948 = vmatmul.f32.gmra.mxu0 %v2882
        %v2949 = vpop.f32.mrf.mxu0
        %v2950 = vadd.f32 0.0, %v2949
        %2951 = vmatmul.f32.gmra.mxu0 %v2885
        %v2952 = vpop.f32.mrf.mxu0
        %v2953 = vadd.f32 0.0, %v2952
        %2954 = vdwg.mxu0
        %v2955 = vadd.f32 %v2805, %v2908
        %v2956 = vadd.f32 %v2806, %v2911
        %v2957 = vadd.f32 %v2807, %v2914
        %v2958 = vadd.f32 %v2808, %v2917
        %v2959 = vadd.f32 %v2809, %v2920
        %v2960 = vadd.f32 %v2810, %v2923
        %v2961 = vadd.f32 %v2811, %v2926
        %v2962 = vadd.f32 %v2812, %v2929
        %v2963 = vadd.f32 %v2813, %v2932
        %v2964 = vadd.f32 %v2814, %v2935
        %v2965 = vadd.f32 %v2815, %v2938
        %v2966 = vadd.f32 %v2816, %v2941
        %v2967 = vadd.f32 %v2817, %v2944
        %v2968 = vadd.f32 %v2818, %v2947
        %v2969 = vadd.f32 %v2819, %v2950
        %v2970 = vadd.f32 %v2820, %v2953
        %s2971 = scalar_lea.vmem [#allocation2], 48
        %v2972 = vld [vmem:[%s2971] sm:$0xff]
        %v2973 = vld [vmem:[%s2971 + $0x8] sm:$0xff]
        %v2974 = vld [vmem:[%s2971 + $0x18] sm:$0xff]
        %v2975 = vld [vmem:[%s2971 + $0x20] sm:$0xff]
        %v2976 = vld [vmem:[%s2971 + $0x30] sm:$0xff]
        %v2977 = vld [vmem:[%s2971 + $0x38] sm:$0xff]
        %v2978 = vld [vmem:[%s2971 + $0x48] sm:$0xff]
        %v2979 = vld [vmem:[%s2971 + $0x50] sm:$0xff]
        %v2980 = vld [vmem:[%s2971 + $0x60] sm:$0xff]
        %v2981 = vld [vmem:[%s2971 + $0x68] sm:$0xff]
        %v2982 = vld [vmem:[%s2971 + $0x78] sm:$0xff]
        %v2983 = vld [vmem:[%s2971 + $0x80] sm:$0xff]
        %v2984 = vld [vmem:[%s2971 + $0x90] sm:$0xff]
        %v2985 = vld [vmem:[%s2971 + $0x98] sm:$0xff]
        %v2986 = vld [vmem:[%s2971 + $0xa8] sm:$0xff]
        %v2987 = vld [vmem:[%s2971 + $0xb0] sm:$0xff]
        %s2988 = scalar_lea.vmem %s8, 24
        %v2989 = vld [vmem:[%s2988] sm:$0xf]
        %v2991 = vsel %vm1362, %v2972, 0
        %v2994 = vsel %vm1362, %v2973, 0
        %v2997 = vsel %vm1362, %v2974, 0
        %v3000 = vsel %vm1362, %v2975, 0
        %v3003 = vsel %vm1362, %v2976, 0
        %v3006 = vsel %vm1362, %v2977, 0
        %v3009 = vsel %vm1362, %v2978, 0
        %v3012 = vsel %vm1362, %v2979, 0
        %v3015 = vsel %vm1362, %v2980, 0
        %v3018 = vsel %vm1362, %v2981, 0
        %v3021 = vsel %vm1362, %v2982, 0
        %v3024 = vsel %vm1362, %v2983, 0
        %v3027 = vsel %vm1362, %v2984, 0
        %v3030 = vsel %vm1362, %v2985, 0
        %v3033 = vsel %vm1362, %v2986, 0
        %v3036 = vsel %vm1362, %v2987, 0
        %v3039 = vsel %vm1411, %v2989, 0
        %3041 = vmatpush.msra.mxu0 0.0
        %3042 = vmatpush.msra.mxu0 0.0
        %3043 = vmatpush.msra.mxu0 0.0
        %3044 = vmatpush.msra.mxu0 0.0
        %3045 = vmatpush.msra.mxu0 0.0
        %3046 = vmatpush.msra.mxu0 0.0
        %3047 = vmatpush.msra.mxu0 0.0
        %3048 = vmatpush.msra.mxu0 0.0
        %3049 = vmatpush.msra.mxu0 0.0
        %3050 = vmatpush.msra.mxu0 0.0
        %3051 = vmatpush.msra.mxu0 0.0
        %3052 = vmatpush.msra.mxu0 0.0
        %3053 = vmatpush.msra.mxu0 0.0
        %3054 = vmatpush.msra.mxu0 0.0
        %3055 = vmatpush.msra.mxu0 0.0
        %3056 = vmatpush.msra.mxu0 %v3039
        %3057 = vmatmul.f32.gmra.mxu0 %v2991
        %v3058 = vpop.f32.mrf.mxu0
        %v3059 = vadd.f32 0.0, %v3058
        %3060 = vmatmul.f32.gmra.mxu0 %v2994
        %v3061 = vpop.f32.mrf.mxu0
        %v3062 = vadd.f32 0.0, %v3061
        %3063 = vmatmul.f32.gmra.mxu0 %v2997
        %v3064 = vpop.f32.mrf.mxu0
        %v3065 = vadd.f32 0.0, %v3064
        %3066 = vmatmul.f32.gmra.mxu0 %v3000
        %v3067 = vpop.f32.mrf.mxu0
        %v3068 = vadd.f32 0.0, %v3067
        %3069 = vmatmul.f32.gmra.mxu0 %v3003
        %v3070 = vpop.f32.mrf.mxu0
        %v3071 = vadd.f32 0.0, %v3070
        %3072 = vmatmul.f32.gmra.mxu0 %v3006
        %v3073 = vpop.f32.mrf.mxu0
        %v3074 = vadd.f32 0.0, %v3073
        %3075 = vmatmul.f32.gmra.mxu0 %v3009
        %v3076 = vpop.f32.mrf.mxu0
        %v3077 = vadd.f32 0.0, %v3076
        %3078 = vmatmul.f32.gmra.mxu0 %v3012
        %v3079 = vpop.f32.mrf.mxu0
        %v3080 = vadd.f32 0.0, %v3079
        %3081 = vmatmul.f32.gmra.mxu0 %v3015
        %v3082 = vpop.f32.mrf.mxu0
        %v3083 = vadd.f32 0.0, %v3082
        %3084 = vmatmul.f32.gmra.mxu0 %v3018
        %v3085 = vpop.f32.mrf.mxu0
        %v3086 = vadd.f32 0.0, %v3085
        %3087 = vmatmul.f32.gmra.mxu0 %v3021
        %v3088 = vpop.f32.mrf.mxu0
        %v3089 = vadd.f32 0.0, %v3088
        %3090 = vmatmul.f32.gmra.mxu0 %v3024
        %v3091 = vpop.f32.mrf.mxu0
        %v3092 = vadd.f32 0.0, %v3091
        %3093 = vmatmul.f32.gmra.mxu0 %v3027
        %v3094 = vpop.f32.mrf.mxu0
        %v3095 = vadd.f32 0.0, %v3094
        %3096 = vmatmul.f32.gmra.mxu0 %v3030
        %v3097 = vpop.f32.mrf.mxu0
        %v3098 = vadd.f32 0.0, %v3097
        %3099 = vmatmul.f32.gmra.mxu0 %v3033
        %v3100 = vpop.f32.mrf.mxu0
        %v3101 = vadd.f32 0.0, %v3100
        %3102 = vmatmul.f32.gmra.mxu0 %v3036
        %v3103 = vpop.f32.mrf.mxu0
        %v3104 = vadd.f32 0.0, %v3103
        %3105 = vdwg.mxu0
        %v3106 = vadd.f32 %v2955, %v3059
        %v3107 = vadd.f32 %v2956, %v3062
        %v3108 = vadd.f32 %v2957, %v3065
        %v3109 = vadd.f32 %v2958, %v3068
        %v3110 = vadd.f32 %v2959, %v3071
        %v3111 = vadd.f32 %v2960, %v3074
        %v3112 = vadd.f32 %v2961, %v3077
        %v3113 = vadd.f32 %v2962, %v3080
        %v3114 = vadd.f32 %v2963, %v3083
        %v3115 = vadd.f32 %v2964, %v3086
        %v3116 = vadd.f32 %v2965, %v3089
        %v3117 = vadd.f32 %v2966, %v3092
        %v3118 = vadd.f32 %v2967, %v3095
        %v3119 = vadd.f32 %v2968, %v3098
        %v3120 = vadd.f32 %v2969, %v3101
        %v3121 = vadd.f32 %v2970, %v3104
        %v3122 = vld [vmem:[%s2971 + $0x1] sm:$0xff]
        %v3123 = vld [vmem:[%s2971 + $0x9] sm:$0xff]
        %v3124 = vld [vmem:[%s2971 + $0x19] sm:$0xff]
        %v3125 = vld [vmem:[%s2971 + $0x21] sm:$0xff]
        %v3126 = vld [vmem:[%s2971 + $0x31] sm:$0xff]
        %v3127 = vld [vmem:[%s2971 + $0x39] sm:$0xff]
        %v3128 = vld [vmem:[%s2971 + $0x49] sm:$0xff]
        %v3129 = vld [vmem:[%s2971 + $0x51] sm:$0xff]
        %v3130 = vld [vmem:[%s2971 + $0x61] sm:$0xff]
        %v3131 = vld [vmem:[%s2971 + $0x69] sm:$0xff]
        %v3132 = vld [vmem:[%s2971 + $0x79] sm:$0xff]
        %v3133 = vld [vmem:[%s2971 + $0x81] sm:$0xff]
        %v3134 = vld [vmem:[%s2971 + $0x91] sm:$0xff]
        %v3135 = vld [vmem:[%s2971 + $0x99] sm:$0xff]
        %v3136 = vld [vmem:[%s2971 + $0xa9] sm:$0xff]
        %v3137 = vld [vmem:[%s2971 + $0xb1] sm:$0xff]
        %s3138 = scalar_lea.vmem %s8, 28
        %v3139 = vld [vmem:[%s3138] sm:$0xf]
        %v3141 = vsel %vm1362, %v3122, 0
        %v3144 = vsel %vm1362, %v3123, 0
        %v3147 = vsel %vm1362, %v3124, 0
        %v3150 = vsel %vm1362, %v3125, 0
        %v3153 = vsel %vm1362, %v3126, 0
        %v3156 = vsel %vm1362, %v3127, 0
        %v3159 = vsel %vm1362, %v3128, 0
        %v3162 = vsel %vm1362, %v3129, 0
        %v3165 = vsel %vm1362, %v3130, 0
        %v3168 = vsel %vm1362, %v3131, 0
        %v3171 = vsel %vm1362, %v3132, 0
        %v3174 = vsel %vm1362, %v3133, 0
        %v3177 = vsel %vm1362, %v3134, 0
        %v3180 = vsel %vm1362, %v3135, 0
        %v3183 = vsel %vm1362, %v3136, 0
        %v3186 = vsel %vm1362, %v3137, 0
        %v3189 = vsel %vm1411, %v3139, 0
        %3191 = vmatpush.msra.mxu0 0.0
        %3192 = vmatpush.msra.mxu0 0.0
        %3193 = vmatpush.msra.mxu0 0.0
        %3194 = vmatpush.msra.mxu0 0.0
        %3195 = vmatpush.msra.mxu0 0.0
        %3196 = vmatpush.msra.mxu0 0.0
        %3197 = vmatpush.msra.mxu0 0.0
        %3198 = vmatpush.msra.mxu0 0.0
        %3199 = vmatpush.msra.mxu0 0.0
        %3200 = vmatpush.msra.mxu0 0.0
        %3201 = vmatpush.msra.mxu0 0.0
        %3202 = vmatpush.msra.mxu0 0.0
        %3203 = vmatpush.msra.mxu0 0.0
        %3204 = vmatpush.msra.mxu0 0.0
        %3205 = vmatpush.msra.mxu0 0.0
        %3206 = vmatpush.msra.mxu0 %v3189
        %3207 = vmatmul.f32.gmra.mxu0 %v3141
        %v3208 = vpop.f32.mrf.mxu0
        %v3209 = vadd.f32 0.0, %v3208
        %3210 = vmatmul.f32.gmra.mxu0 %v3144
        %v3211 = vpop.f32.mrf.mxu0
        %v3212 = vadd.f32 0.0, %v3211
        %3213 = vmatmul.f32.gmra.mxu0 %v3147
        %v3214 = vpop.f32.mrf.mxu0
        %v3215 = vadd.f32 0.0, %v3214
        %3216 = vmatmul.f32.gmra.mxu0 %v3150
        %v3217 = vpop.f32.mrf.mxu0
        %v3218 = vadd.f32 0.0, %v3217
        %3219 = vmatmul.f32.gmra.mxu0 %v3153
        %v3220 = vpop.f32.mrf.mxu0
        %v3221 = vadd.f32 0.0, %v3220
        %3222 = vmatmul.f32.gmra.mxu0 %v3156
        %v3223 = vpop.f32.mrf.mxu0
        %v3224 = vadd.f32 0.0, %v3223
        %3225 = vmatmul.f32.gmra.mxu0 %v3159
        %v3226 = vpop.f32.mrf.mxu0
        %v3227 = vadd.f32 0.0, %v3226
        %3228 = vmatmul.f32.gmra.mxu0 %v3162
        %v3229 = vpop.f32.mrf.mxu0
        %v3230 = vadd.f32 0.0, %v3229
        %3231 = vmatmul.f32.gmra.mxu0 %v3165
        %v3232 = vpop.f32.mrf.mxu0
        %v3233 = vadd.f32 0.0, %v3232
        %3234 = vmatmul.f32.gmra.mxu0 %v3168
        %v3235 = vpop.f32.mrf.mxu0
        %v3236 = vadd.f32 0.0, %v3235
        %3237 = vmatmul.f32.gmra.mxu0 %v3171
        %v3238 = vpop.f32.mrf.mxu0
        %v3239 = vadd.f32 0.0, %v3238
        %3240 = vmatmul.f32.gmra.mxu0 %v3174
        %v3241 = vpop.f32.mrf.mxu0
        %v3242 = vadd.f32 0.0, %v3241
        %3243 = vmatmul.f32.gmra.mxu0 %v3177
        %v3244 = vpop.f32.mrf.mxu0
        %v3245 = vadd.f32 0.0, %v3244
        %3246 = vmatmul.f32.gmra.mxu0 %v3180
        %v3247 = vpop.f32.mrf.mxu0
        %v3248 = vadd.f32 0.0, %v3247
        %3249 = vmatmul.f32.gmra.mxu0 %v3183
        %v3250 = vpop.f32.mrf.mxu0
        %v3251 = vadd.f32 0.0, %v3250
        %3252 = vmatmul.f32.gmra.mxu0 %v3186
        %v3253 = vpop.f32.mrf.mxu0
        %v3254 = vadd.f32 0.0, %v3253
        %3255 = vdwg.mxu0
        %v3256 = vadd.f32 %v3106, %v3209
        %v3257 = vadd.f32 %v3107, %v3212
        %v3258 = vadd.f32 %v3108, %v3215
        %v3259 = vadd.f32 %v3109, %v3218
        %v3260 = vadd.f32 %v3110, %v3221
        %v3261 = vadd.f32 %v3111, %v3224
        %v3262 = vadd.f32 %v3112, %v3227
        %v3263 = vadd.f32 %v3113, %v3230
        %v3264 = vadd.f32 %v3114, %v3233
        %v3265 = vadd.f32 %v3115, %v3236
        %v3266 = vadd.f32 %v3116, %v3239
        %v3267 = vadd.f32 %v3117, %v3242
        %v3268 = vadd.f32 %v3118, %v3245
        %v3269 = vadd.f32 %v3119, %v3248
        %v3270 = vadd.f32 %v3120, %v3251
        %v3271 = vadd.f32 %v3121, %v3254
        %v3272 = vld [vmem:[%s2971 + $0x2] sm:$0xff]
        %v3273 = vld [vmem:[%s2971 + $0xa] sm:$0xff]
        %v3274 = vld [vmem:[%s2971 + $0x1a] sm:$0xff]
        %v3275 = vld [vmem:[%s2971 + $0x22] sm:$0xff]
        %v3276 = vld [vmem:[%s2971 + $0x32] sm:$0xff]
        %v3277 = vld [vmem:[%s2971 + $0x3a] sm:$0xff]
        %v3278 = vld [vmem:[%s2971 + $0x4a] sm:$0xff]
        %v3279 = vld [vmem:[%s2971 + $0x52] sm:$0xff]
        %v3280 = vld [vmem:[%s2971 + $0x62] sm:$0xff]
        %v3281 = vld [vmem:[%s2971 + $0x6a] sm:$0xff]
        %v3282 = vld [vmem:[%s2971 + $0x7a] sm:$0xff]
        %v3283 = vld [vmem:[%s2971 + $0x82] sm:$0xff]
        %v3284 = vld [vmem:[%s2971 + $0x92] sm:$0xff]
        %v3285 = vld [vmem:[%s2971 + $0x9a] sm:$0xff]
        %v3286 = vld [vmem:[%s2971 + $0xaa] sm:$0xff]
        %v3287 = vld [vmem:[%s2971 + $0xb2] sm:$0xff]
        %s3288 = scalar_lea.vmem %s8, 32
        %v3289 = vld [vmem:[%s3288] sm:$0xf]
        %v3291 = vsel %vm1362, %v3272, 0
        %v3294 = vsel %vm1362, %v3273, 0
        %v3297 = vsel %vm1362, %v3274, 0
        %v3300 = vsel %vm1362, %v3275, 0
        %v3303 = vsel %vm1362, %v3276, 0
        %v3306 = vsel %vm1362, %v3277, 0
        %v3309 = vsel %vm1362, %v3278, 0
        %v3312 = vsel %vm1362, %v3279, 0
        %v3315 = vsel %vm1362, %v3280, 0
        %v3318 = vsel %vm1362, %v3281, 0
        %v3321 = vsel %vm1362, %v3282, 0
        %v3324 = vsel %vm1362, %v3283, 0
        %v3327 = vsel %vm1362, %v3284, 0
        %v3330 = vsel %vm1362, %v3285, 0
        %v3333 = vsel %vm1362, %v3286, 0
        %v3336 = vsel %vm1362, %v3287, 0
        %v3339 = vsel %vm1411, %v3289, 0
        %3341 = vmatpush.msra.mxu0 0.0
        %3342 = vmatpush.msra.mxu0 0.0
        %3343 = vmatpush.msra.mxu0 0.0
        %3344 = vmatpush.msra.mxu0 0.0
        %3345 = vmatpush.msra.mxu0 0.0
        %3346 = vmatpush.msra.mxu0 0.0
        %3347 = vmatpush.msra.mxu0 0.0
        %3348 = vmatpush.msra.mxu0 0.0
        %3349 = vmatpush.msra.mxu0 0.0
        %3350 = vmatpush.msra.mxu0 0.0
        %3351 = vmatpush.msra.mxu0 0.0
        %3352 = vmatpush.msra.mxu0 0.0
        %3353 = vmatpush.msra.mxu0 0.0
        %3354 = vmatpush.msra.mxu0 0.0
        %3355 = vmatpush.msra.mxu0 0.0
        %3356 = vmatpush.msra.mxu0 %v3339
        %3357 = vmatmul.f32.gmra.mxu0 %v3291
        %v3358 = vpop.f32.mrf.mxu0
        %v3359 = vadd.f32 0.0, %v3358
        %3360 = vmatmul.f32.gmra.mxu0 %v3294
        %v3361 = vpop.f32.mrf.mxu0
        %v3362 = vadd.f32 0.0, %v3361
        %3363 = vmatmul.f32.gmra.mxu0 %v3297
        %v3364 = vpop.f32.mrf.mxu0
        %v3365 = vadd.f32 0.0, %v3364
        %3366 = vmatmul.f32.gmra.mxu0 %v3300
        %v3367 = vpop.f32.mrf.mxu0
        %v3368 = vadd.f32 0.0, %v3367
        %3369 = vmatmul.f32.gmra.mxu0 %v3303
        %v3370 = vpop.f32.mrf.mxu0
        %v3371 = vadd.f32 0.0, %v3370
        %3372 = vmatmul.f32.gmra.mxu0 %v3306
        %v3373 = vpop.f32.mrf.mxu0
        %v3374 = vadd.f32 0.0, %v3373
        %3375 = vmatmul.f32.gmra.mxu0 %v3309
        %v3376 = vpop.f32.mrf.mxu0
        %v3377 = vadd.f32 0.0, %v3376
        %3378 = vmatmul.f32.gmra.mxu0 %v3312
        %v3379 = vpop.f32.mrf.mxu0
        %v3380 = vadd.f32 0.0, %v3379
        %3381 = vmatmul.f32.gmra.mxu0 %v3315
        %v3382 = vpop.f32.mrf.mxu0
        %v3383 = vadd.f32 0.0, %v3382
        %3384 = vmatmul.f32.gmra.mxu0 %v3318
        %v3385 = vpop.f32.mrf.mxu0
        %v3386 = vadd.f32 0.0, %v3385
        %3387 = vmatmul.f32.gmra.mxu0 %v3321
        %v3388 = vpop.f32.mrf.mxu0
        %v3389 = vadd.f32 0.0, %v3388
        %3390 = vmatmul.f32.gmra.mxu0 %v3324
        %v3391 = vpop.f32.mrf.mxu0
        %v3392 = vadd.f32 0.0, %v3391
        %3393 = vmatmul.f32.gmra.mxu0 %v3327
        %v3394 = vpop.f32.mrf.mxu0
        %v3395 = vadd.f32 0.0, %v3394
        %3396 = vmatmul.f32.gmra.mxu0 %v3330
        %v3397 = vpop.f32.mrf.mxu0
        %v3398 = vadd.f32 0.0, %v3397
        %3399 = vmatmul.f32.gmra.mxu0 %v3333
        %v3400 = vpop.f32.mrf.mxu0
        %v3401 = vadd.f32 0.0, %v3400
        %3402 = vmatmul.f32.gmra.mxu0 %v3336
        %v3403 = vpop.f32.mrf.mxu0
        %v3404 = vadd.f32 0.0, %v3403
        %3405 = vdwg.mxu0
        %v3406 = vadd.f32 %v3256, %v3359
        %v3407 = vadd.f32 %v3257, %v3362
        %v3408 = vadd.f32 %v3258, %v3365
        %v3409 = vadd.f32 %v3259, %v3368
        %v3410 = vadd.f32 %v3260, %v3371
        %v3411 = vadd.f32 %v3261, %v3374
        %v3412 = vadd.f32 %v3262, %v3377
        %v3413 = vadd.f32 %v3263, %v3380
        %v3414 = vadd.f32 %v3264, %v3383
        %v3415 = vadd.f32 %v3265, %v3386
        %v3416 = vadd.f32 %v3266, %v3389
        %v3417 = vadd.f32 %v3267, %v3392
        %v3418 = vadd.f32 %v3268, %v3395
        %v3419 = vadd.f32 %v3269, %v3398
        %v3420 = vadd.f32 %v3270, %v3401
        %v3421 = vadd.f32 %v3271, %v3404
        %v3422 = vld [vmem:[%s9] sm:$0x1]
        %v3424 = vperm.slane %v3422, 0
        %v3426 = vadd.f32 %v3406, %v3424
        %v3427 = vadd.f32 %v3407, %v3424
        %v3428 = vadd.f32 %v3408, %v3424
        %v3429 = vadd.f32 %v3409, %v3424
        %v3430 = vadd.f32 %v3410, %v3424
        %v3431 = vadd.f32 %v3411, %v3424
        %v3432 = vadd.f32 %v3412, %v3424
        %v3433 = vadd.f32 %v3413, %v3424
        %v3434 = vadd.f32 %v3414, %v3424
        %v3435 = vadd.f32 %v3415, %v3424
        %v3436 = vadd.f32 %v3416, %v3424
        %v3437 = vadd.f32 %v3417, %v3424
        %v3438 = vadd.f32 %v3418, %v3424
        %v3439 = vadd.f32 %v3419, %v3424
        %v3440 = vadd.f32 %v3420, %v3424
        %v3441 = vadd.f32 %v3421, %v3424
        %v3442 = vxor.u32 %v3426, 2147483648
        %v3443 = vxor.u32 %v3427, 2147483648
        %v3444 = vxor.u32 %v3428, 2147483648
        %v3445 = vxor.u32 %v3429, 2147483648
        %v3446 = vxor.u32 %v3430, 2147483648
        %v3447 = vxor.u32 %v3431, 2147483648
        %v3448 = vxor.u32 %v3432, 2147483648
        %v3449 = vxor.u32 %v3433, 2147483648
        %v3450 = vxor.u32 %v3434, 2147483648
        %v3451 = vxor.u32 %v3435, 2147483648
        %v3452 = vxor.u32 %v3436, 2147483648
        %v3453 = vxor.u32 %v3437, 2147483648
        %v3454 = vxor.u32 %v3438, 2147483648
        %v3455 = vxor.u32 %v3439, 2147483648
        %v3456 = vxor.u32 %v3440, 2147483648
        %v3457 = vxor.u32 %v3441, 2147483648
        %v3458 = vmul.f32 %v3442, 1.442695
        %v3459 = vpow.pop %v3458
        %v3460 = vmul.f32 %v3443, 1.442695
        %v3461 = vpow.pop %v3460
        %v3462 = vmul.f32 %v3444, 1.442695
        %v3463 = vpow.pop %v3462
        %v3464 = vmul.f32 %v3445, 1.442695
        %v3465 = vpow.pop %v3464
        %v3466 = vmul.f32 %v3446, 1.442695
        %v3467 = vpow.pop %v3466
        %v3468 = vmul.f32 %v3447, 1.442695
        %v3469 = vpow.pop %v3468
        %v3470 = vmul.f32 %v3448, 1.442695
        %v3471 = vpow.pop %v3470
        %v3472 = vmul.f32 %v3449, 1.442695
        %v3473 = vpow.pop %v3472
        %v3474 = vmul.f32 %v3450, 1.442695
        %v3475 = vpow.pop %v3474
        %v3476 = vmul.f32 %v3451, 1.442695
        %v3477 = vpow.pop %v3476
        %v3478 = vmul.f32 %v3452, 1.442695
        %v3479 = vpow.pop %v3478
        %v3480 = vmul.f32 %v3453, 1.442695
        %v3481 = vpow.pop %v3480
        %v3482 = vmul.f32 %v3454, 1.442695
        %v3483 = vpow.pop %v3482
        %v3484 = vmul.f32 %v3455, 1.442695
        %v3485 = vpow.pop %v3484
        %v3486 = vmul.f32 %v3456, 1.442695
        %v3487 = vpow.pop %v3486
        %v3488 = vmul.f32 %v3457, 1.442695
        %v3489 = vpow.pop %v3488
        %v3490 = vadd.f32 %v3459, 1.0
        %v3491 = vadd.f32 %v3461, 1.0
        %v3492 = vadd.f32 %v3463, 1.0
        %v3493 = vadd.f32 %v3465, 1.0
        %v3494 = vadd.f32 %v3467, 1.0
        %v3495 = vadd.f32 %v3469, 1.0
        %v3496 = vadd.f32 %v3471, 1.0
        %v3497 = vadd.f32 %v3473, 1.0
        %v3498 = vadd.f32 %v3475, 1.0
        %v3499 = vadd.f32 %v3477, 1.0
        %v3500 = vadd.f32 %v3479, 1.0
        %v3501 = vadd.f32 %v3481, 1.0
        %v3502 = vadd.f32 %v3483, 1.0
        %v3503 = vadd.f32 %v3485, 1.0
        %v3504 = vadd.f32 %v3487, 1.0
        %v3505 = vadd.f32 %v3489, 1.0
        %v3506 = vrcp.pop %v3490
        %v3507 = vmul.f32 %v3490, %v3506
        %v3508 = vsub.f32 1.0, %v3507
        %v3509 = vmul.f32 %v3506, %v3508
        %v3510 = vadd.f32 %v3506, %v3509
        %vm3511 = vweird.f32 %v3490
        %vm3512 = vweird.f32 %v3506
        %vm3513 = vmor %vm3511, %vm3512
        %v3514 = vsel %vm3513, %v3506, %v3510
        %v3515 = vand.u32 2147483647, %v3490
        %vm3516 = vcmp.eq.f32.partialorder %v3515, 8.507059e+37
        %v3517 = vand.u32 %v3490, 2147483648
        %v3518 = vor.u32 1.1754944e-38, %v3517
        %v3519 = vsel %vm3516, %v3518, %v3514
        %v3520 = vmul.f32 1.0, %v3519
        %v3521 = vrcp.pop %v3491
        %v3522 = vmul.f32 %v3491, %v3521
        %v3523 = vsub.f32 1.0, %v3522
        %v3524 = vmul.f32 %v3521, %v3523
        %v3525 = vadd.f32 %v3521, %v3524
        %vm3526 = vweird.f32 %v3491
        %vm3527 = vweird.f32 %v3521
        %vm3528 = vmor %vm3526, %vm3527
        %v3529 = vsel %vm3528, %v3521, %v3525
        %v3530 = vand.u32 2147483647, %v3491
        %vm3531 = vcmp.eq.f32.partialorder %v3530, 8.507059e+37
        %v3532 = vand.u32 %v3491, 2147483648
        %v3533 = vor.u32 1.1754944e-38, %v3532
        %v3534 = vsel %vm3531, %v3533, %v3529
        %v3535 = vmul.f32 1.0, %v3534
        %v3536 = vrcp.pop %v3492
        %v3537 = vmul.f32 %v3492, %v3536
        %v3538 = vsub.f32 1.0, %v3537
        %v3539 = vmul.f32 %v3536, %v3538
        %v3540 = vadd.f32 %v3536, %v3539
        %vm3541 = vweird.f32 %v3492
        %vm3542 = vweird.f32 %v3536
        %vm3543 = vmor %vm3541, %vm3542
        %v3544 = vsel %vm3543, %v3536, %v3540
        %v3545 = vand.u32 2147483647, %v3492
        %vm3546 = vcmp.eq.f32.partialorder %v3545, 8.507059e+37
        %v3547 = vand.u32 %v3492, 2147483648
        %v3548 = vor.u32 1.1754944e-38, %v3547
        %v3549 = vsel %vm3546, %v3548, %v3544
        %v3550 = vmul.f32 1.0, %v3549
        %v3551 = vrcp.pop %v3493
        %v3552 = vmul.f32 %v3493, %v3551
        %v3553 = vsub.f32 1.0, %v3552
        %v3554 = vmul.f32 %v3551, %v3553
        %v3555 = vadd.f32 %v3551, %v3554
        %vm3556 = vweird.f32 %v3493
        %vm3557 = vweird.f32 %v3551
        %vm3558 = vmor %vm3556, %vm3557
        %v3559 = vsel %vm3558, %v3551, %v3555
        %v3560 = vand.u32 2147483647, %v3493
        %vm3561 = vcmp.eq.f32.partialorder %v3560, 8.507059e+37
        %v3562 = vand.u32 %v3493, 2147483648
        %v3563 = vor.u32 1.1754944e-38, %v3562
        %v3564 = vsel %vm3561, %v3563, %v3559
        %v3565 = vmul.f32 1.0, %v3564
        %v3566 = vrcp.pop %v3494
        %v3567 = vmul.f32 %v3494, %v3566
        %v3568 = vsub.f32 1.0, %v3567
        %v3569 = vmul.f32 %v3566, %v3568
        %v3570 = vadd.f32 %v3566, %v3569
        %vm3571 = vweird.f32 %v3494
        %vm3572 = vweird.f32 %v3566
        %vm3573 = vmor %vm3571, %vm3572
        %v3574 = vsel %vm3573, %v3566, %v3570
        %v3575 = vand.u32 2147483647, %v3494
        %vm3576 = vcmp.eq.f32.partialorder %v3575, 8.507059e+37
        %v3577 = vand.u32 %v3494, 2147483648
        %v3578 = vor.u32 1.1754944e-38, %v3577
        %v3579 = vsel %vm3576, %v3578, %v3574
        %v3580 = vmul.f32 1.0, %v3579
        %v3581 = vrcp.pop %v3495
        %v3582 = vmul.f32 %v3495, %v3581
        %v3583 = vsub.f32 1.0, %v3582
        %v3584 = vmul.f32 %v3581, %v3583
        %v3585 = vadd.f32 %v3581, %v3584
        %vm3586 = vweird.f32 %v3495
        %vm3587 = vweird.f32 %v3581
        %vm3588 = vmor %vm3586, %vm3587
        %v3589 = vsel %vm3588, %v3581, %v3585
        %v3590 = vand.u32 2147483647, %v3495
        %vm3591 = vcmp.eq.f32.partialorder %v3590, 8.507059e+37
        %v3592 = vand.u32 %v3495, 2147483648
        %v3593 = vor.u32 1.1754944e-38, %v3592
        %v3594 = vsel %vm3591, %v3593, %v3589
        %v3595 = vmul.f32 1.0, %v3594
        %v3596 = vrcp.pop %v3496
        %v3597 = vmul.f32 %v3496, %v3596
        %v3598 = vsub.f32 1.0, %v3597
        %v3599 = vmul.f32 %v3596, %v3598
        %v3600 = vadd.f32 %v3596, %v3599
        %vm3601 = vweird.f32 %v3496
        %vm3602 = vweird.f32 %v3596
        %vm3603 = vmor %vm3601, %vm3602
        %v3604 = vsel %vm3603, %v3596, %v3600
        %v3605 = vand.u32 2147483647, %v3496
        %vm3606 = vcmp.eq.f32.partialorder %v3605, 8.507059e+37
        %v3607 = vand.u32 %v3496, 2147483648
        %v3608 = vor.u32 1.1754944e-38, %v3607
        %v3609 = vsel %vm3606, %v3608, %v3604
        %v3610 = vmul.f32 1.0, %v3609
        %v3611 = vrcp.pop %v3497
        %v3612 = vmul.f32 %v3497, %v3611
        %v3613 = vsub.f32 1.0, %v3612
        %v3614 = vmul.f32 %v3611, %v3613
        %v3615 = vadd.f32 %v3611, %v3614
        %vm3616 = vweird.f32 %v3497
        %vm3617 = vweird.f32 %v3611
        %vm3618 = vmor %vm3616, %vm3617
        %v3619 = vsel %vm3618, %v3611, %v3615
        %v3620 = vand.u32 2147483647, %v3497
        %vm3621 = vcmp.eq.f32.partialorder %v3620, 8.507059e+37
        %v3622 = vand.u32 %v3497, 2147483648
        %v3623 = vor.u32 1.1754944e-38, %v3622
        %v3624 = vsel %vm3621, %v3623, %v3619
        %v3625 = vmul.f32 1.0, %v3624
        %v3626 = vrcp.pop %v3498
        %v3627 = vmul.f32 %v3498, %v3626
        %v3628 = vsub.f32 1.0, %v3627
        %v3629 = vmul.f32 %v3626, %v3628
        %v3630 = vadd.f32 %v3626, %v3629
        %vm3631 = vweird.f32 %v3498
        %vm3632 = vweird.f32 %v3626
        %vm3633 = vmor %vm3631, %vm3632
        %v3634 = vsel %vm3633, %v3626, %v3630
        %v3635 = vand.u32 2147483647, %v3498
        %vm3636 = vcmp.eq.f32.partialorder %v3635, 8.507059e+37
        %v3637 = vand.u32 %v3498, 2147483648
        %v3638 = vor.u32 1.1754944e-38, %v3637
        %v3639 = vsel %vm3636, %v3638, %v3634
        %v3640 = vmul.f32 1.0, %v3639
        %v3641 = vrcp.pop %v3499
        %v3642 = vmul.f32 %v3499, %v3641
        %v3643 = vsub.f32 1.0, %v3642
        %v3644 = vmul.f32 %v3641, %v3643
        %v3645 = vadd.f32 %v3641, %v3644
        %vm3646 = vweird.f32 %v3499
        %vm3647 = vweird.f32 %v3641
        %vm3648 = vmor %vm3646, %vm3647
        %v3649 = vsel %vm3648, %v3641, %v3645
        %v3650 = vand.u32 2147483647, %v3499
        %vm3651 = vcmp.eq.f32.partialorder %v3650, 8.507059e+37
        %v3652 = vand.u32 %v3499, 2147483648
        %v3653 = vor.u32 1.1754944e-38, %v3652
        %v3654 = vsel %vm3651, %v3653, %v3649
        %v3655 = vmul.f32 1.0, %v3654
        %v3656 = vrcp.pop %v3500
        %v3657 = vmul.f32 %v3500, %v3656
        %v3658 = vsub.f32 1.0, %v3657
        %v3659 = vmul.f32 %v3656, %v3658
        %v3660 = vadd.f32 %v3656, %v3659
        %vm3661 = vweird.f32 %v3500
        %vm3662 = vweird.f32 %v3656
        %vm3663 = vmor %vm3661, %vm3662
        %v3664 = vsel %vm3663, %v3656, %v3660
        %v3665 = vand.u32 2147483647, %v3500
        %vm3666 = vcmp.eq.f32.partialorder %v3665, 8.507059e+37
        %v3667 = vand.u32 %v3500, 2147483648
        %v3668 = vor.u32 1.1754944e-38, %v3667
        %v3669 = vsel %vm3666, %v3668, %v3664
        %v3670 = vmul.f32 1.0, %v3669
        %v3671 = vrcp.pop %v3501
        %v3672 = vmul.f32 %v3501, %v3671
        %v3673 = vsub.f32 1.0, %v3672
        %v3674 = vmul.f32 %v3671, %v3673
        %v3675 = vadd.f32 %v3671, %v3674
        %vm3676 = vweird.f32 %v3501
        %vm3677 = vweird.f32 %v3671
        %vm3678 = vmor %vm3676, %vm3677
        %v3679 = vsel %vm3678, %v3671, %v3675
        %v3680 = vand.u32 2147483647, %v3501
        %vm3681 = vcmp.eq.f32.partialorder %v3680, 8.507059e+37
        %v3682 = vand.u32 %v3501, 2147483648
        %v3683 = vor.u32 1.1754944e-38, %v3682
        %v3684 = vsel %vm3681, %v3683, %v3679
        %v3685 = vmul.f32 1.0, %v3684
        %v3686 = vrcp.pop %v3502
        %v3687 = vmul.f32 %v3502, %v3686
        %v3688 = vsub.f32 1.0, %v3687
        %v3689 = vmul.f32 %v3686, %v3688
        %v3690 = vadd.f32 %v3686, %v3689
        %vm3691 = vweird.f32 %v3502
        %vm3692 = vweird.f32 %v3686
        %vm3693 = vmor %vm3691, %vm3692
        %v3694 = vsel %vm3693, %v3686, %v3690
        %v3695 = vand.u32 2147483647, %v3502
        %vm3696 = vcmp.eq.f32.partialorder %v3695, 8.507059e+37
        %v3697 = vand.u32 %v3502, 2147483648
        %v3698 = vor.u32 1.1754944e-38, %v3697
        %v3699 = vsel %vm3696, %v3698, %v3694
        %v3700 = vmul.f32 1.0, %v3699
        %v3701 = vrcp.pop %v3503
        %v3702 = vmul.f32 %v3503, %v3701
        %v3703 = vsub.f32 1.0, %v3702
        %v3704 = vmul.f32 %v3701, %v3703
        %v3705 = vadd.f32 %v3701, %v3704
        %vm3706 = vweird.f32 %v3503
        %vm3707 = vweird.f32 %v3701
        %vm3708 = vmor %vm3706, %vm3707
        %v3709 = vsel %vm3708, %v3701, %v3705
        %v3710 = vand.u32 2147483647, %v3503
        %vm3711 = vcmp.eq.f32.partialorder %v3710, 8.507059e+37
        %v3712 = vand.u32 %v3503, 2147483648
        %v3713 = vor.u32 1.1754944e-38, %v3712
        %v3714 = vsel %vm3711, %v3713, %v3709
        %v3715 = vmul.f32 1.0, %v3714
        %v3716 = vrcp.pop %v3504
        %v3717 = vmul.f32 %v3504, %v3716
        %v3718 = vsub.f32 1.0, %v3717
        %v3719 = vmul.f32 %v3716, %v3718
        %v3720 = vadd.f32 %v3716, %v3719
        %vm3721 = vweird.f32 %v3504
        %vm3722 = vweird.f32 %v3716
        %vm3723 = vmor %vm3721, %vm3722
        %v3724 = vsel %vm3723, %v3716, %v3720
        %v3725 = vand.u32 2147483647, %v3504
        %vm3726 = vcmp.eq.f32.partialorder %v3725, 8.507059e+37
        %v3727 = vand.u32 %v3504, 2147483648
        %v3728 = vor.u32 1.1754944e-38, %v3727
        %v3729 = vsel %vm3726, %v3728, %v3724
        %v3730 = vmul.f32 1.0, %v3729
        %v3731 = vrcp.pop %v3505
        %v3732 = vmul.f32 %v3505, %v3731
        %v3733 = vsub.f32 1.0, %v3732
        %v3734 = vmul.f32 %v3731, %v3733
        %v3735 = vadd.f32 %v3731, %v3734
        %vm3736 = vweird.f32 %v3505
        %vm3737 = vweird.f32 %v3731
        %vm3738 = vmor %vm3736, %vm3737
        %v3739 = vsel %vm3738, %v3731, %v3735
        %v3740 = vand.u32 2147483647, %v3505
        %vm3741 = vcmp.eq.f32.partialorder %v3740, 8.507059e+37
        %v3742 = vand.u32 %v3505, 2147483648
        %v3743 = vor.u32 1.1754944e-38, %v3742
        %v3744 = vsel %vm3741, %v3743, %v3739
        %v3745 = vmul.f32 1.0, %v3744
        %v3746 = vmul.f32 %v3426, %v3520
        %v3747 = vmul.f32 %v3427, %v3535
        %v3748 = vmul.f32 %v3428, %v3550
        %v3749 = vmul.f32 %v3429, %v3565
        %v3750 = vmul.f32 %v3430, %v3580
        %v3751 = vmul.f32 %v3431, %v3595
        %v3752 = vmul.f32 %v3432, %v3610
        %v3753 = vmul.f32 %v3433, %v3625
        %v3754 = vmul.f32 %v3434, %v3640
        %v3755 = vmul.f32 %v3435, %v3655
        %v3756 = vmul.f32 %v3436, %v3670
        %v3757 = vmul.f32 %v3437, %v3685
        %v3758 = vmul.f32 %v3438, %v3700
        %v3759 = vmul.f32 %v3439, %v3715
        %v3760 = vmul.f32 %v3440, %v3730
        %v3761 = vmul.f32 %v3441, %v3745
        %v3762 = vld [vmem:[%s10] sm:$0xf]
        %v3763 = vld [vmem:[%s11] sm:$0xf]
        %v3765 = vsel %vm1362, %v1341, 0
        %v3768 = vsel %vm1362, %v1342, 0
        %v3771 = vsel %vm1362, %v1343, 0
        %v3774 = vsel %vm1362, %v1344, 0
        %v3777 = vsel %vm1362, %v1345, 0
        %v3780 = vsel %vm1362, %v1346, 0
        %v3783 = vsel %vm1362, %v1347, 0
        %v3786 = vsel %vm1362, %v1348, 0
        %v3789 = vsel %vm1362, %v1349, 0
        %v3792 = vsel %vm1362, %v1350, 0
        %v3795 = vsel %vm1362, %v1351, 0
        %v3798 = vsel %vm1362, %v1352, 0
        %v3801 = vsel %vm1362, %v1353, 0
        %v3804 = vsel %vm1362, %v1354, 0
        %v3807 = vsel %vm1362, %v1355, 0
        %v3810 = vsel %vm1362, %v1356, 0
        %v3813 = vsel %vm1411, %v3763, 0
        %3815 = vmatpush.msra.mxu0 0.0
        %3816 = vmatpush.msra.mxu0 0.0
        %3817 = vmatpush.msra.mxu0 0.0
        %3818 = vmatpush.msra.mxu0 0.0
        %3819 = vmatpush.msra.mxu0 0.0
        %3820 = vmatpush.msra.mxu0 0.0
        %3821 = vmatpush.msra.mxu0 0.0
        %3822 = vmatpush.msra.mxu0 0.0
        %3823 = vmatpush.msra.mxu0 0.0
        %3824 = vmatpush.msra.mxu0 0.0
        %3825 = vmatpush.msra.mxu0 0.0
        %3826 = vmatpush.msra.mxu0 0.0
        %3827 = vmatpush.msra.mxu0 0.0
        %3828 = vmatpush.msra.mxu0 0.0
        %3829 = vmatpush.msra.mxu0 0.0
        %3830 = vmatpush.msra.mxu0 %v3813
        %3831 = vmatmul.f32.gmra.mxu0 %v3765
        %v3832 = vpop.f32.mrf.mxu0
        %v3833 = vadd.f32 0.0, %v3832
        %3834 = vmatmul.f32.gmra.mxu0 %v3768
        %v3835 = vpop.f32.mrf.mxu0
        %v3836 = vadd.f32 0.0, %v3835
        %3837 = vmatmul.f32.gmra.mxu0 %v3771
        %v3838 = vpop.f32.mrf.mxu0
        %v3839 = vadd.f32 0.0, %v3838
        %3840 = vmatmul.f32.gmra.mxu0 %v3774
        %v3841 = vpop.f32.mrf.mxu0
        %v3842 = vadd.f32 0.0, %v3841
        %3843 = vmatmul.f32.gmra.mxu0 %v3777
        %v3844 = vpop.f32.mrf.mxu0
        %v3845 = vadd.f32 0.0, %v3844
        %3846 = vmatmul.f32.gmra.mxu0 %v3780
        %v3847 = vpop.f32.mrf.mxu0
        %v3848 = vadd.f32 0.0, %v3847
        %3849 = vmatmul.f32.gmra.mxu0 %v3783
        %v3850 = vpop.f32.mrf.mxu0
        %v3851 = vadd.f32 0.0, %v3850
        %3852 = vmatmul.f32.gmra.mxu0 %v3786
        %v3853 = vpop.f32.mrf.mxu0
        %v3854 = vadd.f32 0.0, %v3853
        %3855 = vmatmul.f32.gmra.mxu0 %v3789
        %v3856 = vpop.f32.mrf.mxu0
        %v3857 = vadd.f32 0.0, %v3856
        %3858 = vmatmul.f32.gmra.mxu0 %v3792
        %v3859 = vpop.f32.mrf.mxu0
        %v3860 = vadd.f32 0.0, %v3859
        %3861 = vmatmul.f32.gmra.mxu0 %v3795
        %v3862 = vpop.f32.mrf.mxu0
        %v3863 = vadd.f32 0.0, %v3862
        %3864 = vmatmul.f32.gmra.mxu0 %v3798
        %v3865 = vpop.f32.mrf.mxu0
        %v3866 = vadd.f32 0.0, %v3865
        %3867 = vmatmul.f32.gmra.mxu0 %v3801
        %v3868 = vpop.f32.mrf.mxu0
        %v3869 = vadd.f32 0.0, %v3868
        %3870 = vmatmul.f32.gmra.mxu0 %v3804
        %v3871 = vpop.f32.mrf.mxu0
        %v3872 = vadd.f32 0.0, %v3871
        %3873 = vmatmul.f32.gmra.mxu0 %v3807
        %v3874 = vpop.f32.mrf.mxu0
        %v3875 = vadd.f32 0.0, %v3874
        %3876 = vmatmul.f32.gmra.mxu0 %v3810
        %v3877 = vpop.f32.mrf.mxu0
        %v3878 = vadd.f32 0.0, %v3877
        %3879 = vdwg.mxu0
        %v3881 = vsel %vm1362, %v3746, 0
        %v3884 = vsel %vm1362, %v3747, 0
        %v3887 = vsel %vm1362, %v3748, 0
        %v3890 = vsel %vm1362, %v3749, 0
        %v3893 = vsel %vm1362, %v3750, 0
        %v3896 = vsel %vm1362, %v3751, 0
        %v3899 = vsel %vm1362, %v3752, 0
        %v3902 = vsel %vm1362, %v3753, 0
        %v3905 = vsel %vm1362, %v3754, 0
        %v3908 = vsel %vm1362, %v3755, 0
        %v3911 = vsel %vm1362, %v3756, 0
        %v3914 = vsel %vm1362, %v3757, 0
        %v3917 = vsel %vm1362, %v3758, 0
        %v3920 = vsel %vm1362, %v3759, 0
        %v3923 = vsel %vm1362, %v3760, 0
        %v3926 = vsel %vm1362, %v3761, 0
        %v3929 = vsel %vm1411, %v3762, 0
        %3931 = vmatpush.msra.mxu0 0.0
        %3932 = vmatpush.msra.mxu0 0.0
        %3933 = vmatpush.msra.mxu0 0.0
        %3934 = vmatpush.msra.mxu0 0.0
        %3935 = vmatpush.msra.mxu0 0.0
        %3936 = vmatpush.msra.mxu0 0.0
        %3937 = vmatpush.msra.mxu0 0.0
        %3938 = vmatpush.msra.mxu0 0.0
        %3939 = vmatpush.msra.mxu0 0.0
        %3940 = vmatpush.msra.mxu0 0.0
        %3941 = vmatpush.msra.mxu0 0.0
        %3942 = vmatpush.msra.mxu0 0.0
        %3943 = vmatpush.msra.mxu0 0.0
        %3944 = vmatpush.msra.mxu0 0.0
        %3945 = vmatpush.msra.mxu0 0.0
        %3946 = vmatpush.msra.mxu0 %v3929
        %3947 = vmatmul.f32.gmra.mxu0 %v3881
        %v3948 = vpop.f32.mrf.mxu0
        %v3949 = vadd.f32 %v3833, %v3948
        %3950 = vmatmul.f32.gmra.mxu0 %v3884
        %v3951 = vpop.f32.mrf.mxu0
        %v3952 = vadd.f32 %v3836, %v3951
        %3953 = vmatmul.f32.gmra.mxu0 %v3887
        %v3954 = vpop.f32.mrf.mxu0
        %v3955 = vadd.f32 %v3839, %v3954
        %3956 = vmatmul.f32.gmra.mxu0 %v3890
        %v3957 = vpop.f32.mrf.mxu0
        %v3958 = vadd.f32 %v3842, %v3957
        %3959 = vmatmul.f32.gmra.mxu0 %v3893
        %v3960 = vpop.f32.mrf.mxu0
        %v3961 = vadd.f32 %v3845, %v3960
        %3962 = vmatmul.f32.gmra.mxu0 %v3896
        %v3963 = vpop.f32.mrf.mxu0
        %v3964 = vadd.f32 %v3848, %v3963
        %3965 = vmatmul.f32.gmra.mxu0 %v3899
        %v3966 = vpop.f32.mrf.mxu0
        %v3967 = vadd.f32 %v3851, %v3966
        %3968 = vmatmul.f32.gmra.mxu0 %v3902
        %v3969 = vpop.f32.mrf.mxu0
        %v3970 = vadd.f32 %v3854, %v3969
        %3971 = vmatmul.f32.gmra.mxu0 %v3905
        %v3972 = vpop.f32.mrf.mxu0
        %v3973 = vadd.f32 %v3857, %v3972
        %3974 = vmatmul.f32.gmra.mxu0 %v3908
        %v3975 = vpop.f32.mrf.mxu0
        %v3976 = vadd.f32 %v3860, %v3975
        %3977 = vmatmul.f32.gmra.mxu0 %v3911
        %v3978 = vpop.f32.mrf.mxu0
        %v3979 = vadd.f32 %v3863, %v3978
        %3980 = vmatmul.f32.gmra.mxu0 %v3914
        %v3981 = vpop.f32.mrf.mxu0
        %v3982 = vadd.f32 %v3866, %v3981
        %3983 = vmatmul.f32.gmra.mxu0 %v3917
        %v3984 = vpop.f32.mrf.mxu0
        %v3985 = vadd.f32 %v3869, %v3984
        %3986 = vmatmul.f32.gmra.mxu0 %v3920
        %v3987 = vpop.f32.mrf.mxu0
        %v3988 = vadd.f32 %v3872, %v3987
        %3989 = vmatmul.f32.gmra.mxu0 %v3923
        %v3990 = vpop.f32.mrf.mxu0
        %v3991 = vadd.f32 %v3875, %v3990
        %3992 = vmatmul.f32.gmra.mxu0 %v3926
        %v3993 = vpop.f32.mrf.mxu0
        %v3994 = vadd.f32 %v3878, %v3993
        %3995 = vdwg.mxu0
        %v3996 = vld [vmem:[%s12] sm:$0x1]
        %v3998 = vperm.slane %v3996, 0
        %v4000 = vadd.f32 %v3949, %v3998
        %v4001 = vadd.f32 %v3952, %v3998
        %v4002 = vadd.f32 %v3955, %v3998
        %v4003 = vadd.f32 %v3958, %v3998
        %v4004 = vadd.f32 %v3961, %v3998
        %v4005 = vadd.f32 %v3964, %v3998
        %v4006 = vadd.f32 %v3967, %v3998
        %v4007 = vadd.f32 %v3970, %v3998
        %v4008 = vadd.f32 %v3973, %v3998
        %v4009 = vadd.f32 %v3976, %v3998
        %v4010 = vadd.f32 %v3979, %v3998
        %v4011 = vadd.f32 %v3982, %v3998
        %v4012 = vadd.f32 %v3985, %v3998
        %v4013 = vadd.f32 %v3988, %v3998
        %v4014 = vadd.f32 %v3991, %v3998
        %v4015 = vadd.f32 %v3994, %v3998
        %v4016 = vxor.u32 %v4000, 2147483648
        %v4017 = vxor.u32 %v4001, 2147483648
        %v4018 = vxor.u32 %v4002, 2147483648
        %v4019 = vxor.u32 %v4003, 2147483648
        %v4020 = vxor.u32 %v4004, 2147483648
        %v4021 = vxor.u32 %v4005, 2147483648
        %v4022 = vxor.u32 %v4006, 2147483648
        %v4023 = vxor.u32 %v4007, 2147483648
        %v4024 = vxor.u32 %v4008, 2147483648
        %v4025 = vxor.u32 %v4009, 2147483648
        %v4026 = vxor.u32 %v4010, 2147483648
        %v4027 = vxor.u32 %v4011, 2147483648
        %v4028 = vxor.u32 %v4012, 2147483648
        %v4029 = vxor.u32 %v4013, 2147483648
        %v4030 = vxor.u32 %v4014, 2147483648
        %v4031 = vxor.u32 %v4015, 2147483648
        %v4032 = vmul.f32 %v4016, 1.442695
        %v4033 = vpow.pop %v4032
        %v4034 = vmul.f32 %v4017, 1.442695
        %v4035 = vpow.pop %v4034
        %v4036 = vmul.f32 %v4018, 1.442695
        %v4037 = vpow.pop %v4036
        %v4038 = vmul.f32 %v4019, 1.442695
        %v4039 = vpow.pop %v4038
        %v4040 = vmul.f32 %v4020, 1.442695
        %v4041 = vpow.pop %v4040
        %v4042 = vmul.f32 %v4021, 1.442695
        %v4043 = vpow.pop %v4042
        %v4044 = vmul.f32 %v4022, 1.442695
        %v4045 = vpow.pop %v4044
        %v4046 = vmul.f32 %v4023, 1.442695
        %v4047 = vpow.pop %v4046
        %v4048 = vmul.f32 %v4024, 1.442695
        %v4049 = vpow.pop %v4048
        %v4050 = vmul.f32 %v4025, 1.442695
        %v4051 = vpow.pop %v4050
        %v4052 = vmul.f32 %v4026, 1.442695
        %v4053 = vpow.pop %v4052
        %v4054 = vmul.f32 %v4027, 1.442695
        %v4055 = vpow.pop %v4054
        %v4056 = vmul.f32 %v4028, 1.442695
        %v4057 = vpow.pop %v4056
        %v4058 = vmul.f32 %v4029, 1.442695
        %v4059 = vpow.pop %v4058
        %v4060 = vmul.f32 %v4030, 1.442695
        %v4061 = vpow.pop %v4060
        %v4062 = vmul.f32 %v4031, 1.442695
        %v4063 = vpow.pop %v4062
        %v4064 = vadd.f32 %v4033, 1.0
        %v4065 = vadd.f32 %v4035, 1.0
        %v4066 = vadd.f32 %v4037, 1.0
        %v4067 = vadd.f32 %v4039, 1.0
        %v4068 = vadd.f32 %v4041, 1.0
        %v4069 = vadd.f32 %v4043, 1.0
        %v4070 = vadd.f32 %v4045, 1.0
        %v4071 = vadd.f32 %v4047, 1.0
        %v4072 = vadd.f32 %v4049, 1.0
        %v4073 = vadd.f32 %v4051, 1.0
        %v4074 = vadd.f32 %v4053, 1.0
        %v4075 = vadd.f32 %v4055, 1.0
        %v4076 = vadd.f32 %v4057, 1.0
        %v4077 = vadd.f32 %v4059, 1.0
        %v4078 = vadd.f32 %v4061, 1.0
        %v4079 = vadd.f32 %v4063, 1.0
        %v4080 = vrcp.pop %v4064
        %v4081 = vmul.f32 %v4064, %v4080
        %v4082 = vsub.f32 1.0, %v4081
        %v4083 = vmul.f32 %v4080, %v4082
        %v4084 = vadd.f32 %v4080, %v4083
        %vm4085 = vweird.f32 %v4064
        %vm4086 = vweird.f32 %v4080
        %vm4087 = vmor %vm4085, %vm4086
        %v4088 = vsel %vm4087, %v4080, %v4084
        %v4089 = vand.u32 2147483647, %v4064
        %vm4090 = vcmp.eq.f32.partialorder %v4089, 8.507059e+37
        %v4091 = vand.u32 %v4064, 2147483648
        %v4092 = vor.u32 1.1754944e-38, %v4091
        %v4093 = vsel %vm4090, %v4092, %v4088
        %v4094 = vmul.f32 1.0, %v4093
        %v4095 = vrcp.pop %v4065
        %v4096 = vmul.f32 %v4065, %v4095
        %v4097 = vsub.f32 1.0, %v4096
        %v4098 = vmul.f32 %v4095, %v4097
        %v4099 = vadd.f32 %v4095, %v4098
        %vm4100 = vweird.f32 %v4065
        %vm4101 = vweird.f32 %v4095
        %vm4102 = vmor %vm4100, %vm4101
        %v4103 = vsel %vm4102, %v4095, %v4099
        %v4104 = vand.u32 2147483647, %v4065
        %vm4105 = vcmp.eq.f32.partialorder %v4104, 8.507059e+37
        %v4106 = vand.u32 %v4065, 2147483648
        %v4107 = vor.u32 1.1754944e-38, %v4106
        %v4108 = vsel %vm4105, %v4107, %v4103
        %v4109 = vmul.f32 1.0, %v4108
        %v4110 = vrcp.pop %v4066
        %v4111 = vmul.f32 %v4066, %v4110
        %v4112 = vsub.f32 1.0, %v4111
        %v4113 = vmul.f32 %v4110, %v4112
        %v4114 = vadd.f32 %v4110, %v4113
        %vm4115 = vweird.f32 %v4066
        %vm4116 = vweird.f32 %v4110
        %vm4117 = vmor %vm4115, %vm4116
        %v4118 = vsel %vm4117, %v4110, %v4114
        %v4119 = vand.u32 2147483647, %v4066
        %vm4120 = vcmp.eq.f32.partialorder %v4119, 8.507059e+37
        %v4121 = vand.u32 %v4066, 2147483648
        %v4122 = vor.u32 1.1754944e-38, %v4121
        %v4123 = vsel %vm4120, %v4122, %v4118
        %v4124 = vmul.f32 1.0, %v4123
        %v4125 = vrcp.pop %v4067
        %v4126 = vmul.f32 %v4067, %v4125
        %v4127 = vsub.f32 1.0, %v4126
        %v4128 = vmul.f32 %v4125, %v4127
        %v4129 = vadd.f32 %v4125, %v4128
        %vm4130 = vweird.f32 %v4067
        %vm4131 = vweird.f32 %v4125
        %vm4132 = vmor %vm4130, %vm4131
        %v4133 = vsel %vm4132, %v4125, %v4129
        %v4134 = vand.u32 2147483647, %v4067
        %vm4135 = vcmp.eq.f32.partialorder %v4134, 8.507059e+37
        %v4136 = vand.u32 %v4067, 2147483648
        %v4137 = vor.u32 1.1754944e-38, %v4136
        %v4138 = vsel %vm4135, %v4137, %v4133
        %v4139 = vmul.f32 1.0, %v4138
        %v4140 = vrcp.pop %v4068
        %v4141 = vmul.f32 %v4068, %v4140
        %v4142 = vsub.f32 1.0, %v4141
        %v4143 = vmul.f32 %v4140, %v4142
        %v4144 = vadd.f32 %v4140, %v4143
        %vm4145 = vweird.f32 %v4068
        %vm4146 = vweird.f32 %v4140
        %vm4147 = vmor %vm4145, %vm4146
        %v4148 = vsel %vm4147, %v4140, %v4144
        %v4149 = vand.u32 2147483647, %v4068
        %vm4150 = vcmp.eq.f32.partialorder %v4149, 8.507059e+37
        %v4151 = vand.u32 %v4068, 2147483648
        %v4152 = vor.u32 1.1754944e-38, %v4151
        %v4153 = vsel %vm4150, %v4152, %v4148
        %v4154 = vmul.f32 1.0, %v4153
        %v4155 = vrcp.pop %v4069
        %v4156 = vmul.f32 %v4069, %v4155
        %v4157 = vsub.f32 1.0, %v4156
        %v4158 = vmul.f32 %v4155, %v4157
        %v4159 = vadd.f32 %v4155, %v4158
        %vm4160 = vweird.f32 %v4069
        %vm4161 = vweird.f32 %v4155
        %vm4162 = vmor %vm4160, %vm4161
        %v4163 = vsel %vm4162, %v4155, %v4159
        %v4164 = vand.u32 2147483647, %v4069
        %vm4165 = vcmp.eq.f32.partialorder %v4164, 8.507059e+37
        %v4166 = vand.u32 %v4069, 2147483648
        %v4167 = vor.u32 1.1754944e-38, %v4166
        %v4168 = vsel %vm4165, %v4167, %v4163
        %v4169 = vmul.f32 1.0, %v4168
        %v4170 = vrcp.pop %v4070
        %v4171 = vmul.f32 %v4070, %v4170
        %v4172 = vsub.f32 1.0, %v4171
        %v4173 = vmul.f32 %v4170, %v4172
        %v4174 = vadd.f32 %v4170, %v4173
        %vm4175 = vweird.f32 %v4070
        %vm4176 = vweird.f32 %v4170
        %vm4177 = vmor %vm4175, %vm4176
        %v4178 = vsel %vm4177, %v4170, %v4174
        %v4179 = vand.u32 2147483647, %v4070
        %vm4180 = vcmp.eq.f32.partialorder %v4179, 8.507059e+37
        %v4181 = vand.u32 %v4070, 2147483648
        %v4182 = vor.u32 1.1754944e-38, %v4181
        %v4183 = vsel %vm4180, %v4182, %v4178
        %v4184 = vmul.f32 1.0, %v4183
        %v4185 = vrcp.pop %v4071
        %v4186 = vmul.f32 %v4071, %v4185
        %v4187 = vsub.f32 1.0, %v4186
        %v4188 = vmul.f32 %v4185, %v4187
        %v4189 = vadd.f32 %v4185, %v4188
        %vm4190 = vweird.f32 %v4071
        %vm4191 = vweird.f32 %v4185
        %vm4192 = vmor %vm4190, %vm4191
        %v4193 = vsel %vm4192, %v4185, %v4189
        %v4194 = vand.u32 2147483647, %v4071
        %vm4195 = vcmp.eq.f32.partialorder %v4194, 8.507059e+37
        %v4196 = vand.u32 %v4071, 2147483648
        %v4197 = vor.u32 1.1754944e-38, %v4196
        %v4198 = vsel %vm4195, %v4197, %v4193
        %v4199 = vmul.f32 1.0, %v4198
        %v4200 = vrcp.pop %v4072
        %v4201 = vmul.f32 %v4072, %v4200
        %v4202 = vsub.f32 1.0, %v4201
        %v4203 = vmul.f32 %v4200, %v4202
        %v4204 = vadd.f32 %v4200, %v4203
        %vm4205 = vweird.f32 %v4072
        %vm4206 = vweird.f32 %v4200
        %vm4207 = vmor %vm4205, %vm4206
        %v4208 = vsel %vm4207, %v4200, %v4204
        %v4209 = vand.u32 2147483647, %v4072
        %vm4210 = vcmp.eq.f32.partialorder %v4209, 8.507059e+37
        %v4211 = vand.u32 %v4072, 2147483648
        %v4212 = vor.u32 1.1754944e-38, %v4211
        %v4213 = vsel %vm4210, %v4212, %v4208
        %v4214 = vmul.f32 1.0, %v4213
        %v4215 = vrcp.pop %v4073
        %v4216 = vmul.f32 %v4073, %v4215
        %v4217 = vsub.f32 1.0, %v4216
        %v4218 = vmul.f32 %v4215, %v4217
        %v4219 = vadd.f32 %v4215, %v4218
        %vm4220 = vweird.f32 %v4073
        %vm4221 = vweird.f32 %v4215
        %vm4222 = vmor %vm4220, %vm4221
        %v4223 = vsel %vm4222, %v4215, %v4219
        %v4224 = vand.u32 2147483647, %v4073
        %vm4225 = vcmp.eq.f32.partialorder %v4224, 8.507059e+37
        %v4226 = vand.u32 %v4073, 2147483648
        %v4227 = vor.u32 1.1754944e-38, %v4226
        %v4228 = vsel %vm4225, %v4227, %v4223
        %v4229 = vmul.f32 1.0, %v4228
        %v4230 = vrcp.pop %v4074
        %v4231 = vmul.f32 %v4074, %v4230
        %v4232 = vsub.f32 1.0, %v4231
        %v4233 = vmul.f32 %v4230, %v4232
        %v4234 = vadd.f32 %v4230, %v4233
        %vm4235 = vweird.f32 %v4074
        %vm4236 = vweird.f32 %v4230
        %vm4237 = vmor %vm4235, %vm4236
        %v4238 = vsel %vm4237, %v4230, %v4234
        %v4239 = vand.u32 2147483647, %v4074
        %vm4240 = vcmp.eq.f32.partialorder %v4239, 8.507059e+37
        %v4241 = vand.u32 %v4074, 2147483648
        %v4242 = vor.u32 1.1754944e-38, %v4241
        %v4243 = vsel %vm4240, %v4242, %v4238
        %v4244 = vmul.f32 1.0, %v4243
        %v4245 = vrcp.pop %v4075
        %v4246 = vmul.f32 %v4075, %v4245
        %v4247 = vsub.f32 1.0, %v4246
        %v4248 = vmul.f32 %v4245, %v4247
        %v4249 = vadd.f32 %v4245, %v4248
        %vm4250 = vweird.f32 %v4075
        %vm4251 = vweird.f32 %v4245
        %vm4252 = vmor %vm4250, %vm4251
        %v4253 = vsel %vm4252, %v4245, %v4249
        %v4254 = vand.u32 2147483647, %v4075
        %vm4255 = vcmp.eq.f32.partialorder %v4254, 8.507059e+37
        %v4256 = vand.u32 %v4075, 2147483648
        %v4257 = vor.u32 1.1754944e-38, %v4256
        %v4258 = vsel %vm4255, %v4257, %v4253
        %v4259 = vmul.f32 1.0, %v4258
        %v4260 = vrcp.pop %v4076
        %v4261 = vmul.f32 %v4076, %v4260
        %v4262 = vsub.f32 1.0, %v4261
        %v4263 = vmul.f32 %v4260, %v4262
        %v4264 = vadd.f32 %v4260, %v4263
        %vm4265 = vweird.f32 %v4076
        %vm4266 = vweird.f32 %v4260
        %vm4267 = vmor %vm4265, %vm4266
        %v4268 = vsel %vm4267, %v4260, %v4264
        %v4269 = vand.u32 2147483647, %v4076
        %vm4270 = vcmp.eq.f32.partialorder %v4269, 8.507059e+37
        %v4271 = vand.u32 %v4076, 2147483648
        %v4272 = vor.u32 1.1754944e-38, %v4271
        %v4273 = vsel %vm4270, %v4272, %v4268
        %v4274 = vmul.f32 1.0, %v4273
        %v4275 = vrcp.pop %v4077
        %v4276 = vmul.f32 %v4077, %v4275
        %v4277 = vsub.f32 1.0, %v4276
        %v4278 = vmul.f32 %v4275, %v4277
        %v4279 = vadd.f32 %v4275, %v4278
        %vm4280 = vweird.f32 %v4077
        %vm4281 = vweird.f32 %v4275
        %vm4282 = vmor %vm4280, %vm4281
        %v4283 = vsel %vm4282, %v4275, %v4279
        %v4284 = vand.u32 2147483647, %v4077
        %vm4285 = vcmp.eq.f32.partialorder %v4284, 8.507059e+37
        %v4286 = vand.u32 %v4077, 2147483648
        %v4287 = vor.u32 1.1754944e-38, %v4286
        %v4288 = vsel %vm4285, %v4287, %v4283
        %v4289 = vmul.f32 1.0, %v4288
        %v4290 = vrcp.pop %v4078
        %v4291 = vmul.f32 %v4078, %v4290
        %v4292 = vsub.f32 1.0, %v4291
        %v4293 = vmul.f32 %v4290, %v4292
        %v4294 = vadd.f32 %v4290, %v4293
        %vm4295 = vweird.f32 %v4078
        %vm4296 = vweird.f32 %v4290
        %vm4297 = vmor %vm4295, %vm4296
        %v4298 = vsel %vm4297, %v4290, %v4294
        %v4299 = vand.u32 2147483647, %v4078
        %vm4300 = vcmp.eq.f32.partialorder %v4299, 8.507059e+37
        %v4301 = vand.u32 %v4078, 2147483648
        %v4302 = vor.u32 1.1754944e-38, %v4301
        %v4303 = vsel %vm4300, %v4302, %v4298
        %v4304 = vmul.f32 1.0, %v4303
        %v4305 = vrcp.pop %v4079
        %v4306 = vmul.f32 %v4079, %v4305
        %v4307 = vsub.f32 1.0, %v4306
        %v4308 = vmul.f32 %v4305, %v4307
        %v4309 = vadd.f32 %v4305, %v4308
        %vm4310 = vweird.f32 %v4079
        %vm4311 = vweird.f32 %v4305
        %vm4312 = vmor %vm4310, %vm4311
        %v4313 = vsel %vm4312, %v4305, %v4309
        %v4314 = vand.u32 2147483647, %v4079
        %vm4315 = vcmp.eq.f32.partialorder %v4314, 8.507059e+37
        %v4316 = vand.u32 %v4079, 2147483648
        %v4317 = vor.u32 1.1754944e-38, %v4316
        %v4318 = vsel %vm4315, %v4317, %v4313
        %v4319 = vmul.f32 1.0, %v4318
        %v4320 = vmul.f32 %v4000, %v4094
        %v4321 = vmul.f32 %v4001, %v4109
        %v4322 = vmul.f32 %v4002, %v4124
        %v4323 = vmul.f32 %v4003, %v4139
        %v4324 = vmul.f32 %v4004, %v4154
        %v4325 = vmul.f32 %v4005, %v4169
        %v4326 = vmul.f32 %v4006, %v4184
        %v4327 = vmul.f32 %v4007, %v4199
        %v4328 = vmul.f32 %v4008, %v4214
        %v4329 = vmul.f32 %v4009, %v4229
        %v4330 = vmul.f32 %v4010, %v4244
        %v4331 = vmul.f32 %v4011, %v4259
        %v4332 = vmul.f32 %v4012, %v4274
        %v4333 = vmul.f32 %v4013, %v4289
        %v4334 = vmul.f32 %v4014, %v4304
        %v4335 = vmul.f32 %v4015, %v4319
        %vm4336 = vcmask 130048
        %4337 = vst.msk [vmem:[%s488] sm:$0xff] %vm4336, %v4320
        %4338 = vst.msk [vmem:[%s488 + $0x8] sm:$0xff] %vm4336, %v4321
        %4339 = vst.msk [vmem:[%s488 + $0x10] sm:$0xff] %vm4336, %v4322
        %4340 = vst.msk [vmem:[%s488 + $0x18] sm:$0xff] %vm4336, %v4323
        %4341 = vst.msk [vmem:[%s488 + $0x20] sm:$0xff] %vm4336, %v4324
        %4342 = vst.msk [vmem:[%s488 + $0x28] sm:$0xff] %vm4336, %v4325
        %4343 = vst.msk [vmem:[%s488 + $0x30] sm:$0xff] %vm4336, %v4326
        %4344 = vst.msk [vmem:[%s488 + $0x38] sm:$0xff] %vm4336, %v4327
        %4345 = vst.msk [vmem:[%s488 + $0x40] sm:$0xff] %vm4336, %v4328
        %4346 = vst.msk [vmem:[%s488 + $0x48] sm:$0xff] %vm4336, %v4329
        %4347 = vst.msk [vmem:[%s488 + $0x50] sm:$0xff] %vm4336, %v4330
        %4348 = vst.msk [vmem:[%s488 + $0x58] sm:$0xff] %vm4336, %v4331
        %4349 = vst.msk [vmem:[%s488 + $0x60] sm:$0xff] %vm4336, %v4332
        %4350 = vst.msk [vmem:[%s488 + $0x68] sm:$0xff] %vm4336, %v4333
        %4351 = vst.msk [vmem:[%s488 + $0x70] sm:$0xff] %vm4336, %v4334
        %4352 = vst.msk [vmem:[%s488 + $0x78] sm:$0xff] %vm4336, %v4335
        %s4353 = sand.u32 %s336, 1
        %s4354 = scalar_lea.sflag [#allocation4], %s4353
        %s4355 = sand.u32 %s336, 1
        %s4356 = smul.addr %s4355, 128
        %s4357 = scalar_lea.vmem [#allocation3], %s4356
        // Predicated region
        $region81: #{tpu_custom_call.1} parent=71 // pred_check
          %p4358 = pneg %p346
        $region82: #{tpu_custom_call.1} parent=71 // pred_check_branch
          %4360 = sbr.rel (%p4358) target = $region84
        $region83: #{tpu_custom_call.1} parent=71 // pred_region
          %s4361 = smul.u32 8, %s32
          %4363 = vsyncadd %s4354, 0
          %s4364 = smul.addr %s4361, 2
          %s4365 = smul.addr %s31, 32
          %s4366 = sadd.s32 %s4364, %s4365
          %s4367 = smul.addr %s4366, 8
          %s4368 = scalar_lea.hbm %s13, %s4367
          %s4369 = sshll.u32 %s4357, 4
          %s4370 = int_to_ptr.vmem [resolvable:$true] %s4369
          %s4371 = sshll.u32 %s4368, 4
          %s4372 = int_to_ptr.hbm [resolvable:$true] %s4371
          %4377 = dma.vmem_to_hbm [thread:$0]  %s4370, 2048, %s4372, %s4354, 128, 128, 8
        $region84: #{tpu_custom_call.1} parent=71 // pred_fallthru
          _
      $region72: #{tpu_custom_call.1} parent=5 // pred_fallthru
        _
      %p4378 = scmp.le.s32.totalorder 2, %s22
      // Predicated region
      $region85: #{tpu_custom_call.1} parent=5 // pred_check
        %p4379 = pneg %p4378
      $region86: #{tpu_custom_call.1} parent=5 // pred_check_branch
        %4381 = sbr.rel (%p4379) target = $region88
      $region87: #{tpu_custom_call.1} parent=5 // pred_region
        %s4382 = ssub.s32 %s22, 2
        // Predicated region
        $region89: #{tpu_custom_call.1} parent=87 // pred_check
          %p4383 = pneg %p352
        $region90: #{tpu_custom_call.1} parent=87 // pred_check_branch
          %4385 = sbr.rel (%p4383) target = $region92
        $region91: #{tpu_custom_call.1} parent=87 // pred_region
          %s4386 = sand.u32 %s337, 1
          %s4387 = scalar_lea.sflag [#allocation4], %s4386
          %s4388 = sand.u32 %s337, 1
          %s4389 = smul.addr %s4388, 128
          %s4390 = scalar_lea.vmem [#allocation3], %s4389
          %4392 = dma.done %s4387, 2048
        $region92: #{tpu_custom_call.1} parent=87 // pred_fallthru
          _
      $region88: #{tpu_custom_call.1} parent=5 // pred_fallthru
        _
    $region6: #{tpu_custom_call.1} parent=1 // loop_footer
      %s26 = sadd.s32 1, %s22
    $region7: #{tpu_custom_call.1} parent=1 // loop_footer_branch
      %21 = sbr.rel target = $region3
    $region8: #{tpu_custom_call.1} parent=1 // loop_exit
      _
    %4393 = vsyncpa [#allocation4], 1
    %s4394 = scalar_lea.sflag [#allocation4], 1
    %4395 = vsyncpa %s4394, 1

</llo_original>
